<compile_context>
chip_gen: v7x
topology: tpu7x:2x2x1
jax: 0.10.0
libtpu: 0.0.40
codegen_flags: <defaults>
</compile_context>

<pallas_src>
import functools

import jax
import jax.numpy as jnp
import numpy as np
from jax import lax
from jax.experimental import pallas as pl
from jax.experimental.pallas import tpu as pltpu

LANE = 128


def _round_up(x, m):
    return (x + m - 1) // m * m


def _vmem_limit_bytes():
    cap = 128 * 1024 * 1024
    try:  # generation-aware (v7x has 64 MiB / TensorCore); fall back if query unavailable
        cap = int(pltpu.get_tpu_info().vmem_capacity_bytes)
    except Exception:
        pass
    return int(min(cap * 0.55, 100 * 1024 * 1024))


# ---------------------------------------------------------------------------
# Fused kernel (one grid step per batch item):
#   down conv (LeakyReLU'd parity-packed input, fused ReLU)
#   -> zero-padded VMEM staging of the down activation
#   -> ConvTranspose as 4 output-parity phases (bf16 output)
#   -> per-batch-item BatchNorm partial statistics (f32)
# ---------------------------------------------------------------------------
def _unet_inner_kernel(xcat_ref, wd_ref, wu_ref, u_ref, stats_ref, dpad_ref, *,
                       hd, wdim, ccat_p, inner_p, outer_p):
    m = hd * wdim

    # Zero-padded VMEM staging buffer for the down activation (border stays zero).
    dpad_ref[...] = jnp.zeros_like(dpad_ref)

    # ---- down conv: Conv2d(k=4, s=2, p=1) on the parity-packed input -------------
    #   out[i, j] = sum_{a,b in {0,1}} xcat[i+a, j+b, :] @ Wd[2a+b]   (K = 4*Cin)
    acc = jnp.zeros((m, inner_p), jnp.float32)
    for a in (0, 1):
        for b in (0, 1):
            tap = xcat_ref[0, a:a + hd, b:b + wdim, :].reshape(m, ccat_p)
            acc = acc + jnp.dot(tap, wd_ref[2 * a + b],
                                preferred_element_type=jnp.float32)
    d = jnp.maximum(acc, 0.0).astype(dpad_ref.dtype)          # uprelu fused, bf16
    dpad_ref[1:hd + 1, 1:wdim + 1, :] = d.reshape(hd, wdim, inner_p)

    # ---- up conv: ConvTranspose2d(k=4, s=2, p=1) as 4 output-parity phases --------
    #   phase (p,q): out[2i+p, 2j+q] = sum_{a,b} dpad[i+p+a, j+q+b, :] @ Wu[ph, 2a+b]
    s = jnp.zeros((1, outer_p), jnp.float32)
    sq = jnp.zeros((1, outer_p), jnp.float32)
    for ph, (p, q) in enumerate(((0, 0), (0, 1), (1, 0), (1, 1))):
        uacc = jnp.zeros((m, outer_p), jnp.float32)
        for a in (0, 1):
            for b in (0, 1):
                tap = dpad_ref[p + a:p + a + hd,
                               q + b:q + b + wdim, :].reshape(m, inner_p)
                uacc = uacc + jnp.dot(tap, wu_ref[ph, 2 * a + b],
                                      preferred_element_type=jnp.float32)
        u_ref[0, ph] = uacc.astype(u_ref.dtype)                 # bf16 HBM write
        s = s + jnp.sum(uacc, axis=0, keepdims=True)            # stats from f32 acc
        sq = sq + jnp.sum(uacc * uacc, axis=0, keepdims=True)
    stats_ref[0, 0:1, :] = s                                    # two row stores
    stats_ref[0, 1:2, :] = sq                                   # (no in-kernel concat)


# ---------------------------------------------------------------------------
# Wrapper
# ---------------------------------------------------------------------------
@jax.jit
def unet_innermost_block(x, w_down, w_up_t, gamma, beta):
    """Innermost UnetSkipConnectionBlock forward.

    x:      (N, input_nc, H, W) f32
    w_down: (inner_nc, input_nc, 4, 4)  Conv2d weight (bias-free: BatchNorm norm layer)
    w_up_t: (inner_nc, outer_nc, 4, 4)  ConvTranspose2d weight (bias-free)
    gamma, beta: (outer_nc,)            BatchNorm2d affine parameters
    returns (N, input_nc + outer_nc, H, W) f32
    """
    N, cin, H, W = x.shape
    inner_nc = w_down.shape[0]
    outer_nc = w_up_t.shape[1]
    assert H % 2 == 0 and W % 2 == 0
    hd, wdim = H // 2, W // 2
    m = hd * wdim
    eps = 1e-5

    ccat = 4 * cin
    ccat_p = _round_up(ccat, LANE)
    inner_p = _round_up(inner_nc, LANE)
    outer_p = _round_up(outer_nc, LANE)
    # TODO(synk): for very large channel counts, round tiles to 256 (v6e/v7x MXU width)
    # and split inner_p / outer_p over an extra grid axis so both weight operands stay
    # well under v7x's 64 MiB VMEM; also add spatial halo tiling (manual DMA) for
    # large-spatial configurations of this block.

    # ---- prologue (one fused XLA pass over x): NHWC, LeakyReLU(0.2), pad=1, and a
    #      2x2 pixel-unshuffle so the stride-2 conv becomes 4 dense in-kernel taps ----
    x_nhwc = jnp.transpose(x, (0, 2, 3, 1))
    xa = jnp.where(x_nhwc > 0, x_nhwc, 0.2 * x_nhwc).astype(jnp.bfloat16)   # downrelu
    xp = jnp.pad(xa, ((0, 0), (1, 1), (1, 1), (0, 0)))
    xcat = xp.reshape(N, hd + 1, 2, wdim + 1, 2, cin)
    xcat = xcat.transpose(0, 1, 3, 2, 4, 5).reshape(N, hd + 1, wdim + 1, ccat)
    xcat = jnp.pad(xcat, ((0, 0), (0, 0), (0, 0), (0, ccat_p - ccat)))

    # ---- weight re-layouts (tiny, host/XLA) ----------------------------------------
    # down: Wd[2a+b][(2p+q)*Cin + c, o] = w_down[o, c, 2a+p, 2b+q]
    w_k = w_down.transpose(2, 3, 1, 0)                                # (kh, kw, Cin, inner)
    wd_taps = []
    for a in (0, 1):
        for b in (0, 1):
            rows = [w_k[2 * a + p, 2 * b + q] for p in (0, 1) for q in (0, 1)]
            wd_taps.append(jnp.concatenate(rows, axis=0))             # (4*Cin, inner)
    wd_cat = jnp.stack(wd_taps, axis=0)                               # (4, 4*Cin, inner)
    wd_cat = jnp.pad(wd_cat, ((0, 0), (0, ccat_p - ccat),
                              (0, inner_p - inner_nc))).astype(jnp.bfloat16)

    # up: Wu[2p+q, 2a+b][c, o] = w_up_t[c, o, 3-p-2a, 3-q-2b]
    wu_phases = []
    for p in (0, 1):
        for q in (0, 1):
            taps = [w_up_t[:, :, 3 - p - 2 * a, 3 - q - 2 * b]
                    for a in (0, 1) for b in (0, 1)]
            wu_phases.append(jnp.stack(taps, axis=0))                 # (4, inner, outer)
    wu_cat = jnp.stack(wu_phases, axis=0)                             # (4, 4, inner, outer)
    wu_cat = jnp.pad(wu_cat, ((0, 0), (0, 0), (0, inner_p - inner_nc),
                              (0, outer_p - outer_nc))).astype(jnp.bfloat16)

    kernel = functools.partial(_unet_inner_kernel, hd=hd, wdim=wdim,
                               ccat_p=ccat_p, inner_p=inner_p, outer_p=outer_p)

    u, stats = pl.pallas_call(
        kernel,
        out_shape=(jax.ShapeDtypeStruct((N, 4, m, outer_p), jnp.bfloat16),
                   jax.ShapeDtypeStruct((N, 2, outer_p), jnp.float32)),
        grid=(N,),
        in_specs=[
            pl.BlockSpec((1, hd + 1, wdim + 1, ccat_p), lambda n: (n, 0, 0, 0)),
            # TODO(synk): pipeline_mode=pl.Buffered(1) on the two constant-index weight
            # operands (saves one weight double-buffer on v7x) once verified on target jax.
            pl.BlockSpec((4, ccat_p, inner_p), lambda n: (0, 0, 0)),
            pl.BlockSpec((4, 4, inner_p, outer_p), lambda n: (0, 0, 0, 0)),
        ],
        out_specs=(
            pl.BlockSpec((1, 4, m, outer_p), lambda n: (n, 0, 0, 0)),
            pl.BlockSpec((1, 2, outer_p), lambda n: (n, 0, 0)),
        ),
        scratch_shapes=[pltpu.VMEM((hd + 2, wdim + 2, inner_p), jnp.bfloat16)],
        compiler_params=pltpu.CompilerParams(
            dimension_semantics=("parallel",),
            vmem_limit_bytes=_vmem_limit_bytes()),
    )(xcat, wd_cat, wu_cat)

    # ---- BatchNorm2d (training-mode batch statistics) finalize + fused epilogue -----
    count = jnp.float32(N * H * W)
    tot = jnp.sum(stats, axis=0)                                  # (2, outer_p) f32
    mean = tot[0, :outer_nc] / count
    var = jnp.maximum(tot[1, :outer_nc] / count - mean * mean, 0.0)
    # TODO(synk): switch to a shifted / Welford-style accumulation if tighter than 1e-2
    # tolerance is ever required (E[x^2] - mean^2 can cancel for large N*H*W).
    inv = lax.rsqrt(var + eps)
    scale = gamma.astype(jnp.float32) * inv
    shift = beta.astype(jnp.float32) - mean * scale

    # phase de-interleave + scale/shift + skip concat + NHWC->NCHW: one fused XLA pass
    u_img = u.reshape(N, 2, 2, hd, wdim, outer_p).transpose(0, 3, 1, 4, 2, 5)
    u_img = u_img.reshape(N, H, W, outer_p)[..., :outer_nc].astype(jnp.float32)
    up_nhwc = u_img * scale + shift
    out_nhwc = jnp.concatenate([x_nhwc, up_nhwc], axis=-1)
    return jnp.transpose(out_nhwc, (0, 3, 1, 2))


# ---------------------------------------------------------------------------
# Pure-JAX reference (mirrors the bf16 matmul-operand casts, f32 accumulation)
# ---------------------------------------------------------------------------
def _reference(x, w_down, w_up_t, gamma, beta, eps=1e-5):
    xa = jnp.where(x > 0, x, 0.2 * x).astype(jnp.bfloat16)
    d = lax.conv_general_dilated(xa, w_down.astype(jnp.bfloat16), (2, 2), ((1, 1), (1, 1)),
                                 dimension_numbers=("NCHW", "OIHW", "NCHW"),
                                 preferred_element_type=jnp.float32)
    r = jnp.maximum(d, 0.0).astype(jnp.bfloat16)
    w_conv = jnp.flip(w_up_t, axis=(2, 3)).transpose(1, 0, 2, 3).astype(jnp.bfloat16)
    u = lax.conv_general_dilated(r, w_conv, (1, 1), ((2, 2), (2, 2)),
                                 lhs_dilation=(2, 2),
                                 dimension_numbers=("NCHW", "OIHW", "NCHW"),
                                 preferred_element_type=jnp.float32)
    mean = u.mean(axis=(0, 2, 3), keepdims=True)
    var = ((u - mean) ** 2).mean(axis=(0, 2, 3), keepdims=True)
    bn = (u - mean) * lax.rsqrt(var + eps) * gamma.reshape(1, -1, 1, 1) \
        + beta.reshape(1, -1, 1, 1)
    return jnp.concatenate([x, bn], axis=1)


if __name__ == "__main__":
    N, outer_nc, inner_nc, H, W = 2, 4, 8, 16, 16
    input_nc = outer_nc  # module default: input_nc = outer_nc when None

    key = jax.random.PRNGKey(0)
    k1, k2, k3, k4, k5 = jax.random.split(key, 5)
    x = jax.random.normal(k1, (N, input_nc, H, W), jnp.float32)
    # Parameters matching the PyTorch module shapes.
    w_down = 0.1 * jax.random.normal(k2, (inner_nc, input_nc, 4, 4), jnp.float32)
    w_up_t = 0.1 * jax.random.normal(k3, (inner_nc, outer_nc, 4, 4), jnp.float32)
    gamma = 1.0 + 0.1 * jax.random.normal(k4, (outer_nc,), jnp.float32)
    beta = 0.1 * jax.random.normal(k5, (outer_nc,), jnp.float32)

    out = unet_innermost_block(x, w_down, w_up_t, gamma, beta)
    out = jax.block_until_ready(out)

    ref = _reference(x, w_down, w_up_t, gamma, beta)
    np.testing.assert_allclose(np.asarray(out), np.asarray(ref), rtol=1e-2, atol=1e-2)

    print("KERNEL_OK")
</pallas_src>

<mosaic_0001>
module attributes {stable_mosaic.version = 11 : i64} {
  func.func @_unet_inner_kernel(%arg0: i32, %arg1: memref<1x9x9x128xbf16, #tpu.memory_space<vmem>>, %arg2: memref<4x128x128xbf16, #tpu.memory_space<vmem>>, %arg3: memref<4x4x128x128xbf16, #tpu.memory_space<vmem>>, %arg4: memref<1x4x64x128xbf16, #tpu.memory_space<vmem>>, %arg5: memref<1x2x128xf32, #tpu.memory_space<vmem>>, %arg6: memref<10x10x128xbf16, #tpu.memory_space<vmem>>) attributes {dimension_semantics = [#tpu.dimension_semantics<parallel>], iteration_bounds = array<i64: 2>, scalar_prefetch = 0 : i64, scratch_operands = 1 : i64, tpu.core_type = #tpu.core_type<tc>, window_params = [{transform_indices = @transform_0, window_bounds = array<i64: 1, 9, 9, 128>}, {pipeline_mode = #tpu.pipeline_mode<synchronous>, transform_indices = @transform_1, window_bounds = array<i64: 4, 128, 128>}, {pipeline_mode = #tpu.pipeline_mode<synchronous>, transform_indices = @transform_2, window_bounds = array<i64: 4, 4, 128, 128>}, {transform_indices = @transform_3, window_bounds = array<i64: 1, 4, 64, 128>}, {transform_indices = @transform_4, window_bounds = array<i64: 1, 2, 128>}]} {
    %cst = arith.constant 0.000000e+00 : bf16
    %0 = vector.broadcast %cst : bf16 to vector<10x10x128xbf16>
    %c0 = arith.constant 0 : index
    %c0_0 = arith.constant 0 : index
    %c0_1 = arith.constant 0 : index
    %1 = vector.load %arg6[%c0, %c0_0, %c0_1] : memref<10x10x128xbf16, #tpu.memory_space<vmem>>, vector<10x10x128xbf16>
    tpu.vector_store %arg6[%c0, %c0_0, %c0_1], %0 {strides = array<i32>} : memref<10x10x128xbf16, #tpu.memory_space<vmem>>, vector<10x10x128xbf16>,
    %cst_2 = arith.constant 0.000000e+00 : f32
    %2 = vector.broadcast %cst_2 : f32 to vector<64x128xf32>
    %c0_3 = arith.constant 0 : index
    %c0_4 = arith.constant 0 : index
    %c0_5 = arith.constant 0 : index
    %c0_6 = arith.constant 0 : index
    %3 = vector.load %arg1[%c0_3, %c0_4, %c0_5, %c0_6] : memref<1x9x9x128xbf16, #tpu.memory_space<vmem>>, vector<1x8x8x128xbf16>
    %4 = vector.shape_cast %3 : vector<1x8x8x128xbf16> to vector<8x8x128xbf16>
    %5 = vector.shape_cast %4 : vector<8x8x128xbf16> to vector<64x128xbf16>
    %c0_7 = arith.constant 0 : index
    %c0_8 = arith.constant 0 : index
    %c0_9 = arith.constant 0 : index
    %6 = vector.load %arg2[%c0_7, %c0_8, %c0_9] : memref<4x128x128xbf16, #tpu.memory_space<vmem>>, vector<1x128x128xbf16>
    %7 = vector.shape_cast %6 : vector<1x128x128xbf16> to vector<128x128xbf16>
    %cst_10 = arith.constant dense<0.000000e+00> : vector<64x128xf32>
    %8 = tpu.matmul %5, %7, %cst_10 {dimension_numbers = #tpu.dot_dimension_numbers<[1], [0], [0], [1], [0, 0, 1, 1], [], []>} : vector<64x128xbf16>, vector<128x128xbf16>, vector<64x128xf32> -> vector<64x128xf32>
    %9 = arith.addf %2, %8 : vector<64x128xf32>
    %c0_11 = arith.constant 0 : index
    %c0_12 = arith.constant 0 : index
    %c1 = arith.constant 1 : index
    %c0_13 = arith.constant 0 : index
    %10 = vector.load %arg1[%c0_11, %c0_12, %c1, %c0_13] : memref<1x9x9x128xbf16, #tpu.memory_space<vmem>>, vector<1x8x8x128xbf16>
    %11 = vector.shape_cast %10 : vector<1x8x8x128xbf16> to vector<8x8x128xbf16>
    %12 = vector.shape_cast %11 : vector<8x8x128xbf16> to vector<64x128xbf16>
    %c1_14 = arith.constant 1 : index
    %c0_15 = arith.constant 0 : index
    %c0_16 = arith.constant 0 : index
    %13 = vector.load %arg2[%c1_14, %c0_15, %c0_16] : memref<4x128x128xbf16, #tpu.memory_space<vmem>>, vector<1x128x128xbf16>
    %14 = vector.shape_cast %13 : vector<1x128x128xbf16> to vector<128x128xbf16>
    %cst_17 = arith.constant dense<0.000000e+00> : vector<64x128xf32>
    %15 = tpu.matmul %12, %14, %cst_17 {dimension_numbers = #tpu.dot_dimension_numbers<[1], [0], [0], [1], [0, 0, 1, 1], [], []>} : vector<64x128xbf16>, vector<128x128xbf16>, vector<64x128xf32> -> vector<64x128xf32>
    %16 = arith.addf %9, %15 : vector<64x128xf32>
    %c0_18 = arith.constant 0 : index
    %c1_19 = arith.constant 1 : index
    %c0_20 = arith.constant 0 : index
    %c0_21 = arith.constant 0 : index
    %17 = vector.load %arg1[%c0_18, %c1_19, %c0_20, %c0_21] : memref<1x9x9x128xbf16, #tpu.memory_space<vmem>>, vector<1x8x8x128xbf16>
    %18 = vector.shape_cast %17 : vector<1x8x8x128xbf16> to vector<8x8x128xbf16>
    %19 = vector.shape_cast %18 : vector<8x8x128xbf16> to vector<64x128xbf16>
    %c2 = arith.constant 2 : index
    %c0_22 = arith.constant 0 : index
    %c0_23 = arith.constant 0 : index
    %20 = vector.load %arg2[%c2, %c0_22, %c0_23] : memref<4x128x128xbf16, #tpu.memory_space<vmem>>, vector<1x128x128xbf16>
    %21 = vector.shape_cast %20 : vector<1x128x128xbf16> to vector<128x128xbf16>
    %cst_24 = arith.constant dense<0.000000e+00> : vector<64x128xf32>
    %22 = tpu.matmul %19, %21, %cst_24 {dimension_numbers = #tpu.dot_dimension_numbers<[1], [0], [0], [1], [0, 0, 1, 1], [], []>} : vector<64x128xbf16>, vector<128x128xbf16>, vector<64x128xf32> -> vector<64x128xf32>
    %23 = arith.addf %16, %22 : vector<64x128xf32>
    %c0_25 = arith.constant 0 : index
    %c1_26 = arith.constant 1 : index
    %c1_27 = arith.constant 1 : index
    %c0_28 = arith.constant 0 : index
    %24 = vector.load %arg1[%c0_25, %c1_26, %c1_27, %c0_28] : memref<1x9x9x128xbf16, #tpu.memory_space<vmem>>, vector<1x8x8x128xbf16>
    %25 = vector.shape_cast %24 : vector<1x8x8x128xbf16> to vector<8x8x128xbf16>
    %26 = vector.shape_cast %25 : vector<8x8x128xbf16> to vector<64x128xbf16>
    %c3 = arith.constant 3 : index
    %c0_29 = arith.constant 0 : index
    %c0_30 = arith.constant 0 : index
    %27 = vector.load %arg2[%c3, %c0_29, %c0_30] : memref<4x128x128xbf16, #tpu.memory_space<vmem>>, vector<1x128x128xbf16>
    %28 = vector.shape_cast %27 : vector<1x128x128xbf16> to vector<128x128xbf16>
    %cst_31 = arith.constant dense<0.000000e+00> : vector<64x128xf32>
    %29 = tpu.matmul %26, %28, %cst_31 {dimension_numbers = #tpu.dot_dimension_numbers<[1], [0], [0], [1], [0, 0, 1, 1], [], []>} : vector<64x128xbf16>, vector<128x128xbf16>, vector<64x128xf32> -> vector<64x128xf32>
    %30 = arith.addf %23, %29 : vector<64x128xf32>
    %cst_32 = arith.constant 0.000000e+00 : f32
    %31 = vector.broadcast %cst_32 : f32 to vector<64x128xf32>
    %32 = arith.maximumf %30, %31 : vector<64x128xf32>
    %33 = arith.truncf %32 : vector<64x128xf32> to vector<64x128xbf16>
    %34 = vector.shape_cast %33 : vector<64x128xbf16> to vector<8x8x128xbf16>
    %c1_33 = arith.constant 1 : index
    %c1_34 = arith.constant 1 : index
    %c0_35 = arith.constant 0 : index
    %35 = vector.load %arg6[%c1_33, %c1_34, %c0_35] : memref<10x10x128xbf16, #tpu.memory_space<vmem>>, vector<8x8x128xbf16>
    tpu.vector_store %arg6[%c1_33, %c1_34, %c0_35], %34 {strides = array<i32>} : memref<10x10x128xbf16, #tpu.memory_space<vmem>>, vector<8x8x128xbf16>,
    %cst_36 = arith.constant 0.000000e+00 : f32
    %36 = vector.broadcast %cst_36 : f32 to vector<1x128xf32>
    %cst_37 = arith.constant 0.000000e+00 : f32
    %37 = vector.broadcast %cst_37 : f32 to vector<1x128xf32>
    %cst_38 = arith.constant 0.000000e+00 : f32
    %38 = vector.broadcast %cst_38 : f32 to vector<64x128xf32>
    %c0_39 = arith.constant 0 : index
    %c0_40 = arith.constant 0 : index
    %c0_41 = arith.constant 0 : index
    %39 = vector.load %arg6[%c0_39, %c0_40, %c0_41] : memref<10x10x128xbf16, #tpu.memory_space<vmem>>, vector<8x8x128xbf16>
    %40 = vector.shape_cast %39 : vector<8x8x128xbf16> to vector<64x128xbf16>
    %c0_42 = arith.constant 0 : index
    %c0_43 = arith.constant 0 : index
    %c0_44 = arith.constant 0 : index
    %c0_45 = arith.constant 0 : index
    %41 = vector.load %arg3[%c0_42, %c0_43, %c0_44, %c0_45] : memref<4x4x128x128xbf16, #tpu.memory_space<vmem>>, vector<1x1x128x128xbf16>
    %42 = vector.shape_cast %41 : vector<1x1x128x128xbf16> to vector<128x128xbf16>
    %cst_46 = arith.constant dense<0.000000e+00> : vector<64x128xf32>
    %43 = tpu.matmul %40, %42, %cst_46 {dimension_numbers = #tpu.dot_dimension_numbers<[1], [0], [0], [1], [0, 0, 1, 1], [], []>} : vector<64x128xbf16>, vector<128x128xbf16>, vector<64x128xf32> -> vector<64x128xf32>
    %44 = arith.addf %38, %43 : vector<64x128xf32>
    %c0_47 = arith.constant 0 : index
    %c1_48 = arith.constant 1 : index
    %c0_49 = arith.constant 0 : index
    %45 = vector.load %arg6[%c0_47, %c1_48, %c0_49] : memref<10x10x128xbf16, #tpu.memory_space<vmem>>, vector<8x8x128xbf16>
    %46 = vector.shape_cast %45 : vector<8x8x128xbf16> to vector<64x128xbf16>
    %c0_50 = arith.constant 0 : index
    %c1_51 = arith.constant 1 : index
    %c0_52 = arith.constant 0 : index
    %c0_53 = arith.constant 0 : index
    %47 = vector.load %arg3[%c0_50, %c1_51, %c0_52, %c0_53] : memref<4x4x128x128xbf16, #tpu.memory_space<vmem>>, vector<1x1x128x128xbf16>
    %48 = vector.shape_cast %47 : vector<1x1x128x128xbf16> to vector<128x128xbf16>
    %cst_54 = arith.constant dense<0.000000e+00> : vector<64x128xf32>
    %49 = tpu.matmul %46, %48, %cst_54 {dimension_numbers = #tpu.dot_dimension_numbers<[1], [0], [0], [1], [0, 0, 1, 1], [], []>} : vector<64x128xbf16>, vector<128x128xbf16>, vector<64x128xf32> -> vector<64x128xf32>
    %50 = arith.addf %44, %49 : vector<64x128xf32>
    %c1_55 = arith.constant 1 : index
    %c0_56 = arith.constant 0 : index
    %c0_57 = arith.constant 0 : index
    %51 = vector.load %arg6[%c1_55, %c0_56, %c0_57] : memref<10x10x128xbf16, #tpu.memory_space<vmem>>, vector<8x8x128xbf16>
    %52 = vector.shape_cast %51 : vector<8x8x128xbf16> to vector<64x128xbf16>
    %c0_58 = arith.constant 0 : index
    %c2_59 = arith.constant 2 : index
    %c0_60 = arith.constant 0 : index
    %c0_61 = arith.constant 0 : index
    %53 = vector.load %arg3[%c0_58, %c2_59, %c0_60, %c0_61] : memref<4x4x128x128xbf16, #tpu.memory_space<vmem>>, vector<1x1x128x128xbf16>
    %54 = vector.shape_cast %53 : vector<1x1x128x128xbf16> to vector<128x128xbf16>
    %cst_62 = arith.constant dense<0.000000e+00> : vector<64x128xf32>
    %55 = tpu.matmul %52, %54, %cst_62 {dimension_numbers = #tpu.dot_dimension_numbers<[1], [0], [0], [1], [0, 0, 1, 1], [], []>} : vector<64x128xbf16>, vector<128x128xbf16>, vector<64x128xf32> -> vector<64x128xf32>
    %56 = arith.addf %50, %55 : vector<64x128xf32>
    %c1_63 = arith.constant 1 : index
    %c1_64 = arith.constant 1 : index
    %c0_65 = arith.constant 0 : index
    %57 = vector.load %arg6[%c1_63, %c1_64, %c0_65] : memref<10x10x128xbf16, #tpu.memory_space<vmem>>, vector<8x8x128xbf16>
    %58 = vector.shape_cast %57 : vector<8x8x128xbf16> to vector<64x128xbf16>
    %c0_66 = arith.constant 0 : index
    %c3_67 = arith.constant 3 : index
    %c0_68 = arith.constant 0 : index
    %c0_69 = arith.constant 0 : index
    %59 = vector.load %arg3[%c0_66, %c3_67, %c0_68, %c0_69] : memref<4x4x128x128xbf16, #tpu.memory_space<vmem>>, vector<1x1x128x128xbf16>
    %60 = vector.shape_cast %59 : vector<1x1x128x128xbf16> to vector<128x128xbf16>
    %cst_70 = arith.constant dense<0.000000e+00> : vector<64x128xf32>
    %61 = tpu.matmul %58, %60, %cst_70 {dimension_numbers = #tpu.dot_dimension_numbers<[1], [0], [0], [1], [0, 0, 1, 1], [], []>} : vector<64x128xbf16>, vector<128x128xbf16>, vector<64x128xf32> -> vector<64x128xf32>
    %62 = arith.addf %56, %61 : vector<64x128xf32>
    %63 = arith.truncf %62 : vector<64x128xf32> to vector<64x128xbf16>
    %c0_71 = arith.constant 0 : index
    %c0_72 = arith.constant 0 : index
    %c0_73 = arith.constant 0 : index
    %c0_74 = arith.constant 0 : index
    %64 = vector.load %arg4[%c0_71, %c0_72, %c0_73, %c0_74] : memref<1x4x64x128xbf16, #tpu.memory_space<vmem>>, vector<1x1x64x128xbf16>
    %65 = vector.shape_cast %64 : vector<1x1x64x128xbf16> to vector<64x128xbf16>
    %66 = vector.shape_cast %63 : vector<64x128xbf16> to vector<1x1x64x128xbf16>
    tpu.vector_store %arg4[%c0_71, %c0_72, %c0_73, %c0_74], %66 {strides = array<i32>} : memref<1x4x64x128xbf16, #tpu.memory_space<vmem>>, vector<1x1x64x128xbf16>,
    %cst_75 = arith.constant dense<0.000000e+00> : vector<128xf32>
    %67 = vector.multi_reduction <add>, %62, %cst_75 [0] : vector<64x128xf32> to vector<128xf32>
    %68 = vector.shape_cast %67 : vector<128xf32> to vector<1x128xf32>
    %69 = arith.addf %36, %68 : vector<1x128xf32>
    %70 = arith.mulf %62, %62 : vector<64x128xf32>
    %cst_76 = arith.constant dense<0.000000e+00> : vector<128xf32>
    %71 = vector.multi_reduction <add>, %70, %cst_76 [0] : vector<64x128xf32> to vector<128xf32>
    %72 = vector.shape_cast %71 : vector<128xf32> to vector<1x128xf32>
    %73 = arith.addf %37, %72 : vector<1x128xf32>
    %cst_77 = arith.constant 0.000000e+00 : f32
    %74 = vector.broadcast %cst_77 : f32 to vector<64x128xf32>
    %c0_78 = arith.constant 0 : index
    %c1_79 = arith.constant 1 : index
    %c0_80 = arith.constant 0 : index
    %75 = vector.load %arg6[%c0_78, %c1_79, %c0_80] : memref<10x10x128xbf16, #tpu.memory_space<vmem>>, vector<8x8x128xbf16>
    %76 = vector.shape_cast %75 : vector<8x8x128xbf16> to vector<64x128xbf16>
    %c1_81 = arith.constant 1 : index
    %c0_82 = arith.constant 0 : index
    %c0_83 = arith.constant 0 : index
    %c0_84 = arith.constant 0 : index
    %77 = vector.load %arg3[%c1_81, %c0_82, %c0_83, %c0_84] : memref<4x4x128x128xbf16, #tpu.memory_space<vmem>>, vector<1x1x128x128xbf16>
    %78 = vector.shape_cast %77 : vector<1x1x128x128xbf16> to vector<128x128xbf16>
    %cst_85 = arith.constant dense<0.000000e+00> : vector<64x128xf32>
    %79 = tpu.matmul %76, %78, %cst_85 {dimension_numbers = #tpu.dot_dimension_numbers<[1], [0], [0], [1], [0, 0, 1, 1], [], []>} : vector<64x128xbf16>, vector<128x128xbf16>, vector<64x128xf32> -> vector<64x128xf32>
    %80 = arith.addf %74, %79 : vector<64x128xf32>
    %c0_86 = arith.constant 0 : index
    %c2_87 = arith.constant 2 : index
    %c0_88 = arith.constant 0 : index
    %81 = vector.load %arg6[%c0_86, %c2_87, %c0_88] : memref<10x10x128xbf16, #tpu.memory_space<vmem>>, vector<8x8x128xbf16>
    %82 = vector.shape_cast %81 : vector<8x8x128xbf16> to vector<64x128xbf16>
    %c1_89 = arith.constant 1 : index
    %c1_90 = arith.constant 1 : index
    %c0_91 = arith.constant 0 : index
    %c0_92 = arith.constant 0 : index
    %83 = vector.load %arg3[%c1_89, %c1_90, %c0_91, %c0_92] : memref<4x4x128x128xbf16, #tpu.memory_space<vmem>>, vector<1x1x128x128xbf16>
    %84 = vector.shape_cast %83 : vector<1x1x128x128xbf16> to vector<128x128xbf16>
    %cst_93 = arith.constant dense<0.000000e+00> : vector<64x128xf32>
    %85 = tpu.matmul %82, %84, %cst_93 {dimension_numbers = #tpu.dot_dimension_numbers<[1], [0], [0], [1], [0, 0, 1, 1], [], []>} : vector<64x128xbf16>, vector<128x128xbf16>, vector<64x128xf32> -> vector<64x128xf32>
    %86 = arith.addf %80, %85 : vector<64x128xf32>
    %c1_94 = arith.constant 1 : index
    %c1_95 = arith.constant 1 : index
    %c0_96 = arith.constant 0 : index
    %87 = vector.load %arg6[%c1_94, %c1_95, %c0_96] : memref<10x10x128xbf16, #tpu.memory_space<vmem>>, vector<8x8x128xbf16>
    %88 = vector.shape_cast %87 : vector<8x8x128xbf16> to vector<64x128xbf16>
    %c1_97 = arith.constant 1 : index
    %c2_98 = arith.constant 2 : index
    %c0_99 = arith.constant 0 : index
    %c0_100 = arith.constant 0 : index
    %89 = vector.load %arg3[%c1_97, %c2_98, %c0_99, %c0_100] : memref<4x4x128x128xbf16, #tpu.memory_space<vmem>>, vector<1x1x128x128xbf16>
    %90 = vector.shape_cast %89 : vector<1x1x128x128xbf16> to vector<128x128xbf16>
    %cst_101 = arith.constant dense<0.000000e+00> : vector<64x128xf32>
    %91 = tpu.matmul %88, %90, %cst_101 {dimension_numbers = #tpu.dot_dimension_numbers<[1], [0], [0], [1], [0, 0, 1, 1], [], []>} : vector<64x128xbf16>, vector<128x128xbf16>, vector<64x128xf32> -> vector<64x128xf32>
    %92 = arith.addf %86, %91 : vector<64x128xf32>
    %c1_102 = arith.constant 1 : index
    %c2_103 = arith.constant 2 : index
    %c0_104 = arith.constant 0 : index
    %93 = vector.load %arg6[%c1_102, %c2_103, %c0_104] : memref<10x10x128xbf16, #tpu.memory_space<vmem>>, vector<8x8x128xbf16>
    %94 = vector.shape_cast %93 : vector<8x8x128xbf16> to vector<64x128xbf16>
    %c1_105 = arith.constant 1 : index
    %c3_106 = arith.constant 3 : index
    %c0_107 = arith.constant 0 : index
    %c0_108 = arith.constant 0 : index
    %95 = vector.load %arg3[%c1_105, %c3_106, %c0_107, %c0_108] : memref<4x4x128x128xbf16, #tpu.memory_space<vmem>>, vector<1x1x128x128xbf16>
    %96 = vector.shape_cast %95 : vector<1x1x128x128xbf16> to vector<128x128xbf16>
    %cst_109 = arith.constant dense<0.000000e+00> : vector<64x128xf32>
    %97 = tpu.matmul %94, %96, %cst_109 {dimension_numbers = #tpu.dot_dimension_numbers<[1], [0], [0], [1], [0, 0, 1, 1], [], []>} : vector<64x128xbf16>, vector<128x128xbf16>, vector<64x128xf32> -> vector<64x128xf32>
    %98 = arith.addf %92, %97 : vector<64x128xf32>
    %99 = arith.truncf %98 : vector<64x128xf32> to vector<64x128xbf16>
    %c0_110 = arith.constant 0 : index
    %c1_111 = arith.constant 1 : index
    %c0_112 = arith.constant 0 : index
    %c0_113 = arith.constant 0 : index
    %100 = vector.load %arg4[%c0_110, %c1_111, %c0_112, %c0_113] : memref<1x4x64x128xbf16, #tpu.memory_space<vmem>>, vector<1x1x64x128xbf16>
    %101 = vector.shape_cast %100 : vector<1x1x64x128xbf16> to vector<64x128xbf16>
    %102 = vector.shape_cast %99 : vector<64x128xbf16> to vector<1x1x64x128xbf16>
    tpu.vector_store %arg4[%c0_110, %c1_111, %c0_112, %c0_113], %102 {strides = array<i32>} : memref<1x4x64x128xbf16, #tpu.memory_space<vmem>>, vector<1x1x64x128xbf16>,
    %cst_114 = arith.constant dense<0.000000e+00> : vector<128xf32>
    %103 = vector.multi_reduction <add>, %98, %cst_114 [0] : vector<64x128xf32> to vector<128xf32>
    %104 = vector.shape_cast %103 : vector<128xf32> to vector<1x128xf32>
    %105 = arith.addf %69, %104 : vector<1x128xf32>
    %106 = arith.mulf %98, %98 : vector<64x128xf32>
    %cst_115 = arith.constant dense<0.000000e+00> : vector<128xf32>
    %107 = vector.multi_reduction <add>, %106, %cst_115 [0] : vector<64x128xf32> to vector<128xf32>
    %108 = vector.shape_cast %107 : vector<128xf32> to vector<1x128xf32>
    %109 = arith.addf %73, %108 : vector<1x128xf32>
    %cst_116 = arith.constant 0.000000e+00 : f32
    %110 = vector.broadcast %cst_116 : f32 to vector<64x128xf32>
    %c1_117 = arith.constant 1 : index
    %c0_118 = arith.constant 0 : index
    %c0_119 = arith.constant 0 : index
    %111 = vector.load %arg6[%c1_117, %c0_118, %c0_119] : memref<10x10x128xbf16, #tpu.memory_space<vmem>>, vector<8x8x128xbf16>
    %112 = vector.shape_cast %111 : vector<8x8x128xbf16> to vector<64x128xbf16>
    %c2_120 = arith.constant 2 : index
    %c0_121 = arith.constant 0 : index
    %c0_122 = arith.constant 0 : index
    %c0_123 = arith.constant 0 : index
    %113 = vector.load %arg3[%c2_120, %c0_121, %c0_122, %c0_123] : memref<4x4x128x128xbf16, #tpu.memory_space<vmem>>, vector<1x1x128x128xbf16>
    %114 = vector.shape_cast %113 : vector<1x1x128x128xbf16> to vector<128x128xbf16>
    %cst_124 = arith.constant dense<0.000000e+00> : vector<64x128xf32>
    %115 = tpu.matmul %112, %114, %cst_124 {dimension_numbers = #tpu.dot_dimension_numbers<[1], [0], [0], [1], [0, 0, 1, 1], [], []>} : vector<64x128xbf16>, vector<128x128xbf16>, vector<64x128xf32> -> vector<64x128xf32>
    %116 = arith.addf %110, %115 : vector<64x128xf32>
    %c1_125 = arith.constant 1 : index
    %c1_126 = arith.constant 1 : index
    %c0_127 = arith.constant 0 : index
    %117 = vector.load %arg6[%c1_125, %c1_126, %c0_127] : memref<10x10x128xbf16, #tpu.memory_space<vmem>>, vector<8x8x128xbf16>
    %118 = vector.shape_cast %117 : vector<8x8x128xbf16> to vector<64x128xbf16>
    %c2_128 = arith.constant 2 : index
    %c1_129 = arith.constant 1 : index
    %c0_130 = arith.constant 0 : index
    %c0_131 = arith.constant 0 : index
    %119 = vector.load %arg3[%c2_128, %c1_129, %c0_130, %c0_131] : memref<4x4x128x128xbf16, #tpu.memory_space<vmem>>, vector<1x1x128x128xbf16>
    %120 = vector.shape_cast %119 : vector<1x1x128x128xbf16> to vector<128x128xbf16>
    %cst_132 = arith.constant dense<0.000000e+00> : vector<64x128xf32>
    %121 = tpu.matmul %118, %120, %cst_132 {dimension_numbers = #tpu.dot_dimension_numbers<[1], [0], [0], [1], [0, 0, 1, 1], [], []>} : vector<64x128xbf16>, vector<128x128xbf16>, vector<64x128xf32> -> vector<64x128xf32>
    %122 = arith.addf %116, %121 : vector<64x128xf32>
    %c2_133 = arith.constant 2 : index
    %c0_134 = arith.constant 0 : index
    %c0_135 = arith.constant 0 : index
    %123 = vector.load %arg6[%c2_133, %c0_134, %c0_135] : memref<10x10x128xbf16, #tpu.memory_space<vmem>>, vector<8x8x128xbf16>
    %124 = vector.shape_cast %123 : vector<8x8x128xbf16> to vector<64x128xbf16>
    %c2_136 = arith.constant 2 : index
    %c2_137 = arith.constant 2 : index
    %c0_138 = arith.constant 0 : index
    %c0_139 = arith.constant 0 : index
    %125 = vector.load %arg3[%c2_136, %c2_137, %c0_138, %c0_139] : memref<4x4x128x128xbf16, #tpu.memory_space<vmem>>, vector<1x1x128x128xbf16>
    %126 = vector.shape_cast %125 : vector<1x1x128x128xbf16> to vector<128x128xbf16>
    %cst_140 = arith.constant dense<0.000000e+00> : vector<64x128xf32>
    %127 = tpu.matmul %124, %126, %cst_140 {dimension_numbers = #tpu.dot_dimension_numbers<[1], [0], [0], [1], [0, 0, 1, 1], [], []>} : vector<64x128xbf16>, vector<128x128xbf16>, vector<64x128xf32> -> vector<64x128xf32>
    %128 = arith.addf %122, %127 : vector<64x128xf32>
    %c2_141 = arith.constant 2 : index
    %c1_142 = arith.constant 1 : index
    %c0_143 = arith.constant 0 : index
    %129 = vector.load %arg6[%c2_141, %c1_142, %c0_143] : memref<10x10x128xbf16, #tpu.memory_space<vmem>>, vector<8x8x128xbf16>
    %130 = vector.shape_cast %129 : vector<8x8x128xbf16> to vector<64x128xbf16>
    %c2_144 = arith.constant 2 : index
    %c3_145 = arith.constant 3 : index
    %c0_146 = arith.constant 0 : index
    %c0_147 = arith.constant 0 : index
    %131 = vector.load %arg3[%c2_144, %c3_145, %c0_146, %c0_147] : memref<4x4x128x128xbf16, #tpu.memory_space<vmem>>, vector<1x1x128x128xbf16>
    %132 = vector.shape_cast %131 : vector<1x1x128x128xbf16> to vector<128x128xbf16>
    %cst_148 = arith.constant dense<0.000000e+00> : vector<64x128xf32>
    %133 = tpu.matmul %130, %132, %cst_148 {dimension_numbers = #tpu.dot_dimension_numbers<[1], [0], [0], [1], [0, 0, 1, 1], [], []>} : vector<64x128xbf16>, vector<128x128xbf16>, vector<64x128xf32> -> vector<64x128xf32>
    %134 = arith.addf %128, %133 : vector<64x128xf32>
    %135 = arith.truncf %134 : vector<64x128xf32> to vector<64x128xbf16>
    %c0_149 = arith.constant 0 : index
    %c2_150 = arith.constant 2 : index
    %c0_151 = arith.constant 0 : index
    %c0_152 = arith.constant 0 : index
    %136 = vector.load %arg4[%c0_149, %c2_150, %c0_151, %c0_152] : memref<1x4x64x128xbf16, #tpu.memory_space<vmem>>, vector<1x1x64x128xbf16>
    %137 = vector.shape_cast %136 : vector<1x1x64x128xbf16> to vector<64x128xbf16>
    %138 = vector.shape_cast %135 : vector<64x128xbf16> to vector<1x1x64x128xbf16>
    tpu.vector_store %arg4[%c0_149, %c2_150, %c0_151, %c0_152], %138 {strides = array<i32>} : memref<1x4x64x128xbf16, #tpu.memory_space<vmem>>, vector<1x1x64x128xbf16>,
    %cst_153 = arith.constant dense<0.000000e+00> : vector<128xf32>
    %139 = vector.multi_reduction <add>, %134, %cst_153 [0] : vector<64x128xf32> to vector<128xf32>
    %140 = vector.shape_cast %139 : vector<128xf32> to vector<1x128xf32>
    %141 = arith.addf %105, %140 : vector<1x128xf32>
    %142 = arith.mulf %134, %134 : vector<64x128xf32>
    %cst_154 = arith.constant dense<0.000000e+00> : vector<128xf32>
    %143 = vector.multi_reduction <add>, %142, %cst_154 [0] : vector<64x128xf32> to vector<128xf32>
    %144 = vector.shape_cast %143 : vector<128xf32> to vector<1x128xf32>
    %145 = arith.addf %109, %144 : vector<1x128xf32>
    %cst_155 = arith.constant 0.000000e+00 : f32
    %146 = vector.broadcast %cst_155 : f32 to vector<64x128xf32>
    %c1_156 = arith.constant 1 : index
    %c1_157 = arith.constant 1 : index
    %c0_158 = arith.constant 0 : index
    %147 = vector.load %arg6[%c1_156, %c1_157, %c0_158] : memref<10x10x128xbf16, #tpu.memory_space<vmem>>, vector<8x8x128xbf16>
    %148 = vector.shape_cast %147 : vector<8x8x128xbf16> to vector<64x128xbf16>
    %c3_159 = arith.constant 3 : index
    %c0_160 = arith.constant 0 : index
    %c0_161 = arith.constant 0 : index
    %c0_162 = arith.constant 0 : index
    %149 = vector.load %arg3[%c3_159, %c0_160, %c0_161, %c0_162] : memref<4x4x128x128xbf16, #tpu.memory_space<vmem>>, vector<1x1x128x128xbf16>
    %150 = vector.shape_cast %149 : vector<1x1x128x128xbf16> to vector<128x128xbf16>
    %cst_163 = arith.constant dense<0.000000e+00> : vector<64x128xf32>
    %151 = tpu.matmul %148, %150, %cst_163 {dimension_numbers = #tpu.dot_dimension_numbers<[1], [0], [0], [1], [0, 0, 1, 1], [], []>} : vector<64x128xbf16>, vector<128x128xbf16>, vector<64x128xf32> -> vector<64x128xf32>
    %152 = arith.addf %146, %151 : vector<64x128xf32>
    %c1_164 = arith.constant 1 : index
    %c2_165 = arith.constant 2 : index
    %c0_166 = arith.constant 0 : index
    %153 = vector.load %arg6[%c1_164, %c2_165, %c0_166] : memref<10x10x128xbf16, #tpu.memory_space<vmem>>, vector<8x8x128xbf16>
    %154 = vector.shape_cast %153 : vector<8x8x128xbf16> to vector<64x128xbf16>
    %c3_167 = arith.constant 3 : index
    %c1_168 = arith.constant 1 : index
    %c0_169 = arith.constant 0 : index
    %c0_170 = arith.constant 0 : index
    %155 = vector.load %arg3[%c3_167, %c1_168, %c0_169, %c0_170] : memref<4x4x128x128xbf16, #tpu.memory_space<vmem>>, vector<1x1x128x128xbf16>
    %156 = vector.shape_cast %155 : vector<1x1x128x128xbf16> to vector<128x128xbf16>
    %cst_171 = arith.constant dense<0.000000e+00> : vector<64x128xf32>
    %157 = tpu.matmul %154, %156, %cst_171 {dimension_numbers = #tpu.dot_dimension_numbers<[1], [0], [0], [1], [0, 0, 1, 1], [], []>} : vector<64x128xbf16>, vector<128x128xbf16>, vector<64x128xf32> -> vector<64x128xf32>
    %158 = arith.addf %152, %157 : vector<64x128xf32>
    %c2_172 = arith.constant 2 : index
    %c1_173 = arith.constant 1 : index
    %c0_174 = arith.constant 0 : index
    %159 = vector.load %arg6[%c2_172, %c1_173, %c0_174] : memref<10x10x128xbf16, #tpu.memory_space<vmem>>, vector<8x8x128xbf16>
    %160 = vector.shape_cast %159 : vector<8x8x128xbf16> to vector<64x128xbf16>
    %c3_175 = arith.constant 3 : index
    %c2_176 = arith.constant 2 : index
    %c0_177 = arith.constant 0 : index
    %c0_178 = arith.constant 0 : index
    %161 = vector.load %arg3[%c3_175, %c2_176, %c0_177, %c0_178] : memref<4x4x128x128xbf16, #tpu.memory_space<vmem>>, vector<1x1x128x128xbf16>
    %162 = vector.shape_cast %161 : vector<1x1x128x128xbf16> to vector<128x128xbf16>
    %cst_179 = arith.constant dense<0.000000e+00> : vector<64x128xf32>
    %163 = tpu.matmul %160, %162, %cst_179 {dimension_numbers = #tpu.dot_dimension_numbers<[1], [0], [0], [1], [0, 0, 1, 1], [], []>} : vector<64x128xbf16>, vector<128x128xbf16>, vector<64x128xf32> -> vector<64x128xf32>
    %164 = arith.addf %158, %163 : vector<64x128xf32>
    %c2_180 = arith.constant 2 : index
    %c2_181 = arith.constant 2 : index
    %c0_182 = arith.constant 0 : index
    %165 = vector.load %arg6[%c2_180, %c2_181, %c0_182] : memref<10x10x128xbf16, #tpu.memory_space<vmem>>, vector<8x8x128xbf16>
    %166 = vector.shape_cast %165 : vector<8x8x128xbf16> to vector<64x128xbf16>
    %c3_183 = arith.constant 3 : index
    %c3_184 = arith.constant 3 : index
    %c0_185 = arith.constant 0 : index
    %c0_186 = arith.constant 0 : index
    %167 = vector.load %arg3[%c3_183, %c3_184, %c0_185, %c0_186] : memref<4x4x128x128xbf16, #tpu.memory_space<vmem>>, vector<1x1x128x128xbf16>
    %168 = vector.shape_cast %167 : vector<1x1x128x128xbf16> to vector<128x128xbf16>
    %cst_187 = arith.constant dense<0.000000e+00> : vector<64x128xf32>
    %169 = tpu.matmul %166, %168, %cst_187 {dimension_numbers = #tpu.dot_dimension_numbers<[1], [0], [0], [1], [0, 0, 1, 1], [], []>} : vector<64x128xbf16>, vector<128x128xbf16>, vector<64x128xf32> -> vector<64x128xf32>
    %170 = arith.addf %164, %169 : vector<64x128xf32>
    %171 = arith.truncf %170 : vector<64x128xf32> to vector<64x128xbf16>
    %c0_188 = arith.constant 0 : index
    %c3_189 = arith.constant 3 : index
    %c0_190 = arith.constant 0 : index
    %c0_191 = arith.constant 0 : index
    %172 = vector.load %arg4[%c0_188, %c3_189, %c0_190, %c0_191] : memref<1x4x64x128xbf16, #tpu.memory_space<vmem>>, vector<1x1x64x128xbf16>
    %173 = vector.shape_cast %172 : vector<1x1x64x128xbf16> to vector<64x128xbf16>
    %174 = vector.shape_cast %171 : vector<64x128xbf16> to vector<1x1x64x128xbf16>
    tpu.vector_store %arg4[%c0_188, %c3_189, %c0_190, %c0_191], %174 {strides = array<i32>} : memref<1x4x64x128xbf16, #tpu.memory_space<vmem>>, vector<1x1x64x128xbf16>,
    %cst_192 = arith.constant dense<0.000000e+00> : vector<128xf32>
    %175 = vector.multi_reduction <add>, %170, %cst_192 [0] : vector<64x128xf32> to vector<128xf32>
    %176 = vector.shape_cast %175 : vector<128xf32> to vector<1x128xf32>
    %177 = arith.addf %141, %176 : vector<1x128xf32>
    %178 = arith.mulf %170, %170 : vector<64x128xf32>
    %cst_193 = arith.constant dense<0.000000e+00> : vector<128xf32>
    %179 = vector.multi_reduction <add>, %178, %cst_193 [0] : vector<64x128xf32> to vector<128xf32>
    %180 = vector.shape_cast %179 : vector<128xf32> to vector<1x128xf32>
    %181 = arith.addf %145, %180 : vector<1x128xf32>
    %c0_194 = arith.constant 0 : index
    %c0_195 = arith.constant 0 : index
    %c0_196 = arith.constant 0 : index
    %182 = vector.load %arg5[%c0_194, %c0_195, %c0_196] : memref<1x2x128xf32, #tpu.memory_space<vmem>>, vector<1x1x128xf32>
    %183 = vector.shape_cast %182 : vector<1x1x128xf32> to vector<1x128xf32>
    %184 = vector.shape_cast %177 : vector<1x128xf32> to vector<1x1x128xf32>
    tpu.vector_store %arg5[%c0_194, %c0_195, %c0_196], %184 {strides = array<i32>} : memref<1x2x128xf32, #tpu.memory_space<vmem>>, vector<1x1x128xf32>,
    %c0_197 = arith.constant 0 : index
    %c1_198 = arith.constant 1 : index
    %c0_199 = arith.constant 0 : index
    %185 = vector.load %arg5[%c0_197, %c1_198, %c0_199] : memref<1x2x128xf32, #tpu.memory_space<vmem>>, vector<1x1x128xf32>
    %186 = vector.shape_cast %185 : vector<1x1x128xf32> to vector<1x128xf32>
    %187 = vector.shape_cast %181 : vector<1x128xf32> to vector<1x1x128xf32>
    tpu.vector_store %arg5[%c0_197, %c1_198, %c0_199], %187 {strides = array<i32>} : memref<1x2x128xf32, #tpu.memory_space<vmem>>, vector<1x1x128xf32>,
    return
  }
  func.func @transform_0(%arg0: i32) -> (i32, i32, i32, i32) {
    %c0_i32 = arith.constant 0 : i32
    %c0_i32_0 = arith.constant 0 : i32
    %c0_i32_1 = arith.constant 0 : i32
    %c0_i32_2 = arith.constant 0 : i32
    return %arg0, %c0_i32, %c0_i32_0, %c0_i32_1 : i32, i32, i32, i32
  }
  func.func @transform_1(%arg0: i32) -> (i32, i32, i32) {
    %c0_i32 = arith.constant 0 : i32
    %c0_i32_0 = arith.constant 0 : i32
    %c0_i32_1 = arith.constant 0 : i32
    %c0_i32_2 = arith.constant 0 : i32
    return %c0_i32, %c0_i32_0, %c0_i32_1 : i32, i32, i32
  }
  func.func @transform_2(%arg0: i32) -> (i32, i32, i32, i32) {
    %c0_i32 = arith.constant 0 : i32
    %c0_i32_0 = arith.constant 0 : i32
    %c0_i32_1 = arith.constant 0 : i32
    %c0_i32_2 = arith.constant 0 : i32
    %c0_i32_3 = arith.constant 0 : i32
    return %c0_i32, %c0_i32_0, %c0_i32_1, %c0_i32_2 : i32, i32, i32, i32
  }
  func.func @transform_3(%arg0: i32) -> (i32, i32, i32, i32) {
    %c0_i32 = arith.constant 0 : i32
    %c0_i32_0 = arith.constant 0 : i32
    %c0_i32_1 = arith.constant 0 : i32
    %c0_i32_2 = arith.constant 0 : i32
    return %arg0, %c0_i32, %c0_i32_0, %c0_i32_1 : i32, i32, i32, i32
  }
  func.func @transform_4(%arg0: i32) -> (i32, i32, i32) {
    %c0_i32 = arith.constant 0 : i32
    %c0_i32_0 = arith.constant 0 : i32
    %c0_i32_1 = arith.constant 0 : i32
    return %arg0, %c0_i32, %c0_i32_0 : i32, i32, i32
  }
}

</mosaic_0001>

<llo_original>
// kernel: unet_innermost_block.1
$region0: #{unet_innermost_block.1}
  #allocation0 [shape = 'u32[]', space=smem, size = 0x4, offset = 0x4, fixed_abs, tag = 'smem constant byte address 0x4 - core index']
  #allocation1 [shape = 'u32[144,128]{1,0:T(1,128)}', space=vmem, size = 0x12000, scoped, tag = 'internal scratch']
  #allocation2 [shape = 'bf16[10,10,128]{2,1,0:T(8,128)(2,1)}', space=vmem, size = 0xa000, scoped, tag = 'scratch operand']
  %s0 = inlined_call_operand.hbm [shape: bf16[2,9,9,128], index: 0, kind: input, shape index: {}]
  %s1 = inlined_call_operand.hbm [shape: bf16[4,128,128], index: 1, kind: input, shape index: {}]
  %s2 = inlined_call_operand.hbm [shape: bf16[4,4,128,128], index: 2, kind: input, shape index: {}]
  %s3 = inlined_call_operand.hbm [shape: bf16[2,4,64,128], index: 3, kind: output, shape index: {0}]
  %s4 = inlined_call_operand.hbm [shape: f32[2,2,128], index: 4, kind: output, shape index: {1}]
  %5 = xla_tuple %s3, %s4
  %s6 = sld [smem:[#allocation0]]
  $region65: #{unet_innermost_block.1} parent=0
    _
  %s8 = ssub.s32 1, %s6
  %s9 = scalar_select 0, %s8, %s6
  $region1: #{unet_innermost_block.1} parent=0
    #allocation3 [shape = 'u8[73728]{0}', space=vmem, size = 0x12000, scoped, tag = 'input window, operand 0']
    #allocation4 [shape = 's32[2]{0}', space=sflag, size = 0x8, scoped, tag = 'scoped memory for unet_innermost_block.1']
    #allocation5 [shape = 's32[2]{0}', space=sflag, size = 0x8, scoped, tag = 'scoped memory for unet_innermost_block.1']
    #allocation6 [shape = 'u8[131072]{0}', space=vmem, size = 0x20000, scoped, tag = 'input window, operand 1, single buffered']
    #allocation7 [shape = 's32[1]{0}', space=sflag, size = 0x4, scoped, tag = 'scoped memory for unet_innermost_block.1']
    #allocation8 [shape = 'u8[524288]{0}', space=vmem, size = 0x80000, scoped, tag = 'input window, operand 2, single buffered']
    #allocation9 [shape = 'u8[131072]{0}', space=vmem, size = 0x20000, scoped, tag = 'output window, operand 0']
    #allocation10 [shape = 'u8[2048]{0}', space=vmem, size = 0x800, scoped, tag = 'output window, operand 1']
    #allocation11 [shape = 's32[2]{0}', space=sflag, size = 0x8, scoped, tag = 'scoped memory for unet_innermost_block.1']
    %10 = vsyncpa [#allocation4], 0
    %s11 = scalar_lea.sflag [#allocation4], 1
    %12 = vsyncpa %s11, 0
    %13 = vsyncpa [#allocation7], 0
    %14 = vsyncpa [#allocation5], 0
    %s15 = scalar_lea.sflag [#allocation5], 1
    %16 = vsyncpa %s15, 0
    %17 = vsyncpa [#allocation11], 0
    %s18 = scalar_lea.sflag [#allocation11], 1
    %19 = vsyncpa %s18, 0
    loop: start=0, step=1, limit=4
    $region2: #{unet_innermost_block.1} parent=1 // loop_pre_header
      _
    $region3: #{unet_innermost_block.1} parent=1 // loop_header
      %s21 = sphi 0, %s25
      %p22 = scmp.ge.s32.totalorder %s21, 4
      %s31 = sphi 0, %s33
      %s34 = sphi 0, %s31
      %s35 = sphi 0, %s34
      %s51 = sphi 0, %s35
      %s55 = sphi 0, %s55
      %s57 = sphi 0, %s55
      %s58 = sphi 0, %s57
      %s72 = sphi 0, %s58
      %s76 = sphi 0, %s76
      %s78 = sphi 0, %s76
      %s79 = sphi 0, %s78
      %s93 = sphi 0, %s79
      %s99 = sphi 0, %s101
      %s102 = sphi 0, %s99
      %s103 = sphi 0, %s102
      %s119 = sphi 0, %s103
      %s125 = sphi 0, %s127
      %s128 = sphi 0, %s125
      %s129 = sphi 0, %s128
      %s145 = sphi 0, %s129
    $region4: #{unet_innermost_block.1} parent=1 // loop_header_branch
      %24 = sbr.rel (%p22) target = $region8
    $region5: #{unet_innermost_block.1} parent=1 // loop_body
      %s26 = ssub.s32 %s21, 1
      %s27 = ssub.s32 %s21, 2
      %s28 = sadd.s32 %s21, 1
      %s29 = ssub.s32 %s21, %s28
      %p30 = scmp.eq.s32.totalorder %s29, 0
      %s32 = sadd.s32 %s31, 1
      %s33 = scalar_select %p30, %s31, %s32
      %p36 = pneg %p30
      %p37 = scmp.eq.s32.totalorder %s21, 1
      %p38 = por %p36, %p37
      %p39 = scmp.ne.s32.totalorder %s31, %s34
      %p40 = scmp.eq.s32.totalorder %s21, 0
      %p41 = por %p39, %p40
      %p42 = scmp.ne.s32.totalorder %s31, %s34
      %p43 = scmp.eq.s32.totalorder %s26, 1
      %p44 = por %p42, %p43
      %p45 = scmp.ne.s32.totalorder %s34, %s35
      %p46 = scmp.eq.s32.totalorder %s26, 0
      %p47 = por %p45, %p46
      %p48 = scmp.ne.s32.totalorder %s34, %s35
      %p49 = scmp.eq.s32.totalorder %s27, 1
      %p50 = por %p48, %p49
      %p52 = scmp.ne.s32.totalorder %s35, %s51
      %p53 = scmp.eq.s32.totalorder %s27, 0
      %p54 = por %p52, %p53
      %s56 = sadd.s32 %s55, 1
      %p59 = scmp.eq.s32.totalorder %s21, 1
      %p60 = scmp.ne.s32.totalorder %s55, %s57
      %p61 = scmp.eq.s32.totalorder %s21, 0
      %p62 = por %p60, %p61
      %p63 = scmp.ne.s32.totalorder %s55, %s57
      %p64 = scmp.eq.s32.totalorder %s26, 1
      %p65 = por %p63, %p64
      %p66 = scmp.ne.s32.totalorder %s57, %s58
      %p67 = scmp.eq.s32.totalorder %s26, 0
      %p68 = por %p66, %p67
      %p69 = scmp.ne.s32.totalorder %s57, %s58
      %p70 = scmp.eq.s32.totalorder %s27, 1
      %p71 = por %p69, %p70
      %p73 = scmp.ne.s32.totalorder %s58, %s72
      %p74 = scmp.eq.s32.totalorder %s27, 0
      %p75 = por %p73, %p74
      %s77 = sadd.s32 %s76, 1
      %p80 = scmp.eq.s32.totalorder %s21, 1
      %p81 = scmp.ne.s32.totalorder %s76, %s78
      %p82 = scmp.eq.s32.totalorder %s21, 0
      %p83 = por %p81, %p82
      %p84 = scmp.ne.s32.totalorder %s76, %s78
      %p85 = scmp.eq.s32.totalorder %s26, 1
      %p86 = por %p84, %p85
      %p87 = scmp.ne.s32.totalorder %s78, %s79
      %p88 = scmp.eq.s32.totalorder %s26, 0
      %p89 = por %p87, %p88
      %p90 = scmp.ne.s32.totalorder %s78, %s79
      %p91 = scmp.eq.s32.totalorder %s27, 1
      %p92 = por %p90, %p91
      %p94 = scmp.ne.s32.totalorder %s79, %s93
      %p95 = scmp.eq.s32.totalorder %s27, 0
      %p96 = por %p94, %p95
      %s97 = ssub.s32 %s21, %s28
      %p98 = scmp.eq.s32.totalorder %s97, 0
      %s100 = sadd.s32 %s99, 1
      %s101 = scalar_select %p98, %s99, %s100
      %p104 = pneg %p98
      %p105 = scmp.eq.s32.totalorder %s21, 1
      %p106 = por %p104, %p105
      %p107 = scmp.ne.s32.totalorder %s99, %s102
      %p108 = scmp.eq.s32.totalorder %s21, 0
      %p109 = por %p107, %p108
      %p110 = scmp.ne.s32.totalorder %s99, %s102
      %p111 = scmp.eq.s32.totalorder %s26, 1
      %p112 = por %p110, %p111
      %p113 = scmp.ne.s32.totalorder %s102, %s103
      %p114 = scmp.eq.s32.totalorder %s26, 0
      %p115 = por %p113, %p114
      %p116 = scmp.ne.s32.totalorder %s102, %s103
      %p117 = scmp.eq.s32.totalorder %s27, 1
      %p118 = por %p116, %p117
      %p120 = scmp.ne.s32.totalorder %s103, %s119
      %p121 = scmp.eq.s32.totalorder %s27, 0
      %p122 = por %p120, %p121
      %s123 = ssub.s32 %s21, %s28
      %p124 = scmp.eq.s32.totalorder %s123, 0
      %s126 = sadd.s32 %s125, 1
      %s127 = scalar_select %p124, %s125, %s126
      %p130 = pneg %p124
      %p131 = scmp.eq.s32.totalorder %s21, 1
      %p132 = por %p130, %p131
      %p133 = scmp.ne.s32.totalorder %s125, %s128
      %p134 = scmp.eq.s32.totalorder %s21, 0
      %p135 = por %p133, %p134
      %p136 = scmp.ne.s32.totalorder %s125, %s128
      %p137 = scmp.eq.s32.totalorder %s26, 1
      %p138 = por %p136, %p137
      %p139 = scmp.ne.s32.totalorder %s128, %s129
      %p140 = scmp.eq.s32.totalorder %s26, 0
      %p141 = por %p139, %p140
      %p142 = scmp.ne.s32.totalorder %s128, %s129
      %p143 = scmp.eq.s32.totalorder %s27, 1
      %p144 = por %p142, %p143
      %p146 = scmp.ne.s32.totalorder %s129, %s145
      %p147 = scmp.eq.s32.totalorder %s27, 0
      %p148 = por %p146, %p147
      %p149 = scmp.le.s32.totalorder 1, %s21
      %p150 = scmp.lt.s32.totalorder %s21, 3
      %p151 = pnand %p149, %p150
      %p152 = pneg %p151
      // Predicated region
      $region9: #{unet_innermost_block.1} parent=5 // pred_check
        _
      $region10: #{unet_innermost_block.1} parent=5 // pred_check_branch
        %154 = sbr.rel (%p151) target = $region12
      $region11: #{unet_innermost_block.1} parent=5 // pred_region
        %s155 = ssub.s32 %s21, 1
        // Predicated region
        $region13: #{unet_innermost_block.1} parent=11 // pred_check
          %p156 = pneg %p68
        $region14: #{unet_innermost_block.1} parent=11 // pred_check_branch
          %158 = sbr.rel (%p156) target = $region16
        $region15: #{unet_innermost_block.1} parent=11 // pred_region
          %s160 = ssub.s32 4096, 4096
          %161 = vsyncadd [#allocation7], %s160
          %s162 = sshll.u32 [#allocation6], 4
          %s163 = int_to_ptr.vmem [resolvable:$true] %s162
          %168 = dma.hbm_to_vmem [thread:$0]  %s1, 4096, %s163, [#allocation7], 64, 64, 4
        $region16: #{unet_innermost_block.1} parent=11 // pred_fallthru
          _
        // Predicated region
        $region17: #{unet_innermost_block.1} parent=11 // pred_check
          %p169 = pneg %p89
        $region18: #{unet_innermost_block.1} parent=11 // pred_check_branch
          %171 = sbr.rel (%p169) target = $region20
        $region19: #{unet_innermost_block.1} parent=11 // pred_region
          %s173 = ssub.s32 16384, 16384
          %174 = vsyncadd [#allocation7], %s173
          %s175 = sshll.u32 [#allocation8], 4
          %s176 = int_to_ptr.vmem [resolvable:$true] %s175
          %181 = dma.hbm_to_vmem [thread:$0]  %s2, 16384, %s176, [#allocation7], 64, 64, 4
        $region20: #{unet_innermost_block.1} parent=11 // pred_fallthru
          _
      $region12: #{unet_innermost_block.1} parent=5 // pred_fallthru
        _
      %p182 = scmp.lt.s32.totalorder %s21, 2
      // Predicated region
      $region21: #{unet_innermost_block.1} parent=5 // pred_check
        %p183 = pneg %p182
      $region22: #{unet_innermost_block.1} parent=5 // pred_check_branch
        %185 = sbr.rel (%p183) target = $region24
      $region23: #{unet_innermost_block.1} parent=5 // pred_region
        // Predicated region
        $region25: #{unet_innermost_block.1} parent=23 // pred_check
          %p186 = pneg %p41
        $region26: #{unet_innermost_block.1} parent=23 // pred_check_branch
          %188 = sbr.rel (%p186) target = $region28
        $region27: #{unet_innermost_block.1} parent=23 // pred_region
          %s189 = sand.u32 %s31, 1
          %s190 = scalar_lea.sflag [#allocation4], %s189
          %s191 = sand.u32 %s31, 1
          %s192 = smul.addr %s191, 72
          %s193 = scalar_lea.vmem [#allocation3], %s192
          %s195 = ssub.s32 1152, 1152
          %196 = vsyncadd %s190, %s195
          %s197 = smul.addr %s21, 18
          %s198 = smul.addr %s197, 64
          %s199 = scalar_lea.hbm %s0, %s198
          %s200 = sshll.u32 %s193, 4
          %s201 = int_to_ptr.vmem [resolvable:$true] %s200
          %206 = dma.hbm_to_vmem [thread:$0]  %s199, 1152, %s201, %s190, 64, 64, 4
        $region28: #{unet_innermost_block.1} parent=23 // pred_fallthru
          _
      $region24: #{unet_innermost_block.1} parent=5 // pred_fallthru
        _
      %p207 = scmp.le.s32.totalorder 1, %s21
      %p208 = scmp.lt.s32.totalorder %s21, 3
      %p209 = pnand %p207, %p208
      %p210 = pneg %p209
      // Predicated region
      $region29: #{unet_innermost_block.1} parent=5 // pred_check
        _
      $region30: #{unet_innermost_block.1} parent=5 // pred_check_branch
        %212 = sbr.rel (%p209) target = $region32
      $region31: #{unet_innermost_block.1} parent=5 // pred_region
        %s213 = ssub.s32 %s21, 1
        %s214 = sand.u32 %s34, 1
        %s215 = scalar_lea.sflag [#allocation4], %s214
        %s216 = sand.u32 %s34, 1
        %s217 = smul.addr %s216, 72
        %s218 = scalar_lea.vmem [#allocation3], %s217
        // Predicated region
        $region33: #{unet_innermost_block.1} parent=31 // pred_check
          %p219 = pneg %p47
        $region34: #{unet_innermost_block.1} parent=31 // pred_check_branch
          %221 = sbr.rel (%p219) target = $region36
        $region35: #{unet_innermost_block.1} parent=31 // pred_region
          %222 = dma.done %s215, 1152
        $region36: #{unet_innermost_block.1} parent=31 // pred_fallthru
          _
        // Predicated region
        $region37: #{unet_innermost_block.1} parent=31 // pred_check
          %p223 = pneg %p68
        $region38: #{unet_innermost_block.1} parent=31 // pred_check_branch
          %225 = sbr.rel (%p223) target = $region40
        $region39: #{unet_innermost_block.1} parent=31 // pred_region
          %226 = dma.done [#allocation7], 4096
        $region40: #{unet_innermost_block.1} parent=31 // pred_fallthru
          _
        // Predicated region
        $region41: #{unet_innermost_block.1} parent=31 // pred_check
          %p227 = pneg %p89
        $region42: #{unet_innermost_block.1} parent=31 // pred_check_branch
          %229 = sbr.rel (%p227) target = $region44
        $region43: #{unet_innermost_block.1} parent=31 // pred_region
          %230 = dma.done [#allocation7], 16384
        $region44: #{unet_innermost_block.1} parent=31 // pred_fallthru
          _
        %s231 = sand.u32 %s34, 1
        %s232 = scalar_lea.sflag [#allocation4], %s231
        %s233 = sand.u32 %s34, 1
        %s234 = smul.addr %s233, 72
        %s235 = scalar_lea.vmem [#allocation3], %s234
        %p236 = pneg %p47
        %p237 = pneg %p44
        %p238 = pneg %p68
        %p239 = pneg %p65
        %p240 = pneg %p89
        %p241 = pneg %p86
        %p242 = pneg %p115
        %p243 = pneg %p112
        %s244 = sand.u32 %s102, 1
        %s245 = scalar_lea.sflag [#allocation5], %s244
        %s246 = sand.u32 %s102, 1
        %s247 = smul.addr %s246, 128
        %s248 = scalar_lea.vmem [#allocation9], %s247
        %p249 = pneg %p141
        %p250 = pneg %p138
        %s251 = sand.u32 %s128, 1
        %s252 = scalar_lea.sflag [#allocation11], %s251
        %s253 = sand.u32 %s128, 1
        %s254 = smul.addr %s253, 2
        %s255 = scalar_lea.vmem [#allocation10], %s254
        %257 = vst [vmem:[#allocation2] sm:$0xf] 0
        %258 = vst [vmem:[#allocation2 + $0x4] sm:$0x1] 0
        %259 = vst [vmem:[#allocation2 + $0x8] sm:$0xf] 0
        %260 = vst [vmem:[#allocation2 + $0xc] sm:$0x1] 0
        %261 = vst [vmem:[#allocation2 + $0x10] sm:$0xf] 0
        %262 = vst [vmem:[#allocation2 + $0x14] sm:$0x1] 0
        %263 = vst [vmem:[#allocation2 + $0x18] sm:$0xf] 0
        %264 = vst [vmem:[#allocation2 + $0x1c] sm:$0x1] 0
        %265 = vst [vmem:[#allocation2 + $0x20] sm:$0xf] 0
        %266 = vst [vmem:[#allocation2 + $0x24] sm:$0x1] 0
        %267 = vst [vmem:[#allocation2 + $0x28] sm:$0xf] 0
        %268 = vst [vmem:[#allocation2 + $0x2c] sm:$0x1] 0
        %269 = vst [vmem:[#allocation2 + $0x30] sm:$0xf] 0
        %270 = vst [vmem:[#allocation2 + $0x34] sm:$0x1] 0
        %271 = vst [vmem:[#allocation2 + $0x38] sm:$0xf] 0
        %272 = vst [vmem:[#allocation2 + $0x3c] sm:$0x1] 0
        %273 = vst [vmem:[#allocation2 + $0x40] sm:$0xf] 0
        %274 = vst [vmem:[#allocation2 + $0x44] sm:$0x1] 0
        %275 = vst [vmem:[#allocation2 + $0x48] sm:$0xf] 0
        %276 = vst [vmem:[#allocation2 + $0x4c] sm:$0x1] 0
        %v277 = vld [vmem:[%s218] sm:$0xf]
        %v278 = vld [vmem:[%s218 + $0x8] sm:$0xf]
        %v279 = vld [vmem:[%s218 + $0x10] sm:$0xf]
        %v280 = vld [vmem:[%s218 + $0x18] sm:$0xf]
        %v281 = vld [vmem:[%s218 + $0x20] sm:$0xf]
        %v282 = vld [vmem:[%s218 + $0x28] sm:$0xf]
        %v283 = vld [vmem:[%s218 + $0x30] sm:$0xf]
        %v284 = vld [vmem:[%s218 + $0x38] sm:$0xf]
        %v285 = vld [vmem:[#allocation6] sm:$0xf]
        %v286 = vld [vmem:[#allocation6 + $0x4] sm:$0xf]
        %v287 = vld [vmem:[#allocation6 + $0x8] sm:$0xf]
        %v288 = vld [vmem:[#allocation6 + $0xc] sm:$0xf]
        %v289 = vld [vmem:[#allocation6 + $0x10] sm:$0xf]
        %v290 = vld [vmem:[#allocation6 + $0x14] sm:$0xf]
        %v291 = vld [vmem:[#allocation6 + $0x18] sm:$0xf]
        %v292 = vld [vmem:[#allocation6 + $0x1c] sm:$0xf]
        %v293 = vld [vmem:[#allocation6 + $0x20] sm:$0xf]
        %v294 = vld [vmem:[#allocation6 + $0x24] sm:$0xf]
        %v295 = vld [vmem:[#allocation6 + $0x28] sm:$0xf]
        %v296 = vld [vmem:[#allocation6 + $0x2c] sm:$0xf]
        %v297 = vld [vmem:[#allocation6 + $0x30] sm:$0xf]
        %v298 = vld [vmem:[#allocation6 + $0x34] sm:$0xf]
        %v299 = vld [vmem:[#allocation6 + $0x38] sm:$0xf]
        %v300 = vld [vmem:[#allocation6 + $0x3c] sm:$0xf]
        %v301 = vld [vmem:[%s218 + $0x4] sm:$0x1]
        %v302 = vld [vmem:[%s218 + $0xc] sm:$0x1]
        %v303 = vld [vmem:[%s218 + $0x14] sm:$0x1]
        %v304 = vld [vmem:[%s218 + $0x1c] sm:$0x1]
        %v305 = vld [vmem:[%s218 + $0x24] sm:$0x1]
        %v306 = vld [vmem:[%s218 + $0x2c] sm:$0x1]
        %v307 = vld [vmem:[%s218 + $0x34] sm:$0x1]
        %v308 = vld [vmem:[%s218 + $0x3c] sm:$0x1]
        %vm309 = vsmask.f32 3328
        %vm310 = vsmask.f32 7440
        %vm311 = vmor %vm309, %vm310
        %v313 = vshrl.u32 %v277, 16
        %v315 = vrot.slane %v313, 4
        %v316 = vshll.u32 %v277, 16
        %v318 = vrot.slane %v316, 5
        %v319 = vor.u32 %v315, %v318
        %v320 = vrot.slane %v319, 4
        %v322 = vshll.u32 %v301, 16
        %v324 = vrot.slane %v322, 5
        %v325 = vsel %vm311, %v320, %v324
        %v327 = vshrl.u32 %v278, 16
        %v329 = vrot.slane %v327, 4
        %v330 = vshll.u32 %v278, 16
        %v332 = vrot.slane %v330, 5
        %v333 = vor.u32 %v329, %v332
        %v334 = vrot.slane %v333, 4
        %v336 = vshll.u32 %v302, 16
        %v338 = vrot.slane %v336, 5
        %v339 = vsel %vm311, %v334, %v338
        %v341 = vshrl.u32 %v279, 16
        %v343 = vrot.slane %v341, 4
        %v344 = vshll.u32 %v279, 16
        %v346 = vrot.slane %v344, 5
        %v347 = vor.u32 %v343, %v346
        %v348 = vrot.slane %v347, 4
        %v350 = vshll.u32 %v303, 16
        %v352 = vrot.slane %v350, 5
        %v353 = vsel %vm311, %v348, %v352
        %v355 = vshrl.u32 %v280, 16
        %v357 = vrot.slane %v355, 4
        %v358 = vshll.u32 %v280, 16
        %v360 = vrot.slane %v358, 5
        %v361 = vor.u32 %v357, %v360
        %v362 = vrot.slane %v361, 4
        %v364 = vshll.u32 %v304, 16
        %v366 = vrot.slane %v364, 5
        %v367 = vsel %vm311, %v362, %v366
        %v369 = vshrl.u32 %v281, 16
        %v371 = vrot.slane %v369, 4
        %v372 = vshll.u32 %v281, 16
        %v374 = vrot.slane %v372, 5
        %v375 = vor.u32 %v371, %v374
        %v376 = vrot.slane %v375, 4
        %v378 = vshll.u32 %v305, 16
        %v380 = vrot.slane %v378, 5
        %v381 = vsel %vm311, %v376, %v380
        %v383 = vshrl.u32 %v282, 16
        %v385 = vrot.slane %v383, 4
        %v386 = vshll.u32 %v282, 16
        %v388 = vrot.slane %v386, 5
        %v389 = vor.u32 %v385, %v388
        %v390 = vrot.slane %v389, 4
        %v392 = vshll.u32 %v306, 16
        %v394 = vrot.slane %v392, 5
        %v395 = vsel %vm311, %v390, %v394
        %v397 = vshrl.u32 %v283, 16
        %v399 = vrot.slane %v397, 4
        %v400 = vshll.u32 %v283, 16
        %v402 = vrot.slane %v400, 5
        %v403 = vor.u32 %v399, %v402
        %v404 = vrot.slane %v403, 4
        %v406 = vshll.u32 %v307, 16
        %v408 = vrot.slane %v406, 5
        %v409 = vsel %vm311, %v404, %v408
        %v411 = vshrl.u32 %v284, 16
        %v413 = vrot.slane %v411, 4
        %v414 = vshll.u32 %v284, 16
        %v416 = vrot.slane %v414, 5
        %v417 = vor.u32 %v413, %v416
        %v418 = vrot.slane %v417, 4
        %v420 = vshll.u32 %v308, 16
        %v422 = vrot.slane %v420, 5
        %v423 = vsel %vm311, %v418, %v422
        %s424 = scalar_lea.vmem [#allocation6], 64
        %v425 = vld [vmem:[%s424] sm:$0xf]
        %v426 = vld [vmem:[%s424 + $0x4] sm:$0xf]
        %v427 = vld [vmem:[%s424 + $0x8] sm:$0xf]
        %v428 = vld [vmem:[%s424 + $0xc] sm:$0xf]
        %v429 = vld [vmem:[%s424 + $0x10] sm:$0xf]
        %v430 = vld [vmem:[%s424 + $0x14] sm:$0xf]
        %v431 = vld [vmem:[%s424 + $0x18] sm:$0xf]
        %v432 = vld [vmem:[%s424 + $0x1c] sm:$0xf]
        %v433 = vld [vmem:[%s424 + $0x20] sm:$0xf]
        %v434 = vld [vmem:[%s424 + $0x24] sm:$0xf]
        %v435 = vld [vmem:[%s424 + $0x28] sm:$0xf]
        %v436 = vld [vmem:[%s424 + $0x2c] sm:$0xf]
        %v437 = vld [vmem:[%s424 + $0x30] sm:$0xf]
        %v438 = vld [vmem:[%s424 + $0x34] sm:$0xf]
        %v439 = vld [vmem:[%s424 + $0x38] sm:$0xf]
        %v440 = vld [vmem:[%s424 + $0x3c] sm:$0xf]
        %v441 = vunpack.c.l.b16 %v325
        %v442 = vunpack.c.l.b16 %v339
        %v443 = vunpack.c.l.b16 %v353
        %v444 = vunpack.c.l.b16 %v367
        %v445 = vunpack.c.l.b16 %v381
        %v446 = vunpack.c.l.b16 %v395
        %v447 = vunpack.c.l.b16 %v409
        %v448 = vunpack.c.l.b16 %v423
        %v449 = vpack.c.b16 %v442, %v441
        %v450 = vpack.c.b16 %v444, %v443
        %v451 = vpack.c.b16 %v446, %v445
        %v452 = vpack.c.b16 %v448, %v447
        %v473 = vunpack.c.l.b16 %v425
        %v474 = vunpack.c.l.b16 %v426
        %v475 = vunpack.c.l.b16 %v427
        %v476 = vunpack.c.l.b16 %v428
        %v477 = vunpack.c.l.b16 %v429
        %v478 = vunpack.c.l.b16 %v430
        %v479 = vunpack.c.l.b16 %v431
        %v480 = vunpack.c.l.b16 %v432
        %v481 = vunpack.c.l.b16 %v433
        %v482 = vunpack.c.l.b16 %v434
        %v483 = vunpack.c.l.b16 %v435
        %v484 = vunpack.c.l.b16 %v436
        %v485 = vunpack.c.l.b16 %v437
        %v486 = vunpack.c.l.b16 %v438
        %v487 = vunpack.c.l.b16 %v439
        %v488 = vunpack.c.l.b16 %v440
        %v489 = vpack.c.b16 %v474, %v473
        %v490 = vpack.c.b16 %v476, %v475
        %v491 = vpack.c.b16 %v478, %v477
        %v492 = vpack.c.b16 %v480, %v479
        %v493 = vpack.c.b16 %v482, %v481
        %v494 = vpack.c.b16 %v484, %v483
        %v495 = vpack.c.b16 %v486, %v485
        %v496 = vpack.c.b16 %v488, %v487
        %505 = vmatprep.subr.bf16.mxu0 0
        %506 = vmatpush1.bf16.msra.mxu0 %v489
        %507 = vmatprep.subr.bf16.mxu0 0
        %508 = vmatpush1.bf16.msra.mxu0 %v490
        %509 = vmatprep.subr.bf16.mxu0 0
        %510 = vmatpush1.bf16.msra.mxu0 %v491
        %511 = vmatprep.subr.bf16.mxu0 0
        %512 = vmatpush1.bf16.msra.mxu0 %v492
        %513 = vmatprep.subr.bf16.mxu0 0
        %514 = vmatpush1.bf16.msra.mxu0 %v493
        %515 = vmatprep.subr.bf16.mxu0 0
        %516 = vmatpush1.bf16.msra.mxu0 %v494
        %517 = vmatprep.subr.bf16.mxu0 0
        %518 = vmatpush1.bf16.msra.mxu0 %v495
        %519 = vmatprep.subr.bf16.mxu0 0
        %520 = vmatpush1.bf16.msra.mxu0 %v496
        %521 = vmatprep.subr.bf16.mxu0 0
        %522 = vmatpush1.bf16.msra.mxu0 0
        %523 = vmatprep.subr.bf16.mxu0 0
        %524 = vmatpush1.bf16.msra.mxu0 0
        %525 = vmatprep.subr.bf16.mxu0 0
        %526 = vmatpush1.bf16.msra.mxu0 0
        %527 = vmatprep.subr.bf16.mxu0 0
        %528 = vmatpush1.bf16.msra.mxu0 0
        %529 = vmatprep.subr.bf16.mxu0 0
        %530 = vmatpush1.bf16.msra.mxu0 0
        %531 = vmatprep.subr.bf16.mxu0 0
        %532 = vmatpush1.bf16.msra.mxu0 0
        %533 = vmatprep.subr.bf16.mxu0 0
        %534 = vmatpush1.bf16.msra.mxu0 0
        %535 = vmatprep.subr.bf16.mxu0 0
        %536 = vmatpush1.bf16.msra.mxu0 0
        %537 = vmatprep.mubr.bf16.mxu0 0
        %538 = vmatmul.mubr.bf16.gmra.mrb[0].mxu0 %v449
        %v539 = vpop.f32.mrb[0].mxu0
        %v540 = vadd.f32 0.0, %v539
        %v541 = vpop.f32.mrb[0].mxu0
        %v542 = vpop.f32.mrb[0].mxu0
        %v543 = vadd.f32 0.0, %v542
        %v544 = vpop.f32.mrb[0].mxu0
        %545 = vmatprep.mubr.bf16.mxu0 0
        %546 = vmatmul.mubr.bf16.gmra.mrb[0].mxu0 %v450
        %v547 = vpop.f32.mrb[0].mxu0
        %v548 = vadd.f32 0.0, %v547
        %v549 = vpop.f32.mrb[0].mxu0
        %v550 = vpop.f32.mrb[0].mxu0
        %v551 = vadd.f32 0.0, %v550
        %v552 = vpop.f32.mrb[0].mxu0
        %553 = vmatprep.mubr.bf16.mxu0 0
        %554 = vmatmul.mubr.bf16.gmra.mrb[0].mxu0 %v451
        %v555 = vpop.f32.mrb[0].mxu0
        %v556 = vadd.f32 0.0, %v555
        %v557 = vpop.f32.mrb[0].mxu0
        %v558 = vpop.f32.mrb[0].mxu0
        %v559 = vadd.f32 0.0, %v558
        %v560 = vpop.f32.mrb[0].mxu0
        %561 = vmatprep.mubr.bf16.mxu0 0
        %562 = vmatmul.mubr.bf16.gmra.mrb[0].mxu0 %v452
        %v563 = vpop.f32.mrb[0].mxu0
        %v564 = vadd.f32 0.0, %v563
        %v565 = vpop.f32.mrb[0].mxu0
        %v566 = vpop.f32.mrb[0].mxu0
        %v567 = vadd.f32 0.0, %v566
        %v568 = vpop.f32.mrb[0].mxu0
        %569 = vdwg.mxu0
        %v578 = vunpack.c.l.b16 %v277
        %v579 = vunpack.c.l.b16 %v278
        %v580 = vunpack.c.l.b16 %v279
        %v581 = vunpack.c.l.b16 %v280
        %v582 = vunpack.c.l.b16 %v281
        %v583 = vunpack.c.l.b16 %v282
        %v584 = vunpack.c.l.b16 %v283
        %v585 = vunpack.c.l.b16 %v284
        %v586 = vpack.c.b16 %v579, %v578
        %v587 = vpack.c.b16 %v581, %v580
        %v588 = vpack.c.b16 %v583, %v582
        %v589 = vpack.c.b16 %v585, %v584
        %v610 = vunpack.c.l.b16 %v285
        %v611 = vunpack.c.l.b16 %v286
        %v612 = vunpack.c.l.b16 %v287
        %v613 = vunpack.c.l.b16 %v288
        %v614 = vunpack.c.l.b16 %v289
        %v615 = vunpack.c.l.b16 %v290
        %v616 = vunpack.c.l.b16 %v291
        %v617 = vunpack.c.l.b16 %v292
        %v618 = vunpack.c.l.b16 %v293
        %v619 = vunpack.c.l.b16 %v294
        %v620 = vunpack.c.l.b16 %v295
        %v621 = vunpack.c.l.b16 %v296
        %v622 = vunpack.c.l.b16 %v297
        %v623 = vunpack.c.l.b16 %v298
        %v624 = vunpack.c.l.b16 %v299
        %v625 = vunpack.c.l.b16 %v300
        %v626 = vpack.c.b16 %v611, %v610
        %v627 = vpack.c.b16 %v613, %v612
        %v628 = vpack.c.b16 %v615, %v614
        %v629 = vpack.c.b16 %v617, %v616
        %v630 = vpack.c.b16 %v619, %v618
        %v631 = vpack.c.b16 %v621, %v620
        %v632 = vpack.c.b16 %v623, %v622
        %v633 = vpack.c.b16 %v625, %v624
        %642 = vmatprep.subr.bf16.mxu0 0
        %643 = vmatpush1.bf16.msra.mxu0 %v626
        %644 = vmatprep.subr.bf16.mxu0 0
        %645 = vmatpush1.bf16.msra.mxu0 %v627
        %646 = vmatprep.subr.bf16.mxu0 0
        %647 = vmatpush1.bf16.msra.mxu0 %v628
        %648 = vmatprep.subr.bf16.mxu0 0
        %649 = vmatpush1.bf16.msra.mxu0 %v629
        %650 = vmatprep.subr.bf16.mxu0 0
        %651 = vmatpush1.bf16.msra.mxu0 %v630
        %652 = vmatprep.subr.bf16.mxu0 0
        %653 = vmatpush1.bf16.msra.mxu0 %v631
        %654 = vmatprep.subr.bf16.mxu0 0
        %655 = vmatpush1.bf16.msra.mxu0 %v632
        %656 = vmatprep.subr.bf16.mxu0 0
        %657 = vmatpush1.bf16.msra.mxu0 %v633
        %658 = vmatprep.subr.bf16.mxu0 0
        %659 = vmatpush1.bf16.msra.mxu0 0
        %660 = vmatprep.subr.bf16.mxu0 0
        %661 = vmatpush1.bf16.msra.mxu0 0
        %662 = vmatprep.subr.bf16.mxu0 0
        %663 = vmatpush1.bf16.msra.mxu0 0
        %664 = vmatprep.subr.bf16.mxu0 0
        %665 = vmatpush1.bf16.msra.mxu0 0
        %666 = vmatprep.subr.bf16.mxu0 0
        %667 = vmatpush1.bf16.msra.mxu0 0
        %668 = vmatprep.subr.bf16.mxu0 0
        %669 = vmatpush1.bf16.msra.mxu0 0
        %670 = vmatprep.subr.bf16.mxu0 0
        %671 = vmatpush1.bf16.msra.mxu0 0
        %672 = vmatprep.subr.bf16.mxu0 0
        %673 = vmatpush1.bf16.msra.mxu0 0
        %674 = vmatprep.mubr.bf16.mxu0 0
        %675 = vmatmul.mubr.bf16.gmra.mrb[0].mxu0 %v586
        %v676 = vpop.f32.mrb[0].mxu0
        %v677 = vadd.f32 %v540, %v676
        %v678 = vpop.f32.mrb[0].mxu0
        %v679 = vpop.f32.mrb[0].mxu0
        %v680 = vadd.f32 %v543, %v679
        %v681 = vpop.f32.mrb[0].mxu0
        %682 = vmatprep.mubr.bf16.mxu0 0
        %683 = vmatmul.mubr.bf16.gmra.mrb[0].mxu0 %v587
        %v684 = vpop.f32.mrb[0].mxu0
        %v685 = vadd.f32 %v548, %v684
        %v686 = vpop.f32.mrb[0].mxu0
        %v687 = vpop.f32.mrb[0].mxu0
        %v688 = vadd.f32 %v551, %v687
        %v689 = vpop.f32.mrb[0].mxu0
        %690 = vmatprep.mubr.bf16.mxu0 0
        %691 = vmatmul.mubr.bf16.gmra.mrb[0].mxu0 %v588
        %v692 = vpop.f32.mrb[0].mxu0
        %v693 = vadd.f32 %v556, %v692
        %v694 = vpop.f32.mrb[0].mxu0
        %v695 = vpop.f32.mrb[0].mxu0
        %v696 = vadd.f32 %v559, %v695
        %v697 = vpop.f32.mrb[0].mxu0
        %698 = vmatprep.mubr.bf16.mxu0 0
        %699 = vmatmul.mubr.bf16.gmra.mrb[0].mxu0 %v589
        %v700 = vpop.f32.mrb[0].mxu0
        %v701 = vadd.f32 %v564, %v700
        %v702 = vpop.f32.mrb[0].mxu0
        %v703 = vpop.f32.mrb[0].mxu0
        %v704 = vadd.f32 %v567, %v703
        %v705 = vpop.f32.mrb[0].mxu0
        %706 = vdwg.mxu0
        %s707 = scalar_lea.vmem %s218, 8 [#allocation3]
        %v708 = vld [vmem:[%s707] sm:$0xf]
        %v709 = vld [vmem:[%s707 + $0x8] sm:$0xf]
        %v710 = vld [vmem:[%s707 + $0x10] sm:$0xf]
        %v711 = vld [vmem:[%s707 + $0x18] sm:$0xf]
        %v712 = vld [vmem:[%s707 + $0x20] sm:$0xf]
        %v713 = vld [vmem:[%s707 + $0x28] sm:$0xf]
        %v714 = vld [vmem:[%s707 + $0x30] sm:$0xf]
        %v715 = vld [vmem:[%s707 + $0x38] sm:$0xf]
        %s716 = scalar_lea.vmem [#allocation6], 128
        %v717 = vld [vmem:[%s716] sm:$0xf]
        %v718 = vld [vmem:[%s716 + $0x4] sm:$0xf]
        %v719 = vld [vmem:[%s716 + $0x8] sm:$0xf]
        %v720 = vld [vmem:[%s716 + $0xc] sm:$0xf]
        %v721 = vld [vmem:[%s716 + $0x10] sm:$0xf]
        %v722 = vld [vmem:[%s716 + $0x14] sm:$0xf]
        %v723 = vld [vmem:[%s716 + $0x18] sm:$0xf]
        %v724 = vld [vmem:[%s716 + $0x1c] sm:$0xf]
        %v725 = vld [vmem:[%s716 + $0x20] sm:$0xf]
        %v726 = vld [vmem:[%s716 + $0x24] sm:$0xf]
        %v727 = vld [vmem:[%s716 + $0x28] sm:$0xf]
        %v728 = vld [vmem:[%s716 + $0x2c] sm:$0xf]
        %v729 = vld [vmem:[%s716 + $0x30] sm:$0xf]
        %v730 = vld [vmem:[%s716 + $0x34] sm:$0xf]
        %v731 = vld [vmem:[%s716 + $0x38] sm:$0xf]
        %v732 = vld [vmem:[%s716 + $0x3c] sm:$0xf]
        %v741 = vunpack.c.l.b16 %v708
        %v742 = vunpack.c.l.b16 %v709
        %v743 = vunpack.c.l.b16 %v710
        %v744 = vunpack.c.l.b16 %v711
        %v745 = vunpack.c.l.b16 %v712
        %v746 = vunpack.c.l.b16 %v713
        %v747 = vunpack.c.l.b16 %v714
        %v748 = vunpack.c.l.b16 %v715
        %v749 = vpack.c.b16 %v742, %v741
        %v750 = vpack.c.b16 %v744, %v743
        %v751 = vpack.c.b16 %v746, %v745
        %v752 = vpack.c.b16 %v748, %v747
        %v773 = vunpack.c.l.b16 %v717
        %v774 = vunpack.c.l.b16 %v718
        %v775 = vunpack.c.l.b16 %v719
        %v776 = vunpack.c.l.b16 %v720
        %v777 = vunpack.c.l.b16 %v721
        %v778 = vunpack.c.l.b16 %v722
        %v779 = vunpack.c.l.b16 %v723
        %v780 = vunpack.c.l.b16 %v724
        %v781 = vunpack.c.l.b16 %v725
        %v782 = vunpack.c.l.b16 %v726
        %v783 = vunpack.c.l.b16 %v727
        %v784 = vunpack.c.l.b16 %v728
        %v785 = vunpack.c.l.b16 %v729
        %v786 = vunpack.c.l.b16 %v730
        %v787 = vunpack.c.l.b16 %v731
        %v788 = vunpack.c.l.b16 %v732
        %v789 = vpack.c.b16 %v774, %v773
        %v790 = vpack.c.b16 %v776, %v775
        %v791 = vpack.c.b16 %v778, %v777
        %v792 = vpack.c.b16 %v780, %v779
        %v793 = vpack.c.b16 %v782, %v781
        %v794 = vpack.c.b16 %v784, %v783
        %v795 = vpack.c.b16 %v786, %v785
        %v796 = vpack.c.b16 %v788, %v787
        %805 = vmatprep.subr.bf16.mxu0 0
        %806 = vmatpush1.bf16.msra.mxu0 %v789
        %807 = vmatprep.subr.bf16.mxu0 0
        %808 = vmatpush1.bf16.msra.mxu0 %v790
        %809 = vmatprep.subr.bf16.mxu0 0
        %810 = vmatpush1.bf16.msra.mxu0 %v791
        %811 = vmatprep.subr.bf16.mxu0 0
        %812 = vmatpush1.bf16.msra.mxu0 %v792
        %813 = vmatprep.subr.bf16.mxu0 0
        %814 = vmatpush1.bf16.msra.mxu0 %v793
        %815 = vmatprep.subr.bf16.mxu0 0
        %816 = vmatpush1.bf16.msra.mxu0 %v794
        %817 = vmatprep.subr.bf16.mxu0 0
        %818 = vmatpush1.bf16.msra.mxu0 %v795
        %819 = vmatprep.subr.bf16.mxu0 0
        %820 = vmatpush1.bf16.msra.mxu0 %v796
        %821 = vmatprep.subr.bf16.mxu0 0
        %822 = vmatpush1.bf16.msra.mxu0 0
        %823 = vmatprep.subr.bf16.mxu0 0
        %824 = vmatpush1.bf16.msra.mxu0 0
        %825 = vmatprep.subr.bf16.mxu0 0
        %826 = vmatpush1.bf16.msra.mxu0 0
        %827 = vmatprep.subr.bf16.mxu0 0
        %828 = vmatpush1.bf16.msra.mxu0 0
        %829 = vmatprep.subr.bf16.mxu0 0
        %830 = vmatpush1.bf16.msra.mxu0 0
        %831 = vmatprep.subr.bf16.mxu0 0
        %832 = vmatpush1.bf16.msra.mxu0 0
        %833 = vmatprep.subr.bf16.mxu0 0
        %834 = vmatpush1.bf16.msra.mxu0 0
        %835 = vmatprep.subr.bf16.mxu0 0
        %836 = vmatpush1.bf16.msra.mxu0 0
        %837 = vmatprep.mubr.bf16.mxu0 0
        %838 = vmatmul.mubr.bf16.gmra.mrb[0].mxu0 %v749
        %v839 = vpop.f32.mrb[0].mxu0
        %v840 = vadd.f32 0.0, %v839
        %v841 = vpop.f32.mrb[0].mxu0
        %v842 = vpop.f32.mrb[0].mxu0
        %v843 = vadd.f32 0.0, %v842
        %v844 = vpop.f32.mrb[0].mxu0
        %845 = vmatprep.mubr.bf16.mxu0 0
        %846 = vmatmul.mubr.bf16.gmra.mrb[0].mxu0 %v750
        %v847 = vpop.f32.mrb[0].mxu0
        %v848 = vadd.f32 0.0, %v847
        %v849 = vpop.f32.mrb[0].mxu0
        %v850 = vpop.f32.mrb[0].mxu0
        %v851 = vadd.f32 0.0, %v850
        %v852 = vpop.f32.mrb[0].mxu0
        %853 = vmatprep.mubr.bf16.mxu0 0
        %854 = vmatmul.mubr.bf16.gmra.mrb[0].mxu0 %v751
        %v855 = vpop.f32.mrb[0].mxu0
        %v856 = vadd.f32 0.0, %v855
        %v857 = vpop.f32.mrb[0].mxu0
        %v858 = vpop.f32.mrb[0].mxu0
        %v859 = vadd.f32 0.0, %v858
        %v860 = vpop.f32.mrb[0].mxu0
        %861 = vmatprep.mubr.bf16.mxu0 0
        %862 = vmatmul.mubr.bf16.gmra.mrb[0].mxu0 %v752
        %v863 = vpop.f32.mrb[0].mxu0
        %v864 = vadd.f32 0.0, %v863
        %v865 = vpop.f32.mrb[0].mxu0
        %v866 = vpop.f32.mrb[0].mxu0
        %v867 = vadd.f32 0.0, %v866
        %v868 = vpop.f32.mrb[0].mxu0
        %869 = vdwg.mxu0
        %v870 = vadd.f32 %v677, %v840
        %v871 = vadd.f32 %v680, %v843
        %v872 = vadd.f32 %v685, %v848
        %v873 = vadd.f32 %v688, %v851
        %v874 = vadd.f32 %v693, %v856
        %v875 = vadd.f32 %v696, %v859
        %v876 = vadd.f32 %v701, %v864
        %v877 = vadd.f32 %v704, %v867
        %v878 = vld [vmem:[%s707] sm:$0xf]
        %v879 = vld [vmem:[%s707 + $0x4] sm:$0x1]
        %v880 = vld [vmem:[%s707 + $0x8] sm:$0xf]
        %v881 = vld [vmem:[%s707 + $0xc] sm:$0x1]
        %v882 = vld [vmem:[%s707 + $0x10] sm:$0xf]
        %v883 = vld [vmem:[%s707 + $0x14] sm:$0x1]
        %v884 = vld [vmem:[%s707 + $0x18] sm:$0xf]
        %v885 = vld [vmem:[%s707 + $0x1c] sm:$0x1]
        %v886 = vld [vmem:[%s707 + $0x20] sm:$0xf]
        %v887 = vld [vmem:[%s707 + $0x24] sm:$0x1]
        %v888 = vld [vmem:[%s707 + $0x28] sm:$0xf]
        %v889 = vld [vmem:[%s707 + $0x2c] sm:$0x1]
        %v890 = vld [vmem:[%s707 + $0x30] sm:$0xf]
        %v891 = vld [vmem:[%s707 + $0x34] sm:$0x1]
        %v892 = vld [vmem:[%s707 + $0x38] sm:$0xf]
        %v893 = vld [vmem:[%s707 + $0x3c] sm:$0x1]
        %v895 = vshrl.u32 %v878, 16
        %v897 = vrot.slane %v895, 4
        %v898 = vshll.u32 %v878, 16
        %v900 = vrot.slane %v898, 5
        %v901 = vor.u32 %v897, %v900
        %v902 = vrot.slane %v901, 4
        %v904 = vshll.u32 %v879, 16
        %v906 = vrot.slane %v904, 5
        %v907 = vsel %vm311, %v902, %v906
        %v909 = vshrl.u32 %v880, 16
        %v911 = vrot.slane %v909, 4
        %v912 = vshll.u32 %v880, 16
        %v914 = vrot.slane %v912, 5
        %v915 = vor.u32 %v911, %v914
        %v916 = vrot.slane %v915, 4
        %v918 = vshll.u32 %v881, 16
        %v920 = vrot.slane %v918, 5
        %v921 = vsel %vm311, %v916, %v920
        %v923 = vshrl.u32 %v882, 16
        %v925 = vrot.slane %v923, 4
        %v926 = vshll.u32 %v882, 16
        %v928 = vrot.slane %v926, 5
        %v929 = vor.u32 %v925, %v928
        %v930 = vrot.slane %v929, 4
        %v932 = vshll.u32 %v883, 16
        %v934 = vrot.slane %v932, 5
        %v935 = vsel %vm311, %v930, %v934
        %v937 = vshrl.u32 %v884, 16
        %v939 = vrot.slane %v937, 4
        %v940 = vshll.u32 %v884, 16
        %v942 = vrot.slane %v940, 5
        %v943 = vor.u32 %v939, %v942
        %v944 = vrot.slane %v943, 4
        %v946 = vshll.u32 %v885, 16
        %v948 = vrot.slane %v946, 5
        %v949 = vsel %vm311, %v944, %v948
        %v951 = vshrl.u32 %v886, 16
        %v953 = vrot.slane %v951, 4
        %v954 = vshll.u32 %v886, 16
        %v956 = vrot.slane %v954, 5
        %v957 = vor.u32 %v953, %v956
        %v958 = vrot.slane %v957, 4
        %v960 = vshll.u32 %v887, 16
        %v962 = vrot.slane %v960, 5
        %v963 = vsel %vm311, %v958, %v962
        %v965 = vshrl.u32 %v888, 16
        %v967 = vrot.slane %v965, 4
        %v968 = vshll.u32 %v888, 16
        %v970 = vrot.slane %v968, 5
        %v971 = vor.u32 %v967, %v970
        %v972 = vrot.slane %v971, 4
        %v974 = vshll.u32 %v889, 16
        %v976 = vrot.slane %v974, 5
        %v977 = vsel %vm311, %v972, %v976
        %v979 = vshrl.u32 %v890, 16
        %v981 = vrot.slane %v979, 4
        %v982 = vshll.u32 %v890, 16
        %v984 = vrot.slane %v982, 5
        %v985 = vor.u32 %v981, %v984
        %v986 = vrot.slane %v985, 4
        %v988 = vshll.u32 %v891, 16
        %v990 = vrot.slane %v988, 5
        %v991 = vsel %vm311, %v986, %v990
        %v993 = vshrl.u32 %v892, 16
        %v995 = vrot.slane %v993, 4
        %v996 = vshll.u32 %v892, 16
        %v998 = vrot.slane %v996, 5
        %v999 = vor.u32 %v995, %v998
        %v1000 = vrot.slane %v999, 4
        %v1002 = vshll.u32 %v893, 16
        %v1004 = vrot.slane %v1002, 5
        %v1005 = vsel %vm311, %v1000, %v1004
        %s1006 = scalar_lea.vmem [#allocation6], 192
        %v1007 = vld [vmem:[%s1006] sm:$0xf]
        %v1008 = vld [vmem:[%s1006 + $0x4] sm:$0xf]
        %v1009 = vld [vmem:[%s1006 + $0x8] sm:$0xf]
        %v1010 = vld [vmem:[%s1006 + $0xc] sm:$0xf]
        %v1011 = vld [vmem:[%s1006 + $0x10] sm:$0xf]
        %v1012 = vld [vmem:[%s1006 + $0x14] sm:$0xf]
        %v1013 = vld [vmem:[%s1006 + $0x18] sm:$0xf]
        %v1014 = vld [vmem:[%s1006 + $0x1c] sm:$0xf]
        %v1015 = vld [vmem:[%s1006 + $0x20] sm:$0xf]
        %v1016 = vld [vmem:[%s1006 + $0x24] sm:$0xf]
        %v1017 = vld [vmem:[%s1006 + $0x28] sm:$0xf]
        %v1018 = vld [vmem:[%s1006 + $0x2c] sm:$0xf]
        %v1019 = vld [vmem:[%s1006 + $0x30] sm:$0xf]
        %v1020 = vld [vmem:[%s1006 + $0x34] sm:$0xf]
        %v1021 = vld [vmem:[%s1006 + $0x38] sm:$0xf]
        %v1022 = vld [vmem:[%s1006 + $0x3c] sm:$0xf]
        %v1023 = vunpack.c.l.b16 %v907
        %v1024 = vunpack.c.l.b16 %v921
        %v1025 = vunpack.c.l.b16 %v935
        %v1026 = vunpack.c.l.b16 %v949
        %v1027 = vunpack.c.l.b16 %v963
        %v1028 = vunpack.c.l.b16 %v977
        %v1029 = vunpack.c.l.b16 %v991
        %v1030 = vunpack.c.l.b16 %v1005
        %v1031 = vpack.c.b16 %v1024, %v1023
        %v1032 = vpack.c.b16 %v1026, %v1025
        %v1033 = vpack.c.b16 %v1028, %v1027
        %v1034 = vpack.c.b16 %v1030, %v1029
        %v1055 = vunpack.c.l.b16 %v1007
        %v1056 = vunpack.c.l.b16 %v1008
        %v1057 = vunpack.c.l.b16 %v1009
        %v1058 = vunpack.c.l.b16 %v1010
        %v1059 = vunpack.c.l.b16 %v1011
        %v1060 = vunpack.c.l.b16 %v1012
        %v1061 = vunpack.c.l.b16 %v1013
        %v1062 = vunpack.c.l.b16 %v1014
        %v1063 = vunpack.c.l.b16 %v1015
        %v1064 = vunpack.c.l.b16 %v1016
        %v1065 = vunpack.c.l.b16 %v1017
        %v1066 = vunpack.c.l.b16 %v1018
        %v1067 = vunpack.c.l.b16 %v1019
        %v1068 = vunpack.c.l.b16 %v1020
        %v1069 = vunpack.c.l.b16 %v1021
        %v1070 = vunpack.c.l.b16 %v1022
        %v1071 = vpack.c.b16 %v1056, %v1055
        %v1072 = vpack.c.b16 %v1058, %v1057
        %v1073 = vpack.c.b16 %v1060, %v1059
        %v1074 = vpack.c.b16 %v1062, %v1061
        %v1075 = vpack.c.b16 %v1064, %v1063
        %v1076 = vpack.c.b16 %v1066, %v1065
        %v1077 = vpack.c.b16 %v1068, %v1067
        %v1078 = vpack.c.b16 %v1070, %v1069
        %1087 = vmatprep.subr.bf16.mxu0 0
        %1088 = vmatpush1.bf16.msra.mxu0 %v1071
        %1089 = vmatprep.subr.bf16.mxu0 0
        %1090 = vmatpush1.bf16.msra.mxu0 %v1072
        %1091 = vmatprep.subr.bf16.mxu0 0
        %1092 = vmatpush1.bf16.msra.mxu0 %v1073
        %1093 = vmatprep.subr.bf16.mxu0 0
        %1094 = vmatpush1.bf16.msra.mxu0 %v1074
        %1095 = vmatprep.subr.bf16.mxu0 0
        %1096 = vmatpush1.bf16.msra.mxu0 %v1075
        %1097 = vmatprep.subr.bf16.mxu0 0
        %1098 = vmatpush1.bf16.msra.mxu0 %v1076
        %1099 = vmatprep.subr.bf16.mxu0 0
        %1100 = vmatpush1.bf16.msra.mxu0 %v1077
        %1101 = vmatprep.subr.bf16.mxu0 0
        %1102 = vmatpush1.bf16.msra.mxu0 %v1078
        %1103 = vmatprep.subr.bf16.mxu0 0
        %1104 = vmatpush1.bf16.msra.mxu0 0
        %1105 = vmatprep.subr.bf16.mxu0 0
        %1106 = vmatpush1.bf16.msra.mxu0 0
        %1107 = vmatprep.subr.bf16.mxu0 0
        %1108 = vmatpush1.bf16.msra.mxu0 0
        %1109 = vmatprep.subr.bf16.mxu0 0
        %1110 = vmatpush1.bf16.msra.mxu0 0
        %1111 = vmatprep.subr.bf16.mxu0 0
        %1112 = vmatpush1.bf16.msra.mxu0 0
        %1113 = vmatprep.subr.bf16.mxu0 0
        %1114 = vmatpush1.bf16.msra.mxu0 0
        %1115 = vmatprep.subr.bf16.mxu0 0
        %1116 = vmatpush1.bf16.msra.mxu0 0
        %1117 = vmatprep.subr.bf16.mxu0 0
        %1118 = vmatpush1.bf16.msra.mxu0 0
        %1119 = vmatprep.mubr.bf16.mxu0 0
        %1120 = vmatmul.mubr.bf16.gmra.mrb[0].mxu0 %v1031
        %v1121 = vpop.f32.mrb[0].mxu0
        %v1122 = vadd.f32 0.0, %v1121
        %v1123 = vpop.f32.mrb[0].mxu0
        %v1124 = vpop.f32.mrb[0].mxu0
        %v1125 = vadd.f32 0.0, %v1124
        %v1126 = vpop.f32.mrb[0].mxu0
        %1127 = vmatprep.mubr.bf16.mxu0 0
        %1128 = vmatmul.mubr.bf16.gmra.mrb[0].mxu0 %v1032
        %v1129 = vpop.f32.mrb[0].mxu0
        %v1130 = vadd.f32 0.0, %v1129
        %v1131 = vpop.f32.mrb[0].mxu0
        %v1132 = vpop.f32.mrb[0].mxu0
        %v1133 = vadd.f32 0.0, %v1132
        %v1134 = vpop.f32.mrb[0].mxu0
        %1135 = vmatprep.mubr.bf16.mxu0 0
        %1136 = vmatmul.mubr.bf16.gmra.mrb[0].mxu0 %v1033
        %v1137 = vpop.f32.mrb[0].mxu0
        %v1138 = vadd.f32 0.0, %v1137
        %v1139 = vpop.f32.mrb[0].mxu0
        %v1140 = vpop.f32.mrb[0].mxu0
        %v1141 = vadd.f32 0.0, %v1140
        %v1142 = vpop.f32.mrb[0].mxu0
        %1143 = vmatprep.mubr.bf16.mxu0 0
        %1144 = vmatmul.mubr.bf16.gmra.mrb[0].mxu0 %v1034
        %v1145 = vpop.f32.mrb[0].mxu0
        %v1146 = vadd.f32 0.0, %v1145
        %v1147 = vpop.f32.mrb[0].mxu0
        %v1148 = vpop.f32.mrb[0].mxu0
        %v1149 = vadd.f32 0.0, %v1148
        %v1150 = vpop.f32.mrb[0].mxu0
        %1151 = vdwg.mxu0
        %v1152 = vadd.f32 %v870, %v1122
        %v1153 = vadd.f32 %v871, %v1125
        %v1154 = vadd.f32 %v872, %v1130
        %v1155 = vadd.f32 %v873, %v1133
        %v1156 = vadd.f32 %v874, %v1138
        %v1157 = vadd.f32 %v875, %v1141
        %v1158 = vadd.f32 %v876, %v1146
        %v1159 = vadd.f32 %v877, %v1149
        %v1160 = vmax.f32 %v1152, 0.0
        %v1161 = vmax.f32 %v1153, 0.0
        %v1162 = vmax.f32 %v1154, 0.0
        %v1163 = vmax.f32 %v1155, 0.0
        %v1164 = vmax.f32 %v1156, 0.0
        %v1165 = vmax.f32 %v1157, 0.0
        %v1166 = vmax.f32 %v1158, 0.0
        %v1167 = vmax.f32 %v1159, 0.0
        %v1168 = vpack.c.bf16 %v1161, %v1160
        %v1169 = vpack.c.bf16 %v1163, %v1162
        %v1170 = vpack.c.bf16 %v1165, %v1164
        %v1171 = vpack.c.bf16 %v1167, %v1166
        %v1176 = vunpack.c.l.b16 %v1168
        %v1177 = vunpack.c.h.b16 %v1168
        %v1178 = vunpack.c.l.b16 %v1169
        %v1179 = vunpack.c.h.b16 %v1169
        %v1180 = vunpack.c.l.b16 %v1170
        %v1181 = vunpack.c.h.b16 %v1170
        %v1182 = vunpack.c.l.b16 %v1171
        %v1183 = vunpack.c.h.b16 %v1171
        %v1184 = vpack.c.b16 %v1176, %v1176
        %v1185 = vpack.c.b16 %v1177, %v1177
        %v1186 = vpack.c.b16 %v1178, %v1178
        %v1187 = vpack.c.b16 %v1179, %v1179
        %v1188 = vpack.c.b16 %v1180, %v1180
        %v1189 = vpack.c.b16 %v1181, %v1181
        %v1190 = vpack.c.b16 %v1182, %v1182
        %v1191 = vpack.c.b16 %v1183, %v1183
        %v1193 = vshrl.u32 %v1184, 16
        %v1195 = vrot.slane %v1193, 7
        %v1196 = vshll.u32 %v1184, 16
        %v1198 = vor.u32 %v1195, %v1196
        %v1199 = vrot.slane %v1195, 4
        %v1201 = vshrl.u32 %v1185, 16
        %v1203 = vrot.slane %v1201, 7
        %v1204 = vshll.u32 %v1185, 16
        %v1206 = vor.u32 %v1203, %v1204
        %v1207 = vrot.slane %v1203, 4
        %v1209 = vshrl.u32 %v1186, 16
        %v1211 = vrot.slane %v1209, 7
        %v1212 = vshll.u32 %v1186, 16
        %v1214 = vor.u32 %v1211, %v1212
        %v1215 = vrot.slane %v1211, 4
        %v1217 = vshrl.u32 %v1187, 16
        %v1219 = vrot.slane %v1217, 7
        %v1220 = vshll.u32 %v1187, 16
        %v1222 = vor.u32 %v1219, %v1220
        %v1223 = vrot.slane %v1219, 4
        %v1225 = vshrl.u32 %v1188, 16
        %v1227 = vrot.slane %v1225, 7
        %v1228 = vshll.u32 %v1188, 16
        %v1230 = vor.u32 %v1227, %v1228
        %v1231 = vrot.slane %v1227, 4
        %v1233 = vshrl.u32 %v1189, 16
        %v1235 = vrot.slane %v1233, 7
        %v1236 = vshll.u32 %v1189, 16
        %v1238 = vor.u32 %v1235, %v1236
        %v1239 = vrot.slane %v1235, 4
        %v1241 = vshrl.u32 %v1190, 16
        %v1243 = vrot.slane %v1241, 7
        %v1244 = vshll.u32 %v1190, 16
        %v1246 = vor.u32 %v1243, %v1244
        %v1247 = vrot.slane %v1243, 4
        %v1249 = vshrl.u32 %v1191, 16
        %v1251 = vrot.slane %v1249, 7
        %v1252 = vshll.u32 %v1191, 16
        %v1254 = vor.u32 %v1251, %v1252
        %v1255 = vrot.slane %v1251, 4
        %s1272 = scalar_lea.vmem [#allocation2], 8
        %vm1273 = vcmask 1043456
        %vm1274 = vsmask.f32 7938
        %vm1275 = vmand %vm1273, %vm1274
        %v1276 = vld [vmem:[%s1272] sm:$0xf]
        %v1277 = vsel %vm1275, %v1198, %v1276
        %1278 = vst [vmem:[%s1272] sm:$0xf] %v1277
        %vm1279 = vcmask 1040384
        %vm1280 = vsmask.f32 256
        %vm1281 = vmand %vm1279, %vm1280
        %v1282 = vld [vmem:[%s1272 + $0x4] sm:$0x1]
        %v1283 = vsel %vm1281, %v1199, %v1282
        %1284 = vst [vmem:[%s1272 + $0x4] sm:$0x1] %v1283
        %v1285 = vld [vmem:[%s1272 + $0x8] sm:$0xf]
        %v1286 = vsel %vm1275, %v1206, %v1285
        %1287 = vst [vmem:[%s1272 + $0x8] sm:$0xf] %v1286
        %v1288 = vld [vmem:[%s1272 + $0xc] sm:$0x1]
        %v1289 = vsel %vm1281, %v1207, %v1288
        %1290 = vst [vmem:[%s1272 + $0xc] sm:$0x1] %v1289
        %v1291 = vld [vmem:[%s1272 + $0x10] sm:$0xf]
        %v1292 = vsel %vm1275, %v1214, %v1291
        %1293 = vst [vmem:[%s1272 + $0x10] sm:$0xf] %v1292
        %v1294 = vld [vmem:[%s1272 + $0x14] sm:$0x1]
        %v1295 = vsel %vm1281, %v1215, %v1294
        %1296 = vst [vmem:[%s1272 + $0x14] sm:$0x1] %v1295
        %v1297 = vld [vmem:[%s1272 + $0x18] sm:$0xf]
        %v1298 = vsel %vm1275, %v1222, %v1297
        %1299 = vst [vmem:[%s1272 + $0x18] sm:$0xf] %v1298
        %v1300 = vld [vmem:[%s1272 + $0x1c] sm:$0x1]
        %v1301 = vsel %vm1281, %v1223, %v1300
        %1302 = vst [vmem:[%s1272 + $0x1c] sm:$0x1] %v1301
        %v1303 = vld [vmem:[%s1272 + $0x20] sm:$0xf]
        %v1304 = vsel %vm1275, %v1230, %v1303
        %1305 = vst [vmem:[%s1272 + $0x20] sm:$0xf] %v1304
        %v1306 = vld [vmem:[%s1272 + $0x24] sm:$0x1]
        %v1307 = vsel %vm1281, %v1231, %v1306
        %1308 = vst [vmem:[%s1272 + $0x24] sm:$0x1] %v1307
        %v1309 = vld [vmem:[%s1272 + $0x28] sm:$0xf]
        %v1310 = vsel %vm1275, %v1238, %v1309
        %1311 = vst [vmem:[%s1272 + $0x28] sm:$0xf] %v1310
        %v1312 = vld [vmem:[%s1272 + $0x2c] sm:$0x1]
        %v1313 = vsel %vm1281, %v1239, %v1312
        %1314 = vst [vmem:[%s1272 + $0x2c] sm:$0x1] %v1313
        %v1315 = vld [vmem:[%s1272 + $0x30] sm:$0xf]
        %v1316 = vsel %vm1275, %v1246, %v1315
        %1317 = vst [vmem:[%s1272 + $0x30] sm:$0xf] %v1316
        %v1318 = vld [vmem:[%s1272 + $0x34] sm:$0x1]
        %v1319 = vsel %vm1281, %v1247, %v1318
        %1320 = vst [vmem:[%s1272 + $0x34] sm:$0x1] %v1319
        %v1321 = vld [vmem:[%s1272 + $0x38] sm:$0xf]
        %v1322 = vsel %vm1275, %v1254, %v1321
        %1323 = vst [vmem:[%s1272 + $0x38] sm:$0xf] %v1322
        %v1324 = vld [vmem:[%s1272 + $0x3c] sm:$0x1]
        %v1325 = vsel %vm1281, %v1255, %v1324
        %1326 = vst [vmem:[%s1272 + $0x3c] sm:$0x1] %v1325
        %v1327 = vld [vmem:[#allocation2] sm:$0xf]
        %v1328 = vld [vmem:[#allocation2 + $0x8] sm:$0xf]
        %v1329 = vld [vmem:[#allocation2 + $0x10] sm:$0xf]
        %v1330 = vld [vmem:[#allocation2 + $0x18] sm:$0xf]
        %v1331 = vld [vmem:[#allocation2 + $0x20] sm:$0xf]
        %v1332 = vld [vmem:[#allocation2 + $0x28] sm:$0xf]
        %v1333 = vld [vmem:[#allocation2 + $0x30] sm:$0xf]
        %v1334 = vld [vmem:[#allocation2 + $0x38] sm:$0xf]
        %v1335 = vld [vmem:[#allocation8] sm:$0xf]
        %v1336 = vld [vmem:[#allocation8 + $0x4] sm:$0xf]
        %v1337 = vld [vmem:[#allocation8 + $0x8] sm:$0xf]
        %v1338 = vld [vmem:[#allocation8 + $0xc] sm:$0xf]
        %v1339 = vld [vmem:[#allocation8 + $0x10] sm:$0xf]
        %v1340 = vld [vmem:[#allocation8 + $0x14] sm:$0xf]
        %v1341 = vld [vmem:[#allocation8 + $0x18] sm:$0xf]
        %v1342 = vld [vmem:[#allocation8 + $0x1c] sm:$0xf]
        %v1343 = vld [vmem:[#allocation8 + $0x20] sm:$0xf]
        %v1344 = vld [vmem:[#allocation8 + $0x24] sm:$0xf]
        %v1345 = vld [vmem:[#allocation8 + $0x28] sm:$0xf]
        %v1346 = vld [vmem:[#allocation8 + $0x2c] sm:$0xf]
        %v1347 = vld [vmem:[#allocation8 + $0x30] sm:$0xf]
        %v1348 = vld [vmem:[#allocation8 + $0x34] sm:$0xf]
        %v1349 = vld [vmem:[#allocation8 + $0x38] sm:$0xf]
        %v1350 = vld [vmem:[#allocation8 + $0x3c] sm:$0xf]
        %v1351 = vld [vmem:[#allocation2 + $0x4] sm:$0x1]
        %v1352 = vld [vmem:[#allocation2 + $0xc] sm:$0x1]
        %v1353 = vld [vmem:[#allocation2 + $0x14] sm:$0x1]
        %v1354 = vld [vmem:[#allocation2 + $0x1c] sm:$0x1]
        %v1355 = vld [vmem:[#allocation2 + $0x24] sm:$0x1]
        %v1356 = vld [vmem:[#allocation2 + $0x2c] sm:$0x1]
        %v1357 = vld [vmem:[#allocation2 + $0x34] sm:$0x1]
        %v1358 = vld [vmem:[#allocation2 + $0x3c] sm:$0x1]
        %v1360 = vshrl.u32 %v1327, 16
        %v1362 = vrot.slane %v1360, 4
        %v1363 = vshll.u32 %v1327, 16
        %v1365 = vrot.slane %v1363, 5
        %v1366 = vor.u32 %v1362, %v1365
        %v1367 = vrot.slane %v1366, 4
        %v1369 = vshll.u32 %v1351, 16
        %v1371 = vrot.slane %v1369, 5
        %v1372 = vsel %vm311, %v1367, %v1371
        %v1374 = vshrl.u32 %v1328, 16
        %v1376 = vrot.slane %v1374, 4
        %v1377 = vshll.u32 %v1328, 16
        %v1379 = vrot.slane %v1377, 5
        %v1380 = vor.u32 %v1376, %v1379
        %v1381 = vrot.slane %v1380, 4
        %v1383 = vshll.u32 %v1352, 16
        %v1385 = vrot.slane %v1383, 5
        %v1386 = vsel %vm311, %v1381, %v1385
        %v1388 = vshrl.u32 %v1329, 16
        %v1390 = vrot.slane %v1388, 4
        %v1391 = vshll.u32 %v1329, 16
        %v1393 = vrot.slane %v1391, 5
        %v1394 = vor.u32 %v1390, %v1393
        %v1395 = vrot.slane %v1394, 4
        %v1397 = vshll.u32 %v1353, 16
        %v1399 = vrot.slane %v1397, 5
        %v1400 = vsel %vm311, %v1395, %v1399
        %v1402 = vshrl.u32 %v1330, 16
        %v1404 = vrot.slane %v1402, 4
        %v1405 = vshll.u32 %v1330, 16
        %v1407 = vrot.slane %v1405, 5
        %v1408 = vor.u32 %v1404, %v1407
        %v1409 = vrot.slane %v1408, 4
        %v1411 = vshll.u32 %v1354, 16
        %v1413 = vrot.slane %v1411, 5
        %v1414 = vsel %vm311, %v1409, %v1413
        %v1416 = vshrl.u32 %v1331, 16
        %v1418 = vrot.slane %v1416, 4
        %v1419 = vshll.u32 %v1331, 16
        %v1421 = vrot.slane %v1419, 5
        %v1422 = vor.u32 %v1418, %v1421
        %v1423 = vrot.slane %v1422, 4
        %v1425 = vshll.u32 %v1355, 16
        %v1427 = vrot.slane %v1425, 5
        %v1428 = vsel %vm311, %v1423, %v1427
        %v1430 = vshrl.u32 %v1332, 16
        %v1432 = vrot.slane %v1430, 4
        %v1433 = vshll.u32 %v1332, 16
        %v1435 = vrot.slane %v1433, 5
        %v1436 = vor.u32 %v1432, %v1435
        %v1437 = vrot.slane %v1436, 4
        %v1439 = vshll.u32 %v1356, 16
        %v1441 = vrot.slane %v1439, 5
        %v1442 = vsel %vm311, %v1437, %v1441
        %v1444 = vshrl.u32 %v1333, 16
        %v1446 = vrot.slane %v1444, 4
        %v1447 = vshll.u32 %v1333, 16
        %v1449 = vrot.slane %v1447, 5
        %v1450 = vor.u32 %v1446, %v1449
        %v1451 = vrot.slane %v1450, 4
        %v1453 = vshll.u32 %v1357, 16
        %v1455 = vrot.slane %v1453, 5
        %v1456 = vsel %vm311, %v1451, %v1455
        %v1458 = vshrl.u32 %v1334, 16
        %v1460 = vrot.slane %v1458, 4
        %v1461 = vshll.u32 %v1334, 16
        %v1463 = vrot.slane %v1461, 5
        %v1464 = vor.u32 %v1460, %v1463
        %v1465 = vrot.slane %v1464, 4
        %v1467 = vshll.u32 %v1358, 16
        %v1469 = vrot.slane %v1467, 5
        %v1470 = vsel %vm311, %v1465, %v1469
        %s1471 = scalar_lea.vmem [#allocation8], 64
        %v1472 = vld [vmem:[%s1471] sm:$0xf]
        %v1473 = vld [vmem:[%s1471 + $0x4] sm:$0xf]
        %v1474 = vld [vmem:[%s1471 + $0x8] sm:$0xf]
        %v1475 = vld [vmem:[%s1471 + $0xc] sm:$0xf]
        %v1476 = vld [vmem:[%s1471 + $0x10] sm:$0xf]
        %v1477 = vld [vmem:[%s1471 + $0x14] sm:$0xf]
        %v1478 = vld [vmem:[%s1471 + $0x18] sm:$0xf]
        %v1479 = vld [vmem:[%s1471 + $0x1c] sm:$0xf]
        %v1480 = vld [vmem:[%s1471 + $0x20] sm:$0xf]
        %v1481 = vld [vmem:[%s1471 + $0x24] sm:$0xf]
        %v1482 = vld [vmem:[%s1471 + $0x28] sm:$0xf]
        %v1483 = vld [vmem:[%s1471 + $0x2c] sm:$0xf]
        %v1484 = vld [vmem:[%s1471 + $0x30] sm:$0xf]
        %v1485 = vld [vmem:[%s1471 + $0x34] sm:$0xf]
        %v1486 = vld [vmem:[%s1471 + $0x38] sm:$0xf]
        %v1487 = vld [vmem:[%s1471 + $0x3c] sm:$0xf]
        %v1488 = vunpack.c.l.b16 %v1372
        %v1489 = vunpack.c.l.b16 %v1386
        %v1490 = vunpack.c.l.b16 %v1400
        %v1491 = vunpack.c.l.b16 %v1414
        %v1492 = vunpack.c.l.b16 %v1428
        %v1493 = vunpack.c.l.b16 %v1442
        %v1494 = vunpack.c.l.b16 %v1456
        %v1495 = vunpack.c.l.b16 %v1470
        %v1496 = vpack.c.b16 %v1489, %v1488
        %v1497 = vpack.c.b16 %v1491, %v1490
        %v1498 = vpack.c.b16 %v1493, %v1492
        %v1499 = vpack.c.b16 %v1495, %v1494
        %v1520 = vunpack.c.l.b16 %v1472
        %v1521 = vunpack.c.l.b16 %v1473
        %v1522 = vunpack.c.l.b16 %v1474
        %v1523 = vunpack.c.l.b16 %v1475
        %v1524 = vunpack.c.l.b16 %v1476
        %v1525 = vunpack.c.l.b16 %v1477
        %v1526 = vunpack.c.l.b16 %v1478
        %v1527 = vunpack.c.l.b16 %v1479
        %v1528 = vunpack.c.l.b16 %v1480
        %v1529 = vunpack.c.l.b16 %v1481
        %v1530 = vunpack.c.l.b16 %v1482
        %v1531 = vunpack.c.l.b16 %v1483
        %v1532 = vunpack.c.l.b16 %v1484
        %v1533 = vunpack.c.l.b16 %v1485
        %v1534 = vunpack.c.l.b16 %v1486
        %v1535 = vunpack.c.l.b16 %v1487
        %v1536 = vpack.c.b16 %v1521, %v1520
        %v1537 = vpack.c.b16 %v1523, %v1522
        %v1538 = vpack.c.b16 %v1525, %v1524
        %v1539 = vpack.c.b16 %v1527, %v1526
        %v1540 = vpack.c.b16 %v1529, %v1528
        %v1541 = vpack.c.b16 %v1531, %v1530
        %v1542 = vpack.c.b16 %v1533, %v1532
        %v1543 = vpack.c.b16 %v1535, %v1534
        %1552 = vmatprep.subr.bf16.mxu0 0
        %1553 = vmatpush1.bf16.msra.mxu0 %v1536
        %1554 = vmatprep.subr.bf16.mxu0 0
        %1555 = vmatpush1.bf16.msra.mxu0 %v1537
        %1556 = vmatprep.subr.bf16.mxu0 0
        %1557 = vmatpush1.bf16.msra.mxu0 %v1538
        %1558 = vmatprep.subr.bf16.mxu0 0
        %1559 = vmatpush1.bf16.msra.mxu0 %v1539
        %1560 = vmatprep.subr.bf16.mxu0 0
        %1561 = vmatpush1.bf16.msra.mxu0 %v1540
        %1562 = vmatprep.subr.bf16.mxu0 0
        %1563 = vmatpush1.bf16.msra.mxu0 %v1541
        %1564 = vmatprep.subr.bf16.mxu0 0
        %1565 = vmatpush1.bf16.msra.mxu0 %v1542
        %1566 = vmatprep.subr.bf16.mxu0 0
        %1567 = vmatpush1.bf16.msra.mxu0 %v1543
        %1568 = vmatprep.subr.bf16.mxu0 0
        %1569 = vmatpush1.bf16.msra.mxu0 0
        %1570 = vmatprep.subr.bf16.mxu0 0
        %1571 = vmatpush1.bf16.msra.mxu0 0
        %1572 = vmatprep.subr.bf16.mxu0 0
        %1573 = vmatpush1.bf16.msra.mxu0 0
        %1574 = vmatprep.subr.bf16.mxu0 0
        %1575 = vmatpush1.bf16.msra.mxu0 0
        %1576 = vmatprep.subr.bf16.mxu0 0
        %1577 = vmatpush1.bf16.msra.mxu0 0
        %1578 = vmatprep.subr.bf16.mxu0 0
        %1579 = vmatpush1.bf16.msra.mxu0 0
        %1580 = vmatprep.subr.bf16.mxu0 0
        %1581 = vmatpush1.bf16.msra.mxu0 0
        %1582 = vmatprep.subr.bf16.mxu0 0
        %1583 = vmatpush1.bf16.msra.mxu0 0
        %1584 = vmatprep.mubr.bf16.mxu0 0
        %1585 = vmatmul.mubr.bf16.gmra.mrb[0].mxu0 %v1496
        %v1586 = vpop.f32.mrb[0].mxu0
        %v1587 = vadd.f32 0.0, %v1586
        %v1588 = vpop.f32.mrb[0].mxu0
        %v1589 = vpop.f32.mrb[0].mxu0
        %v1590 = vadd.f32 0.0, %v1589
        %v1591 = vpop.f32.mrb[0].mxu0
        %1592 = vmatprep.mubr.bf16.mxu0 0
        %1593 = vmatmul.mubr.bf16.gmra.mrb[0].mxu0 %v1497
        %v1594 = vpop.f32.mrb[0].mxu0
        %v1595 = vadd.f32 0.0, %v1594
        %v1596 = vpop.f32.mrb[0].mxu0
        %v1597 = vpop.f32.mrb[0].mxu0
        %v1598 = vadd.f32 0.0, %v1597
        %v1599 = vpop.f32.mrb[0].mxu0
        %1600 = vmatprep.mubr.bf16.mxu0 0
        %1601 = vmatmul.mubr.bf16.gmra.mrb[0].mxu0 %v1498
        %v1602 = vpop.f32.mrb[0].mxu0
        %v1603 = vadd.f32 0.0, %v1602
        %v1604 = vpop.f32.mrb[0].mxu0
        %v1605 = vpop.f32.mrb[0].mxu0
        %v1606 = vadd.f32 0.0, %v1605
        %v1607 = vpop.f32.mrb[0].mxu0
        %1608 = vmatprep.mubr.bf16.mxu0 0
        %1609 = vmatmul.mubr.bf16.gmra.mrb[0].mxu0 %v1499
        %v1610 = vpop.f32.mrb[0].mxu0
        %v1611 = vadd.f32 0.0, %v1610
        %v1612 = vpop.f32.mrb[0].mxu0
        %v1613 = vpop.f32.mrb[0].mxu0
        %v1614 = vadd.f32 0.0, %v1613
        %v1615 = vpop.f32.mrb[0].mxu0
        %1616 = vdwg.mxu0
        %v1625 = vunpack.c.l.b16 %v1327
        %v1626 = vunpack.c.l.b16 %v1328
        %v1627 = vunpack.c.l.b16 %v1329
        %v1628 = vunpack.c.l.b16 %v1330
        %v1629 = vunpack.c.l.b16 %v1331
        %v1630 = vunpack.c.l.b16 %v1332
        %v1631 = vunpack.c.l.b16 %v1333
        %v1632 = vunpack.c.l.b16 %v1334
        %v1633 = vpack.c.b16 %v1626, %v1625
        %v1634 = vpack.c.b16 %v1628, %v1627
        %v1635 = vpack.c.b16 %v1630, %v1629
        %v1636 = vpack.c.b16 %v1632, %v1631
        %v1657 = vunpack.c.l.b16 %v1335
        %v1658 = vunpack.c.l.b16 %v1336
        %v1659 = vunpack.c.l.b16 %v1337
        %v1660 = vunpack.c.l.b16 %v1338
        %v1661 = vunpack.c.l.b16 %v1339
        %v1662 = vunpack.c.l.b16 %v1340
        %v1663 = vunpack.c.l.b16 %v1341
        %v1664 = vunpack.c.l.b16 %v1342
        %v1665 = vunpack.c.l.b16 %v1343
        %v1666 = vunpack.c.l.b16 %v1344
        %v1667 = vunpack.c.l.b16 %v1345
        %v1668 = vunpack.c.l.b16 %v1346
        %v1669 = vunpack.c.l.b16 %v1347
        %v1670 = vunpack.c.l.b16 %v1348
        %v1671 = vunpack.c.l.b16 %v1349
        %v1672 = vunpack.c.l.b16 %v1350
        %v1673 = vpack.c.b16 %v1658, %v1657
        %v1674 = vpack.c.b16 %v1660, %v1659
        %v1675 = vpack.c.b16 %v1662, %v1661
        %v1676 = vpack.c.b16 %v1664, %v1663
        %v1677 = vpack.c.b16 %v1666, %v1665
        %v1678 = vpack.c.b16 %v1668, %v1667
        %v1679 = vpack.c.b16 %v1670, %v1669
        %v1680 = vpack.c.b16 %v1672, %v1671
        %1689 = vmatprep.subr.bf16.mxu0 0
        %1690 = vmatpush1.bf16.msra.mxu0 %v1673
        %1691 = vmatprep.subr.bf16.mxu0 0
        %1692 = vmatpush1.bf16.msra.mxu0 %v1674
        %1693 = vmatprep.subr.bf16.mxu0 0
        %1694 = vmatpush1.bf16.msra.mxu0 %v1675
        %1695 = vmatprep.subr.bf16.mxu0 0
        %1696 = vmatpush1.bf16.msra.mxu0 %v1676
        %1697 = vmatprep.subr.bf16.mxu0 0
        %1698 = vmatpush1.bf16.msra.mxu0 %v1677
        %1699 = vmatprep.subr.bf16.mxu0 0
        %1700 = vmatpush1.bf16.msra.mxu0 %v1678
        %1701 = vmatprep.subr.bf16.mxu0 0
        %1702 = vmatpush1.bf16.msra.mxu0 %v1679
        %1703 = vmatprep.subr.bf16.mxu0 0
        %1704 = vmatpush1.bf16.msra.mxu0 %v1680
        %1705 = vmatprep.subr.bf16.mxu0 0
        %1706 = vmatpush1.bf16.msra.mxu0 0
        %1707 = vmatprep.subr.bf16.mxu0 0
        %1708 = vmatpush1.bf16.msra.mxu0 0
        %1709 = vmatprep.subr.bf16.mxu0 0
        %1710 = vmatpush1.bf16.msra.mxu0 0
        %1711 = vmatprep.subr.bf16.mxu0 0
        %1712 = vmatpush1.bf16.msra.mxu0 0
        %1713 = vmatprep.subr.bf16.mxu0 0
        %1714 = vmatpush1.bf16.msra.mxu0 0
        %1715 = vmatprep.subr.bf16.mxu0 0
        %1716 = vmatpush1.bf16.msra.mxu0 0
        %1717 = vmatprep.subr.bf16.mxu0 0
        %1718 = vmatpush1.bf16.msra.mxu0 0
        %1719 = vmatprep.subr.bf16.mxu0 0
        %1720 = vmatpush1.bf16.msra.mxu0 0
        %1721 = vmatprep.mubr.bf16.mxu0 0
        %1722 = vmatmul.mubr.bf16.gmra.mrb[0].mxu0 %v1633
        %v1723 = vpop.f32.mrb[0].mxu0
        %v1724 = vadd.f32 %v1587, %v1723
        %v1725 = vpop.f32.mrb[0].mxu0
        %v1726 = vpop.f32.mrb[0].mxu0
        %v1727 = vadd.f32 %v1590, %v1726
        %v1728 = vpop.f32.mrb[0].mxu0
        %1729 = vmatprep.mubr.bf16.mxu0 0
        %1730 = vmatmul.mubr.bf16.gmra.mrb[0].mxu0 %v1634
        %v1731 = vpop.f32.mrb[0].mxu0
        %v1732 = vadd.f32 %v1595, %v1731
        %v1733 = vpop.f32.mrb[0].mxu0
        %v1734 = vpop.f32.mrb[0].mxu0
        %v1735 = vadd.f32 %v1598, %v1734
        %v1736 = vpop.f32.mrb[0].mxu0
        %1737 = vmatprep.mubr.bf16.mxu0 0
        %1738 = vmatmul.mubr.bf16.gmra.mrb[0].mxu0 %v1635
        %v1739 = vpop.f32.mrb[0].mxu0
        %v1740 = vadd.f32 %v1603, %v1739
        %v1741 = vpop.f32.mrb[0].mxu0
        %v1742 = vpop.f32.mrb[0].mxu0
        %v1743 = vadd.f32 %v1606, %v1742
        %v1744 = vpop.f32.mrb[0].mxu0
        %1745 = vmatprep.mubr.bf16.mxu0 0
        %1746 = vmatmul.mubr.bf16.gmra.mrb[0].mxu0 %v1636
        %v1747 = vpop.f32.mrb[0].mxu0
        %v1748 = vadd.f32 %v1611, %v1747
        %v1749 = vpop.f32.mrb[0].mxu0
        %v1750 = vpop.f32.mrb[0].mxu0
        %v1751 = vadd.f32 %v1614, %v1750
        %v1752 = vpop.f32.mrb[0].mxu0
        %1753 = vdwg.mxu0
        %v1754 = vld [vmem:[%s1272] sm:$0xf]
        %v1755 = vld [vmem:[%s1272 + $0x8] sm:$0xf]
        %v1756 = vld [vmem:[%s1272 + $0x10] sm:$0xf]
        %v1757 = vld [vmem:[%s1272 + $0x18] sm:$0xf]
        %v1758 = vld [vmem:[%s1272 + $0x20] sm:$0xf]
        %v1759 = vld [vmem:[%s1272 + $0x28] sm:$0xf]
        %v1760 = vld [vmem:[%s1272 + $0x30] sm:$0xf]
        %v1761 = vld [vmem:[%s1272 + $0x38] sm:$0xf]
        %s1762 = scalar_lea.vmem [#allocation8], 128
        %v1763 = vld [vmem:[%s1762] sm:$0xf]
        %v1764 = vld [vmem:[%s1762 + $0x4] sm:$0xf]
        %v1765 = vld [vmem:[%s1762 + $0x8] sm:$0xf]
        %v1766 = vld [vmem:[%s1762 + $0xc] sm:$0xf]
        %v1767 = vld [vmem:[%s1762 + $0x10] sm:$0xf]
        %v1768 = vld [vmem:[%s1762 + $0x14] sm:$0xf]
        %v1769 = vld [vmem:[%s1762 + $0x18] sm:$0xf]
        %v1770 = vld [vmem:[%s1762 + $0x1c] sm:$0xf]
        %v1771 = vld [vmem:[%s1762 + $0x20] sm:$0xf]
        %v1772 = vld [vmem:[%s1762 + $0x24] sm:$0xf]
        %v1773 = vld [vmem:[%s1762 + $0x28] sm:$0xf]
        %v1774 = vld [vmem:[%s1762 + $0x2c] sm:$0xf]
        %v1775 = vld [vmem:[%s1762 + $0x30] sm:$0xf]
        %v1776 = vld [vmem:[%s1762 + $0x34] sm:$0xf]
        %v1777 = vld [vmem:[%s1762 + $0x38] sm:$0xf]
        %v1778 = vld [vmem:[%s1762 + $0x3c] sm:$0xf]
        %v1787 = vunpack.c.l.b16 %v1754
        %v1788 = vunpack.c.l.b16 %v1755
        %v1789 = vunpack.c.l.b16 %v1756
        %v1790 = vunpack.c.l.b16 %v1757
        %v1791 = vunpack.c.l.b16 %v1758
        %v1792 = vunpack.c.l.b16 %v1759
        %v1793 = vunpack.c.l.b16 %v1760
        %v1794 = vunpack.c.l.b16 %v1761
        %v1795 = vpack.c.b16 %v1788, %v1787
        %v1796 = vpack.c.b16 %v1790, %v1789
        %v1797 = vpack.c.b16 %v1792, %v1791
        %v1798 = vpack.c.b16 %v1794, %v1793
        %v1819 = vunpack.c.l.b16 %v1763
        %v1820 = vunpack.c.l.b16 %v1764
        %v1821 = vunpack.c.l.b16 %v1765
        %v1822 = vunpack.c.l.b16 %v1766
        %v1823 = vunpack.c.l.b16 %v1767
        %v1824 = vunpack.c.l.b16 %v1768
        %v1825 = vunpack.c.l.b16 %v1769
        %v1826 = vunpack.c.l.b16 %v1770
        %v1827 = vunpack.c.l.b16 %v1771
        %v1828 = vunpack.c.l.b16 %v1772
        %v1829 = vunpack.c.l.b16 %v1773
        %v1830 = vunpack.c.l.b16 %v1774
        %v1831 = vunpack.c.l.b16 %v1775
        %v1832 = vunpack.c.l.b16 %v1776
        %v1833 = vunpack.c.l.b16 %v1777
        %v1834 = vunpack.c.l.b16 %v1778
        %v1835 = vpack.c.b16 %v1820, %v1819
        %v1836 = vpack.c.b16 %v1822, %v1821
        %v1837 = vpack.c.b16 %v1824, %v1823
        %v1838 = vpack.c.b16 %v1826, %v1825
        %v1839 = vpack.c.b16 %v1828, %v1827
        %v1840 = vpack.c.b16 %v1830, %v1829
        %v1841 = vpack.c.b16 %v1832, %v1831
        %v1842 = vpack.c.b16 %v1834, %v1833
        %1851 = vmatprep.subr.bf16.mxu0 0
        %1852 = vmatpush1.bf16.msra.mxu0 %v1835
        %1853 = vmatprep.subr.bf16.mxu0 0
        %1854 = vmatpush1.bf16.msra.mxu0 %v1836
        %1855 = vmatprep.subr.bf16.mxu0 0
        %1856 = vmatpush1.bf16.msra.mxu0 %v1837
        %1857 = vmatprep.subr.bf16.mxu0 0
        %1858 = vmatpush1.bf16.msra.mxu0 %v1838
        %1859 = vmatprep.subr.bf16.mxu0 0
        %1860 = vmatpush1.bf16.msra.mxu0 %v1839
        %1861 = vmatprep.subr.bf16.mxu0 0
        %1862 = vmatpush1.bf16.msra.mxu0 %v1840
        %1863 = vmatprep.subr.bf16.mxu0 0
        %1864 = vmatpush1.bf16.msra.mxu0 %v1841
        %1865 = vmatprep.subr.bf16.mxu0 0
        %1866 = vmatpush1.bf16.msra.mxu0 %v1842
        %1867 = vmatprep.subr.bf16.mxu0 0
        %1868 = vmatpush1.bf16.msra.mxu0 0
        %1869 = vmatprep.subr.bf16.mxu0 0
        %1870 = vmatpush1.bf16.msra.mxu0 0
        %1871 = vmatprep.subr.bf16.mxu0 0
        %1872 = vmatpush1.bf16.msra.mxu0 0
        %1873 = vmatprep.subr.bf16.mxu0 0
        %1874 = vmatpush1.bf16.msra.mxu0 0
        %1875 = vmatprep.subr.bf16.mxu0 0
        %1876 = vmatpush1.bf16.msra.mxu0 0
        %1877 = vmatprep.subr.bf16.mxu0 0
        %1878 = vmatpush1.bf16.msra.mxu0 0
        %1879 = vmatprep.subr.bf16.mxu0 0
        %1880 = vmatpush1.bf16.msra.mxu0 0
        %1881 = vmatprep.subr.bf16.mxu0 0
        %1882 = vmatpush1.bf16.msra.mxu0 0
        %1883 = vmatprep.mubr.bf16.mxu0 0
        %1884 = vmatmul.mubr.bf16.gmra.mrb[0].mxu0 %v1795
        %v1885 = vpop.f32.mrb[0].mxu0
        %v1886 = vadd.f32 0.0, %v1885
        %v1887 = vpop.f32.mrb[0].mxu0
        %v1888 = vpop.f32.mrb[0].mxu0
        %v1889 = vadd.f32 0.0, %v1888
        %v1890 = vpop.f32.mrb[0].mxu0
        %1891 = vmatprep.mubr.bf16.mxu0 0
        %1892 = vmatmul.mubr.bf16.gmra.mrb[0].mxu0 %v1796
        %v1893 = vpop.f32.mrb[0].mxu0
        %v1894 = vadd.f32 0.0, %v1893
        %v1895 = vpop.f32.mrb[0].mxu0
        %v1896 = vpop.f32.mrb[0].mxu0
        %v1897 = vadd.f32 0.0, %v1896
        %v1898 = vpop.f32.mrb[0].mxu0
        %1899 = vmatprep.mubr.bf16.mxu0 0
        %1900 = vmatmul.mubr.bf16.gmra.mrb[0].mxu0 %v1797
        %v1901 = vpop.f32.mrb[0].mxu0
        %v1902 = vadd.f32 0.0, %v1901
        %v1903 = vpop.f32.mrb[0].mxu0
        %v1904 = vpop.f32.mrb[0].mxu0
        %v1905 = vadd.f32 0.0, %v1904
        %v1906 = vpop.f32.mrb[0].mxu0
        %1907 = vmatprep.mubr.bf16.mxu0 0
        %1908 = vmatmul.mubr.bf16.gmra.mrb[0].mxu0 %v1798
        %v1909 = vpop.f32.mrb[0].mxu0
        %v1910 = vadd.f32 0.0, %v1909
        %v1911 = vpop.f32.mrb[0].mxu0
        %v1912 = vpop.f32.mrb[0].mxu0
        %v1913 = vadd.f32 0.0, %v1912
        %v1914 = vpop.f32.mrb[0].mxu0
        %1915 = vdwg.mxu0
        %v1916 = vadd.f32 %v1724, %v1886
        %v1917 = vadd.f32 %v1727, %v1889
        %v1918 = vadd.f32 %v1732, %v1894
        %v1919 = vadd.f32 %v1735, %v1897
        %v1920 = vadd.f32 %v1740, %v1902
        %v1921 = vadd.f32 %v1743, %v1905
        %v1922 = vadd.f32 %v1748, %v1910
        %v1923 = vadd.f32 %v1751, %v1913
        %v1924 = vld [vmem:[%s1272] sm:$0xf]
        %v1925 = vld [vmem:[%s1272 + $0x4] sm:$0x1]
        %v1926 = vld [vmem:[%s1272 + $0x8] sm:$0xf]
        %v1927 = vld [vmem:[%s1272 + $0xc] sm:$0x1]
        %v1928 = vld [vmem:[%s1272 + $0x10] sm:$0xf]
        %v1929 = vld [vmem:[%s1272 + $0x14] sm:$0x1]
        %v1930 = vld [vmem:[%s1272 + $0x18] sm:$0xf]
        %v1931 = vld [vmem:[%s1272 + $0x1c] sm:$0x1]
        %v1932 = vld [vmem:[%s1272 + $0x20] sm:$0xf]
        %v1933 = vld [vmem:[%s1272 + $0x24] sm:$0x1]
        %v1934 = vld [vmem:[%s1272 + $0x28] sm:$0xf]
        %v1935 = vld [vmem:[%s1272 + $0x2c] sm:$0x1]
        %v1936 = vld [vmem:[%s1272 + $0x30] sm:$0xf]
        %v1937 = vld [vmem:[%s1272 + $0x34] sm:$0x1]
        %v1938 = vld [vmem:[%s1272 + $0x38] sm:$0xf]
        %v1939 = vld [vmem:[%s1272 + $0x3c] sm:$0x1]
        %v1941 = vshrl.u32 %v1924, 16
        %v1943 = vrot.slane %v1941, 4
        %v1944 = vshll.u32 %v1924, 16
        %v1946 = vrot.slane %v1944, 5
        %v1947 = vor.u32 %v1943, %v1946
        %v1948 = vrot.slane %v1947, 4
        %v1950 = vshll.u32 %v1925, 16
        %v1952 = vrot.slane %v1950, 5
        %v1953 = vsel %vm311, %v1948, %v1952
        %v1955 = vshrl.u32 %v1926, 16
        %v1957 = vrot.slane %v1955, 4
        %v1958 = vshll.u32 %v1926, 16
        %v1960 = vrot.slane %v1958, 5
        %v1961 = vor.u32 %v1957, %v1960
        %v1962 = vrot.slane %v1961, 4
        %v1964 = vshll.u32 %v1927, 16
        %v1966 = vrot.slane %v1964, 5
        %v1967 = vsel %vm311, %v1962, %v1966
        %v1969 = vshrl.u32 %v1928, 16
        %v1971 = vrot.slane %v1969, 4
        %v1972 = vshll.u32 %v1928, 16
        %v1974 = vrot.slane %v1972, 5
        %v1975 = vor.u32 %v1971, %v1974
        %v1976 = vrot.slane %v1975, 4
        %v1978 = vshll.u32 %v1929, 16
        %v1980 = vrot.slane %v1978, 5
        %v1981 = vsel %vm311, %v1976, %v1980
        %v1983 = vshrl.u32 %v1930, 16
        %v1985 = vrot.slane %v1983, 4
        %v1986 = vshll.u32 %v1930, 16
        %v1988 = vrot.slane %v1986, 5
        %v1989 = vor.u32 %v1985, %v1988
        %v1990 = vrot.slane %v1989, 4
        %v1992 = vshll.u32 %v1931, 16
        %v1994 = vrot.slane %v1992, 5
        %v1995 = vsel %vm311, %v1990, %v1994
        %v1997 = vshrl.u32 %v1932, 16
        %v1999 = vrot.slane %v1997, 4
        %v2000 = vshll.u32 %v1932, 16
        %v2002 = vrot.slane %v2000, 5
        %v2003 = vor.u32 %v1999, %v2002
        %v2004 = vrot.slane %v2003, 4
        %v2006 = vshll.u32 %v1933, 16
        %v2008 = vrot.slane %v2006, 5
        %v2009 = vsel %vm311, %v2004, %v2008
        %v2011 = vshrl.u32 %v1934, 16
        %v2013 = vrot.slane %v2011, 4
        %v2014 = vshll.u32 %v1934, 16
        %v2016 = vrot.slane %v2014, 5
        %v2017 = vor.u32 %v2013, %v2016
        %v2018 = vrot.slane %v2017, 4
        %v2020 = vshll.u32 %v1935, 16
        %v2022 = vrot.slane %v2020, 5
        %v2023 = vsel %vm311, %v2018, %v2022
        %v2025 = vshrl.u32 %v1936, 16
        %v2027 = vrot.slane %v2025, 4
        %v2028 = vshll.u32 %v1936, 16
        %v2030 = vrot.slane %v2028, 5
        %v2031 = vor.u32 %v2027, %v2030
        %v2032 = vrot.slane %v2031, 4
        %v2034 = vshll.u32 %v1937, 16
        %v2036 = vrot.slane %v2034, 5
        %v2037 = vsel %vm311, %v2032, %v2036
        %v2039 = vshrl.u32 %v1938, 16
        %v2041 = vrot.slane %v2039, 4
        %v2042 = vshll.u32 %v1938, 16
        %v2044 = vrot.slane %v2042, 5
        %v2045 = vor.u32 %v2041, %v2044
        %v2046 = vrot.slane %v2045, 4
        %v2048 = vshll.u32 %v1939, 16
        %v2050 = vrot.slane %v2048, 5
        %v2051 = vsel %vm311, %v2046, %v2050
        %s2052 = scalar_lea.vmem [#allocation8], 192
        %v2053 = vld [vmem:[%s2052] sm:$0xf]
        %v2054 = vld [vmem:[%s2052 + $0x4] sm:$0xf]
        %v2055 = vld [vmem:[%s2052 + $0x8] sm:$0xf]
        %v2056 = vld [vmem:[%s2052 + $0xc] sm:$0xf]
        %v2057 = vld [vmem:[%s2052 + $0x10] sm:$0xf]
        %v2058 = vld [vmem:[%s2052 + $0x14] sm:$0xf]
        %v2059 = vld [vmem:[%s2052 + $0x18] sm:$0xf]
        %v2060 = vld [vmem:[%s2052 + $0x1c] sm:$0xf]
        %v2061 = vld [vmem:[%s2052 + $0x20] sm:$0xf]
        %v2062 = vld [vmem:[%s2052 + $0x24] sm:$0xf]
        %v2063 = vld [vmem:[%s2052 + $0x28] sm:$0xf]
        %v2064 = vld [vmem:[%s2052 + $0x2c] sm:$0xf]
        %v2065 = vld [vmem:[%s2052 + $0x30] sm:$0xf]
        %v2066 = vld [vmem:[%s2052 + $0x34] sm:$0xf]
        %v2067 = vld [vmem:[%s2052 + $0x38] sm:$0xf]
        %v2068 = vld [vmem:[%s2052 + $0x3c] sm:$0xf]
        %v2069 = vunpack.c.l.b16 %v1953
        %v2070 = vunpack.c.l.b16 %v1967
        %v2071 = vunpack.c.l.b16 %v1981
        %v2072 = vunpack.c.l.b16 %v1995
        %v2073 = vunpack.c.l.b16 %v2009
        %v2074 = vunpack.c.l.b16 %v2023
        %v2075 = vunpack.c.l.b16 %v2037
        %v2076 = vunpack.c.l.b16 %v2051
        %v2077 = vpack.c.b16 %v2070, %v2069
        %v2078 = vpack.c.b16 %v2072, %v2071
        %v2079 = vpack.c.b16 %v2074, %v2073
        %v2080 = vpack.c.b16 %v2076, %v2075
        %v2101 = vunpack.c.l.b16 %v2053
        %v2102 = vunpack.c.l.b16 %v2054
        %v2103 = vunpack.c.l.b16 %v2055
        %v2104 = vunpack.c.l.b16 %v2056
        %v2105 = vunpack.c.l.b16 %v2057
        %v2106 = vunpack.c.l.b16 %v2058
        %v2107 = vunpack.c.l.b16 %v2059
        %v2108 = vunpack.c.l.b16 %v2060
        %v2109 = vunpack.c.l.b16 %v2061
        %v2110 = vunpack.c.l.b16 %v2062
        %v2111 = vunpack.c.l.b16 %v2063
        %v2112 = vunpack.c.l.b16 %v2064
        %v2113 = vunpack.c.l.b16 %v2065
        %v2114 = vunpack.c.l.b16 %v2066
        %v2115 = vunpack.c.l.b16 %v2067
        %v2116 = vunpack.c.l.b16 %v2068
        %v2117 = vpack.c.b16 %v2102, %v2101
        %v2118 = vpack.c.b16 %v2104, %v2103
        %v2119 = vpack.c.b16 %v2106, %v2105
        %v2120 = vpack.c.b16 %v2108, %v2107
        %v2121 = vpack.c.b16 %v2110, %v2109
        %v2122 = vpack.c.b16 %v2112, %v2111
        %v2123 = vpack.c.b16 %v2114, %v2113
        %v2124 = vpack.c.b16 %v2116, %v2115
        %2133 = vmatprep.subr.bf16.mxu0 0
        %2134 = vmatpush1.bf16.msra.mxu0 %v2117
        %2135 = vmatprep.subr.bf16.mxu0 0
        %2136 = vmatpush1.bf16.msra.mxu0 %v2118
        %2137 = vmatprep.subr.bf16.mxu0 0
        %2138 = vmatpush1.bf16.msra.mxu0 %v2119
        %2139 = vmatprep.subr.bf16.mxu0 0
        %2140 = vmatpush1.bf16.msra.mxu0 %v2120
        %2141 = vmatprep.subr.bf16.mxu0 0
        %2142 = vmatpush1.bf16.msra.mxu0 %v2121
        %2143 = vmatprep.subr.bf16.mxu0 0
        %2144 = vmatpush1.bf16.msra.mxu0 %v2122
        %2145 = vmatprep.subr.bf16.mxu0 0
        %2146 = vmatpush1.bf16.msra.mxu0 %v2123
        %2147 = vmatprep.subr.bf16.mxu0 0
        %2148 = vmatpush1.bf16.msra.mxu0 %v2124
        %2149 = vmatprep.subr.bf16.mxu0 0
        %2150 = vmatpush1.bf16.msra.mxu0 0
        %2151 = vmatprep.subr.bf16.mxu0 0
        %2152 = vmatpush1.bf16.msra.mxu0 0
        %2153 = vmatprep.subr.bf16.mxu0 0
        %2154 = vmatpush1.bf16.msra.mxu0 0
        %2155 = vmatprep.subr.bf16.mxu0 0
        %2156 = vmatpush1.bf16.msra.mxu0 0
        %2157 = vmatprep.subr.bf16.mxu0 0
        %2158 = vmatpush1.bf16.msra.mxu0 0
        %2159 = vmatprep.subr.bf16.mxu0 0
        %2160 = vmatpush1.bf16.msra.mxu0 0
        %2161 = vmatprep.subr.bf16.mxu0 0
        %2162 = vmatpush1.bf16.msra.mxu0 0
        %2163 = vmatprep.subr.bf16.mxu0 0
        %2164 = vmatpush1.bf16.msra.mxu0 0
        %2165 = vmatprep.mubr.bf16.mxu0 0
        %2166 = vmatmul.mubr.bf16.gmra.mrb[0].mxu0 %v2077
        %v2167 = vpop.f32.mrb[0].mxu0
        %v2168 = vadd.f32 0.0, %v2167
        %v2169 = vpop.f32.mrb[0].mxu0
        %v2170 = vpop.f32.mrb[0].mxu0
        %v2171 = vadd.f32 0.0, %v2170
        %v2172 = vpop.f32.mrb[0].mxu0
        %2173 = vmatprep.mubr.bf16.mxu0 0
        %2174 = vmatmul.mubr.bf16.gmra.mrb[0].mxu0 %v2078
        %v2175 = vpop.f32.mrb[0].mxu0
        %v2176 = vadd.f32 0.0, %v2175
        %v2177 = vpop.f32.mrb[0].mxu0
        %v2178 = vpop.f32.mrb[0].mxu0
        %v2179 = vadd.f32 0.0, %v2178
        %v2180 = vpop.f32.mrb[0].mxu0
        %2181 = vmatprep.mubr.bf16.mxu0 0
        %2182 = vmatmul.mubr.bf16.gmra.mrb[0].mxu0 %v2079
        %v2183 = vpop.f32.mrb[0].mxu0
        %v2184 = vadd.f32 0.0, %v2183
        %v2185 = vpop.f32.mrb[0].mxu0
        %v2186 = vpop.f32.mrb[0].mxu0
        %v2187 = vadd.f32 0.0, %v2186
        %v2188 = vpop.f32.mrb[0].mxu0
        %2189 = vmatprep.mubr.bf16.mxu0 0
        %2190 = vmatmul.mubr.bf16.gmra.mrb[0].mxu0 %v2080
        %v2191 = vpop.f32.mrb[0].mxu0
        %v2192 = vadd.f32 0.0, %v2191
        %v2193 = vpop.f32.mrb[0].mxu0
        %v2194 = vpop.f32.mrb[0].mxu0
        %v2195 = vadd.f32 0.0, %v2194
        %v2196 = vpop.f32.mrb[0].mxu0
        %2197 = vdwg.mxu0
        %v2198 = vadd.f32 %v1916, %v2168
        %v2199 = vadd.f32 %v1917, %v2171
        %v2200 = vadd.f32 %v1918, %v2176
        %v2201 = vadd.f32 %v1919, %v2179
        %v2202 = vadd.f32 %v1920, %v2184
        %v2203 = vadd.f32 %v1921, %v2187
        %v2204 = vadd.f32 %v1922, %v2192
        %v2205 = vadd.f32 %v1923, %v2195
        %v2206 = vpack.c.bf16 %v2199, %v2198
        %v2207 = vpack.c.bf16 %v2201, %v2200
        %v2208 = vpack.c.bf16 %v2203, %v2202
        %v2209 = vpack.c.bf16 %v2205, %v2204
        %v2214 = vunpack.c.l.b16 %v2206
        %v2215 = vunpack.c.h.b16 %v2206
        %v2216 = vunpack.c.l.b16 %v2207
        %v2217 = vunpack.c.h.b16 %v2207
        %v2218 = vunpack.c.l.b16 %v2208
        %v2219 = vunpack.c.h.b16 %v2208
        %v2220 = vunpack.c.l.b16 %v2209
        %v2221 = vunpack.c.h.b16 %v2209
        %v2222 = vpack.c.b16 %v2214, %v2214
        %v2223 = vpack.c.b16 %v2215, %v2215
        %v2224 = vpack.c.b16 %v2216, %v2216
        %v2225 = vpack.c.b16 %v2217, %v2217
        %v2226 = vpack.c.b16 %v2218, %v2218
        %v2227 = vpack.c.b16 %v2219, %v2219
        %v2228 = vpack.c.b16 %v2220, %v2220
        %v2229 = vpack.c.b16 %v2221, %v2221
        %2238 = vst [vmem:[%s248] sm:$0xf] %v2222
        %2239 = vst [vmem:[%s248 + $0x4] sm:$0xf] %v2223
        %2240 = vst [vmem:[%s248 + $0x8] sm:$0xf] %v2224
        %2241 = vst [vmem:[%s248 + $0xc] sm:$0xf] %v2225
        %2242 = vst [vmem:[%s248 + $0x10] sm:$0xf] %v2226
        %2243 = vst [vmem:[%s248 + $0x14] sm:$0xf] %v2227
        %2244 = vst [vmem:[%s248 + $0x18] sm:$0xf] %v2228
        %2245 = vst [vmem:[%s248 + $0x1c] sm:$0xf] %v2229
        %v2246 = vadd.f32 %v2198, %v2199
        %v2247 = vadd.f32 %v2246, %v2200
        %v2248 = vadd.f32 %v2247, %v2201
        %v2249 = vadd.f32 %v2248, %v2202
        %v2250 = vadd.f32 %v2249, %v2203
        %v2251 = vadd.f32 %v2250, %v2204
        %v2252 = vadd.f32 %v2251, %v2205
        %v2253 = vrot.slane %v2252, 4
        %v2254 = vadd.f32 %v2252, %v2253
        %v2255 = vrot.slane %v2254, 2
        %v2256 = vadd.f32 %v2254, %v2255
        %v2257 = vrot.slane %v2256, 1
        %v2258 = vadd.f32 %v2256, %v2257
        %v2259 = vadd.f32 %v2258, 0.0
        %v2260 = vmul.f32 %v2198, %v2198
        %v2261 = vmul.f32 %v2199, %v2199
        %v2262 = vmul.f32 %v2200, %v2200
        %v2263 = vmul.f32 %v2201, %v2201
        %v2264 = vmul.f32 %v2202, %v2202
        %v2265 = vmul.f32 %v2203, %v2203
        %v2266 = vmul.f32 %v2204, %v2204
        %v2267 = vmul.f32 %v2205, %v2205
        %v2268 = vadd.f32 %v2260, %v2261
        %v2269 = vadd.f32 %v2268, %v2262
        %v2270 = vadd.f32 %v2269, %v2263
        %v2271 = vadd.f32 %v2270, %v2264
        %v2272 = vadd.f32 %v2271, %v2265
        %v2273 = vadd.f32 %v2272, %v2266
        %v2274 = vadd.f32 %v2273, %v2267
        %v2275 = vrot.slane %v2274, 4
        %v2276 = vadd.f32 %v2274, %v2275
        %v2277 = vrot.slane %v2276, 2
        %v2278 = vadd.f32 %v2276, %v2277
        %v2279 = vrot.slane %v2278, 1
        %v2280 = vadd.f32 %v2278, %v2279
        %v2281 = vadd.f32 %v2280, 0.0
        %v2282 = vld [vmem:[#allocation2] sm:$0xf]
        %v2283 = vld [vmem:[#allocation2 + $0x4] sm:$0x1]
        %v2284 = vld [vmem:[#allocation2 + $0x8] sm:$0xf]
        %v2285 = vld [vmem:[#allocation2 + $0xc] sm:$0x1]
        %v2286 = vld [vmem:[#allocation2 + $0x10] sm:$0xf]
        %v2287 = vld [vmem:[#allocation2 + $0x14] sm:$0x1]
        %v2288 = vld [vmem:[#allocation2 + $0x18] sm:$0xf]
        %v2289 = vld [vmem:[#allocation2 + $0x1c] sm:$0x1]
        %v2290 = vld [vmem:[#allocation2 + $0x20] sm:$0xf]
        %v2291 = vld [vmem:[#allocation2 + $0x24] sm:$0x1]
        %v2292 = vld [vmem:[#allocation2 + $0x28] sm:$0xf]
        %v2293 = vld [vmem:[#allocation2 + $0x2c] sm:$0x1]
        %v2294 = vld [vmem:[#allocation2 + $0x30] sm:$0xf]
        %v2295 = vld [vmem:[#allocation2 + $0x34] sm:$0x1]
        %v2296 = vld [vmem:[#allocation2 + $0x38] sm:$0xf]
        %v2297 = vld [vmem:[#allocation2 + $0x3c] sm:$0x1]
        %v2299 = vshrl.u32 %v2282, 16
        %v2301 = vrot.slane %v2299, 4
        %v2302 = vshll.u32 %v2282, 16
        %v2304 = vrot.slane %v2302, 5
        %v2305 = vor.u32 %v2301, %v2304
        %v2306 = vrot.slane %v2305, 4
        %v2308 = vshll.u32 %v2283, 16
        %v2310 = vrot.slane %v2308, 5
        %v2311 = vsel %vm311, %v2306, %v2310
        %v2313 = vshrl.u32 %v2284, 16
        %v2315 = vrot.slane %v2313, 4
        %v2316 = vshll.u32 %v2284, 16
        %v2318 = vrot.slane %v2316, 5
        %v2319 = vor.u32 %v2315, %v2318
        %v2320 = vrot.slane %v2319, 4
        %v2322 = vshll.u32 %v2285, 16
        %v2324 = vrot.slane %v2322, 5
        %v2325 = vsel %vm311, %v2320, %v2324
        %v2327 = vshrl.u32 %v2286, 16
        %v2329 = vrot.slane %v2327, 4
        %v2330 = vshll.u32 %v2286, 16
        %v2332 = vrot.slane %v2330, 5
        %v2333 = vor.u32 %v2329, %v2332
        %v2334 = vrot.slane %v2333, 4
        %v2336 = vshll.u32 %v2287, 16
        %v2338 = vrot.slane %v2336, 5
        %v2339 = vsel %vm311, %v2334, %v2338
        %v2341 = vshrl.u32 %v2288, 16
        %v2343 = vrot.slane %v2341, 4
        %v2344 = vshll.u32 %v2288, 16
        %v2346 = vrot.slane %v2344, 5
        %v2347 = vor.u32 %v2343, %v2346
        %v2348 = vrot.slane %v2347, 4
        %v2350 = vshll.u32 %v2289, 16
        %v2352 = vrot.slane %v2350, 5
        %v2353 = vsel %vm311, %v2348, %v2352
        %v2355 = vshrl.u32 %v2290, 16
        %v2357 = vrot.slane %v2355, 4
        %v2358 = vshll.u32 %v2290, 16
        %v2360 = vrot.slane %v2358, 5
        %v2361 = vor.u32 %v2357, %v2360
        %v2362 = vrot.slane %v2361, 4
        %v2364 = vshll.u32 %v2291, 16
        %v2366 = vrot.slane %v2364, 5
        %v2367 = vsel %vm311, %v2362, %v2366
        %v2369 = vshrl.u32 %v2292, 16
        %v2371 = vrot.slane %v2369, 4
        %v2372 = vshll.u32 %v2292, 16
        %v2374 = vrot.slane %v2372, 5
        %v2375 = vor.u32 %v2371, %v2374
        %v2376 = vrot.slane %v2375, 4
        %v2378 = vshll.u32 %v2293, 16
        %v2380 = vrot.slane %v2378, 5
        %v2381 = vsel %vm311, %v2376, %v2380
        %v2383 = vshrl.u32 %v2294, 16
        %v2385 = vrot.slane %v2383, 4
        %v2386 = vshll.u32 %v2294, 16
        %v2388 = vrot.slane %v2386, 5
        %v2389 = vor.u32 %v2385, %v2388
        %v2390 = vrot.slane %v2389, 4
        %v2392 = vshll.u32 %v2295, 16
        %v2394 = vrot.slane %v2392, 5
        %v2395 = vsel %vm311, %v2390, %v2394
        %v2397 = vshrl.u32 %v2296, 16
        %v2399 = vrot.slane %v2397, 4
        %v2400 = vshll.u32 %v2296, 16
        %v2402 = vrot.slane %v2400, 5
        %v2403 = vor.u32 %v2399, %v2402
        %v2404 = vrot.slane %v2403, 4
        %v2406 = vshll.u32 %v2297, 16
        %v2408 = vrot.slane %v2406, 5
        %v2409 = vsel %vm311, %v2404, %v2408
        %s2410 = scalar_lea.vmem [#allocation8], 256
        %v2411 = vld [vmem:[%s2410] sm:$0xf]
        %v2412 = vld [vmem:[%s2410 + $0x4] sm:$0xf]
        %v2413 = vld [vmem:[%s2410 + $0x8] sm:$0xf]
        %v2414 = vld [vmem:[%s2410 + $0xc] sm:$0xf]
        %v2415 = vld [vmem:[%s2410 + $0x10] sm:$0xf]
        %v2416 = vld [vmem:[%s2410 + $0x14] sm:$0xf]
        %v2417 = vld [vmem:[%s2410 + $0x18] sm:$0xf]
        %v2418 = vld [vmem:[%s2410 + $0x1c] sm:$0xf]
        %v2419 = vld [vmem:[%s2410 + $0x20] sm:$0xf]
        %v2420 = vld [vmem:[%s2410 + $0x24] sm:$0xf]
        %v2421 = vld [vmem:[%s2410 + $0x28] sm:$0xf]
        %v2422 = vld [vmem:[%s2410 + $0x2c] sm:$0xf]
        %v2423 = vld [vmem:[%s2410 + $0x30] sm:$0xf]
        %v2424 = vld [vmem:[%s2410 + $0x34] sm:$0xf]
        %v2425 = vld [vmem:[%s2410 + $0x38] sm:$0xf]
        %v2426 = vld [vmem:[%s2410 + $0x3c] sm:$0xf]
        %v2427 = vld [vmem:[#allocation2] sm:$0xe]
        %v2428 = vld [vmem:[#allocation2 + $0x8] sm:$0xe]
        %v2429 = vld [vmem:[#allocation2 + $0x10] sm:$0xe]
        %v2430 = vld [vmem:[#allocation2 + $0x18] sm:$0xe]
        %v2431 = vld [vmem:[#allocation2 + $0x20] sm:$0xe]
        %v2432 = vld [vmem:[#allocation2 + $0x28] sm:$0xe]
        %v2433 = vld [vmem:[#allocation2 + $0x30] sm:$0xe]
        %v2434 = vld [vmem:[#allocation2 + $0x38] sm:$0xe]
        %vm2451 = vcmask 1042432
        %vm2452 = vcmask 1046532
        %vm2453 = vmor %vm2451, %vm2452
        %v2454 = vrot.slane %v2427, 5
        %v2455 = vrot.slane %v2454, 4
        %v2456 = vrot.slane %v2283, 5
        %v2457 = vsel %vm2453, %v2455, %v2456
        %v2458 = vrot.slane %v2428, 5
        %v2459 = vrot.slane %v2458, 4
        %v2460 = vrot.slane %v2285, 5
        %v2461 = vsel %vm2453, %v2459, %v2460
        %v2462 = vrot.slane %v2429, 5
        %v2463 = vrot.slane %v2462, 4
        %v2464 = vrot.slane %v2287, 5
        %v2465 = vsel %vm2453, %v2463, %v2464
        %v2466 = vrot.slane %v2430, 5
        %v2467 = vrot.slane %v2466, 4
        %v2468 = vrot.slane %v2289, 5
        %v2469 = vsel %vm2453, %v2467, %v2468
        %v2470 = vrot.slane %v2431, 5
        %v2471 = vrot.slane %v2470, 4
        %v2472 = vrot.slane %v2291, 5
        %v2473 = vsel %vm2453, %v2471, %v2472
        %v2474 = vrot.slane %v2432, 5
        %v2475 = vrot.slane %v2474, 4
        %v2476 = vrot.slane %v2293, 5
        %v2477 = vsel %vm2453, %v2475, %v2476
        %v2478 = vrot.slane %v2433, 5
        %v2479 = vrot.slane %v2478, 4
        %v2480 = vrot.slane %v2295, 5
        %v2481 = vsel %vm2453, %v2479, %v2480
        %v2482 = vrot.slane %v2434, 5
        %v2483 = vrot.slane %v2482, 4
        %v2484 = vrot.slane %v2297, 5
        %v2485 = vsel %vm2453, %v2483, %v2484
        %s2486 = scalar_lea.vmem [#allocation8], 320
        %v2487 = vld [vmem:[%s2486] sm:$0xf]
        %v2488 = vld [vmem:[%s2486 + $0x4] sm:$0xf]
        %v2489 = vld [vmem:[%s2486 + $0x8] sm:$0xf]
        %v2490 = vld [vmem:[%s2486 + $0xc] sm:$0xf]
        %v2491 = vld [vmem:[%s2486 + $0x10] sm:$0xf]
        %v2492 = vld [vmem:[%s2486 + $0x14] sm:$0xf]
        %v2493 = vld [vmem:[%s2486 + $0x18] sm:$0xf]
        %v2494 = vld [vmem:[%s2486 + $0x1c] sm:$0xf]
        %v2495 = vld [vmem:[%s2486 + $0x20] sm:$0xf]
        %v2496 = vld [vmem:[%s2486 + $0x24] sm:$0xf]
        %v2497 = vld [vmem:[%s2486 + $0x28] sm:$0xf]
        %v2498 = vld [vmem:[%s2486 + $0x2c] sm:$0xf]
        %v2499 = vld [vmem:[%s2486 + $0x30] sm:$0xf]
        %v2500 = vld [vmem:[%s2486 + $0x34] sm:$0xf]
        %v2501 = vld [vmem:[%s2486 + $0x38] sm:$0xf]
        %v2502 = vld [vmem:[%s2486 + $0x3c] sm:$0xf]
        %v2503 = vunpack.c.l.b16 %v2457
        %v2504 = vunpack.c.l.b16 %v2461
        %v2505 = vunpack.c.l.b16 %v2465
        %v2506 = vunpack.c.l.b16 %v2469
        %v2507 = vunpack.c.l.b16 %v2473
        %v2508 = vunpack.c.l.b16 %v2477
        %v2509 = vunpack.c.l.b16 %v2481
        %v2510 = vunpack.c.l.b16 %v2485
        %v2511 = vpack.c.b16 %v2504, %v2503
        %v2512 = vpack.c.b16 %v2506, %v2505
        %v2513 = vpack.c.b16 %v2508, %v2507
        %v2514 = vpack.c.b16 %v2510, %v2509
        %v2535 = vunpack.c.l.b16 %v2487
        %v2536 = vunpack.c.l.b16 %v2488
        %v2537 = vunpack.c.l.b16 %v2489
        %v2538 = vunpack.c.l.b16 %v2490
        %v2539 = vunpack.c.l.b16 %v2491
        %v2540 = vunpack.c.l.b16 %v2492
        %v2541 = vunpack.c.l.b16 %v2493
        %v2542 = vunpack.c.l.b16 %v2494
        %v2543 = vunpack.c.l.b16 %v2495
        %v2544 = vunpack.c.l.b16 %v2496
        %v2545 = vunpack.c.l.b16 %v2497
        %v2546 = vunpack.c.l.b16 %v2498
        %v2547 = vunpack.c.l.b16 %v2499
        %v2548 = vunpack.c.l.b16 %v2500
        %v2549 = vunpack.c.l.b16 %v2501
        %v2550 = vunpack.c.l.b16 %v2502
        %v2551 = vpack.c.b16 %v2536, %v2535
        %v2552 = vpack.c.b16 %v2538, %v2537
        %v2553 = vpack.c.b16 %v2540, %v2539
        %v2554 = vpack.c.b16 %v2542, %v2541
        %v2555 = vpack.c.b16 %v2544, %v2543
        %v2556 = vpack.c.b16 %v2546, %v2545
        %v2557 = vpack.c.b16 %v2548, %v2547
        %v2558 = vpack.c.b16 %v2550, %v2549
        %2567 = vmatprep.subr.bf16.mxu0 0
        %2568 = vmatpush1.bf16.msra.mxu0 %v2551
        %2569 = vmatprep.subr.bf16.mxu0 0
        %2570 = vmatpush1.bf16.msra.mxu0 %v2552
        %2571 = vmatprep.subr.bf16.mxu0 0
        %2572 = vmatpush1.bf16.msra.mxu0 %v2553
        %2573 = vmatprep.subr.bf16.mxu0 0
        %2574 = vmatpush1.bf16.msra.mxu0 %v2554
        %2575 = vmatprep.subr.bf16.mxu0 0
        %2576 = vmatpush1.bf16.msra.mxu0 %v2555
        %2577 = vmatprep.subr.bf16.mxu0 0
        %2578 = vmatpush1.bf16.msra.mxu0 %v2556
        %2579 = vmatprep.subr.bf16.mxu0 0
        %2580 = vmatpush1.bf16.msra.mxu0 %v2557
        %2581 = vmatprep.subr.bf16.mxu0 0
        %2582 = vmatpush1.bf16.msra.mxu0 %v2558
        %2583 = vmatprep.subr.bf16.mxu0 0
        %2584 = vmatpush1.bf16.msra.mxu0 0
        %2585 = vmatprep.subr.bf16.mxu0 0
        %2586 = vmatpush1.bf16.msra.mxu0 0
        %2587 = vmatprep.subr.bf16.mxu0 0
        %2588 = vmatpush1.bf16.msra.mxu0 0
        %2589 = vmatprep.subr.bf16.mxu0 0
        %2590 = vmatpush1.bf16.msra.mxu0 0
        %2591 = vmatprep.subr.bf16.mxu0 0
        %2592 = vmatpush1.bf16.msra.mxu0 0
        %2593 = vmatprep.subr.bf16.mxu0 0
        %2594 = vmatpush1.bf16.msra.mxu0 0
        %2595 = vmatprep.subr.bf16.mxu0 0
        %2596 = vmatpush1.bf16.msra.mxu0 0
        %2597 = vmatprep.subr.bf16.mxu0 0
        %2598 = vmatpush1.bf16.msra.mxu0 0
        %2599 = vmatprep.mubr.bf16.mxu0 0
        %2600 = vmatmul.mubr.bf16.gmra.mrb[0].mxu0 %v2511
        %v2601 = vpop.f32.mrb[0].mxu0
        %v2602 = vadd.f32 0.0, %v2601
        %v2603 = vpop.f32.mrb[0].mxu0
        %v2604 = vpop.f32.mrb[0].mxu0
        %v2605 = vadd.f32 0.0, %v2604
        %v2606 = vpop.f32.mrb[0].mxu0
        %2607 = vmatprep.mubr.bf16.mxu0 0
        %2608 = vmatmul.mubr.bf16.gmra.mrb[0].mxu0 %v2512
        %v2609 = vpop.f32.mrb[0].mxu0
        %v2610 = vadd.f32 0.0, %v2609
        %v2611 = vpop.f32.mrb[0].mxu0
        %v2612 = vpop.f32.mrb[0].mxu0
        %v2613 = vadd.f32 0.0, %v2612
        %v2614 = vpop.f32.mrb[0].mxu0
        %2615 = vmatprep.mubr.bf16.mxu0 0
        %2616 = vmatmul.mubr.bf16.gmra.mrb[0].mxu0 %v2513
        %v2617 = vpop.f32.mrb[0].mxu0
        %v2618 = vadd.f32 0.0, %v2617
        %v2619 = vpop.f32.mrb[0].mxu0
        %v2620 = vpop.f32.mrb[0].mxu0
        %v2621 = vadd.f32 0.0, %v2620
        %v2622 = vpop.f32.mrb[0].mxu0
        %2623 = vmatprep.mubr.bf16.mxu0 0
        %2624 = vmatmul.mubr.bf16.gmra.mrb[0].mxu0 %v2514
        %v2625 = vpop.f32.mrb[0].mxu0
        %v2626 = vadd.f32 0.0, %v2625
        %v2627 = vpop.f32.mrb[0].mxu0
        %v2628 = vpop.f32.mrb[0].mxu0
        %v2629 = vadd.f32 0.0, %v2628
        %v2630 = vpop.f32.mrb[0].mxu0
        %2631 = vdwg.mxu0
        %v2632 = vunpack.c.l.b16 %v2311
        %v2633 = vunpack.c.l.b16 %v2325
        %v2634 = vunpack.c.l.b16 %v2339
        %v2635 = vunpack.c.l.b16 %v2353
        %v2636 = vunpack.c.l.b16 %v2367
        %v2637 = vunpack.c.l.b16 %v2381
        %v2638 = vunpack.c.l.b16 %v2395
        %v2639 = vunpack.c.l.b16 %v2409
        %v2640 = vpack.c.b16 %v2633, %v2632
        %v2641 = vpack.c.b16 %v2635, %v2634
        %v2642 = vpack.c.b16 %v2637, %v2636
        %v2643 = vpack.c.b16 %v2639, %v2638
        %v2664 = vunpack.c.l.b16 %v2411
        %v2665 = vunpack.c.l.b16 %v2412
        %v2666 = vunpack.c.l.b16 %v2413
        %v2667 = vunpack.c.l.b16 %v2414
        %v2668 = vunpack.c.l.b16 %v2415
        %v2669 = vunpack.c.l.b16 %v2416
        %v2670 = vunpack.c.l.b16 %v2417
        %v2671 = vunpack.c.l.b16 %v2418
        %v2672 = vunpack.c.l.b16 %v2419
        %v2673 = vunpack.c.l.b16 %v2420
        %v2674 = vunpack.c.l.b16 %v2421
        %v2675 = vunpack.c.l.b16 %v2422
        %v2676 = vunpack.c.l.b16 %v2423
        %v2677 = vunpack.c.l.b16 %v2424
        %v2678 = vunpack.c.l.b16 %v2425
        %v2679 = vunpack.c.l.b16 %v2426
        %v2680 = vpack.c.b16 %v2665, %v2664
        %v2681 = vpack.c.b16 %v2667, %v2666
        %v2682 = vpack.c.b16 %v2669, %v2668
        %v2683 = vpack.c.b16 %v2671, %v2670
        %v2684 = vpack.c.b16 %v2673, %v2672
        %v2685 = vpack.c.b16 %v2675, %v2674
        %v2686 = vpack.c.b16 %v2677, %v2676
        %v2687 = vpack.c.b16 %v2679, %v2678
        %2696 = vmatprep.subr.bf16.mxu0 0
        %2697 = vmatpush1.bf16.msra.mxu0 %v2680
        %2698 = vmatprep.subr.bf16.mxu0 0
        %2699 = vmatpush1.bf16.msra.mxu0 %v2681
        %2700 = vmatprep.subr.bf16.mxu0 0
        %2701 = vmatpush1.bf16.msra.mxu0 %v2682
        %2702 = vmatprep.subr.bf16.mxu0 0
        %2703 = vmatpush1.bf16.msra.mxu0 %v2683
        %2704 = vmatprep.subr.bf16.mxu0 0
        %2705 = vmatpush1.bf16.msra.mxu0 %v2684
        %2706 = vmatprep.subr.bf16.mxu0 0
        %2707 = vmatpush1.bf16.msra.mxu0 %v2685
        %2708 = vmatprep.subr.bf16.mxu0 0
        %2709 = vmatpush1.bf16.msra.mxu0 %v2686
        %2710 = vmatprep.subr.bf16.mxu0 0
        %2711 = vmatpush1.bf16.msra.mxu0 %v2687
        %2712 = vmatprep.subr.bf16.mxu0 0
        %2713 = vmatpush1.bf16.msra.mxu0 0
        %2714 = vmatprep.subr.bf16.mxu0 0
        %2715 = vmatpush1.bf16.msra.mxu0 0
        %2716 = vmatprep.subr.bf16.mxu0 0
        %2717 = vmatpush1.bf16.msra.mxu0 0
        %2718 = vmatprep.subr.bf16.mxu0 0
        %2719 = vmatpush1.bf16.msra.mxu0 0
        %2720 = vmatprep.subr.bf16.mxu0 0
        %2721 = vmatpush1.bf16.msra.mxu0 0
        %2722 = vmatprep.subr.bf16.mxu0 0
        %2723 = vmatpush1.bf16.msra.mxu0 0
        %2724 = vmatprep.subr.bf16.mxu0 0
        %2725 = vmatpush1.bf16.msra.mxu0 0
        %2726 = vmatprep.subr.bf16.mxu0 0
        %2727 = vmatpush1.bf16.msra.mxu0 0
        %2728 = vmatprep.mubr.bf16.mxu0 0
        %2729 = vmatmul.mubr.bf16.gmra.mrb[0].mxu0 %v2640
        %v2730 = vpop.f32.mrb[0].mxu0
        %v2731 = vadd.f32 %v2602, %v2730
        %v2732 = vpop.f32.mrb[0].mxu0
        %v2733 = vpop.f32.mrb[0].mxu0
        %v2734 = vadd.f32 %v2605, %v2733
        %v2735 = vpop.f32.mrb[0].mxu0
        %2736 = vmatprep.mubr.bf16.mxu0 0
        %2737 = vmatmul.mubr.bf16.gmra.mrb[0].mxu0 %v2641
        %v2738 = vpop.f32.mrb[0].mxu0
        %v2739 = vadd.f32 %v2610, %v2738
        %v2740 = vpop.f32.mrb[0].mxu0
        %v2741 = vpop.f32.mrb[0].mxu0
        %v2742 = vadd.f32 %v2613, %v2741
        %v2743 = vpop.f32.mrb[0].mxu0
        %2744 = vmatprep.mubr.bf16.mxu0 0
        %2745 = vmatmul.mubr.bf16.gmra.mrb[0].mxu0 %v2642
        %v2746 = vpop.f32.mrb[0].mxu0
        %v2747 = vadd.f32 %v2618, %v2746
        %v2748 = vpop.f32.mrb[0].mxu0
        %v2749 = vpop.f32.mrb[0].mxu0
        %v2750 = vadd.f32 %v2621, %v2749
        %v2751 = vpop.f32.mrb[0].mxu0
        %2752 = vmatprep.mubr.bf16.mxu0 0
        %2753 = vmatmul.mubr.bf16.gmra.mrb[0].mxu0 %v2643
        %v2754 = vpop.f32.mrb[0].mxu0
        %v2755 = vadd.f32 %v2626, %v2754
        %v2756 = vpop.f32.mrb[0].mxu0
        %v2757 = vpop.f32.mrb[0].mxu0
        %v2758 = vadd.f32 %v2629, %v2757
        %v2759 = vpop.f32.mrb[0].mxu0
        %2760 = vdwg.mxu0
        %v2761 = vld [vmem:[%s1272] sm:$0xf]
        %v2762 = vld [vmem:[%s1272 + $0x4] sm:$0x1]
        %v2763 = vld [vmem:[%s1272 + $0x8] sm:$0xf]
        %v2764 = vld [vmem:[%s1272 + $0xc] sm:$0x1]
        %v2765 = vld [vmem:[%s1272 + $0x10] sm:$0xf]
        %v2766 = vld [vmem:[%s1272 + $0x14] sm:$0x1]
        %v2767 = vld [vmem:[%s1272 + $0x18] sm:$0xf]
        %v2768 = vld [vmem:[%s1272 + $0x1c] sm:$0x1]
        %v2769 = vld [vmem:[%s1272 + $0x20] sm:$0xf]
        %v2770 = vld [vmem:[%s1272 + $0x24] sm:$0x1]
        %v2771 = vld [vmem:[%s1272 + $0x28] sm:$0xf]
        %v2772 = vld [vmem:[%s1272 + $0x2c] sm:$0x1]
        %v2773 = vld [vmem:[%s1272 + $0x30] sm:$0xf]
        %v2774 = vld [vmem:[%s1272 + $0x34] sm:$0x1]
        %v2775 = vld [vmem:[%s1272 + $0x38] sm:$0xf]
        %v2776 = vld [vmem:[%s1272 + $0x3c] sm:$0x1]
        %v2778 = vshrl.u32 %v2761, 16
        %v2780 = vrot.slane %v2778, 4
        %v2781 = vshll.u32 %v2761, 16
        %v2783 = vrot.slane %v2781, 5
        %v2784 = vor.u32 %v2780, %v2783
        %v2785 = vrot.slane %v2784, 4
        %v2787 = vshll.u32 %v2762, 16
        %v2789 = vrot.slane %v2787, 5
        %v2790 = vsel %vm311, %v2785, %v2789
        %v2792 = vshrl.u32 %v2763, 16
        %v2794 = vrot.slane %v2792, 4
        %v2795 = vshll.u32 %v2763, 16
        %v2797 = vrot.slane %v2795, 5
        %v2798 = vor.u32 %v2794, %v2797
        %v2799 = vrot.slane %v2798, 4
        %v2801 = vshll.u32 %v2764, 16
        %v2803 = vrot.slane %v2801, 5
        %v2804 = vsel %vm311, %v2799, %v2803
        %v2806 = vshrl.u32 %v2765, 16
        %v2808 = vrot.slane %v2806, 4
        %v2809 = vshll.u32 %v2765, 16
        %v2811 = vrot.slane %v2809, 5
        %v2812 = vor.u32 %v2808, %v2811
        %v2813 = vrot.slane %v2812, 4
        %v2815 = vshll.u32 %v2766, 16
        %v2817 = vrot.slane %v2815, 5
        %v2818 = vsel %vm311, %v2813, %v2817
        %v2820 = vshrl.u32 %v2767, 16
        %v2822 = vrot.slane %v2820, 4
        %v2823 = vshll.u32 %v2767, 16
        %v2825 = vrot.slane %v2823, 5
        %v2826 = vor.u32 %v2822, %v2825
        %v2827 = vrot.slane %v2826, 4
        %v2829 = vshll.u32 %v2768, 16
        %v2831 = vrot.slane %v2829, 5
        %v2832 = vsel %vm311, %v2827, %v2831
        %v2834 = vshrl.u32 %v2769, 16
        %v2836 = vrot.slane %v2834, 4
        %v2837 = vshll.u32 %v2769, 16
        %v2839 = vrot.slane %v2837, 5
        %v2840 = vor.u32 %v2836, %v2839
        %v2841 = vrot.slane %v2840, 4
        %v2843 = vshll.u32 %v2770, 16
        %v2845 = vrot.slane %v2843, 5
        %v2846 = vsel %vm311, %v2841, %v2845
        %v2848 = vshrl.u32 %v2771, 16
        %v2850 = vrot.slane %v2848, 4
        %v2851 = vshll.u32 %v2771, 16
        %v2853 = vrot.slane %v2851, 5
        %v2854 = vor.u32 %v2850, %v2853
        %v2855 = vrot.slane %v2854, 4
        %v2857 = vshll.u32 %v2772, 16
        %v2859 = vrot.slane %v2857, 5
        %v2860 = vsel %vm311, %v2855, %v2859
        %v2862 = vshrl.u32 %v2773, 16
        %v2864 = vrot.slane %v2862, 4
        %v2865 = vshll.u32 %v2773, 16
        %v2867 = vrot.slane %v2865, 5
        %v2868 = vor.u32 %v2864, %v2867
        %v2869 = vrot.slane %v2868, 4
        %v2871 = vshll.u32 %v2774, 16
        %v2873 = vrot.slane %v2871, 5
        %v2874 = vsel %vm311, %v2869, %v2873
        %v2876 = vshrl.u32 %v2775, 16
        %v2878 = vrot.slane %v2876, 4
        %v2879 = vshll.u32 %v2775, 16
        %v2881 = vrot.slane %v2879, 5
        %v2882 = vor.u32 %v2878, %v2881
        %v2883 = vrot.slane %v2882, 4
        %v2885 = vshll.u32 %v2776, 16
        %v2887 = vrot.slane %v2885, 5
        %v2888 = vsel %vm311, %v2883, %v2887
        %s2889 = scalar_lea.vmem [#allocation8], 384
        %v2890 = vld [vmem:[%s2889] sm:$0xf]
        %v2891 = vld [vmem:[%s2889 + $0x4] sm:$0xf]
        %v2892 = vld [vmem:[%s2889 + $0x8] sm:$0xf]
        %v2893 = vld [vmem:[%s2889 + $0xc] sm:$0xf]
        %v2894 = vld [vmem:[%s2889 + $0x10] sm:$0xf]
        %v2895 = vld [vmem:[%s2889 + $0x14] sm:$0xf]
        %v2896 = vld [vmem:[%s2889 + $0x18] sm:$0xf]
        %v2897 = vld [vmem:[%s2889 + $0x1c] sm:$0xf]
        %v2898 = vld [vmem:[%s2889 + $0x20] sm:$0xf]
        %v2899 = vld [vmem:[%s2889 + $0x24] sm:$0xf]
        %v2900 = vld [vmem:[%s2889 + $0x28] sm:$0xf]
        %v2901 = vld [vmem:[%s2889 + $0x2c] sm:$0xf]
        %v2902 = vld [vmem:[%s2889 + $0x30] sm:$0xf]
        %v2903 = vld [vmem:[%s2889 + $0x34] sm:$0xf]
        %v2904 = vld [vmem:[%s2889 + $0x38] sm:$0xf]
        %v2905 = vld [vmem:[%s2889 + $0x3c] sm:$0xf]
        %v2906 = vunpack.c.l.b16 %v2790
        %v2907 = vunpack.c.l.b16 %v2804
        %v2908 = vunpack.c.l.b16 %v2818
        %v2909 = vunpack.c.l.b16 %v2832
        %v2910 = vunpack.c.l.b16 %v2846
        %v2911 = vunpack.c.l.b16 %v2860
        %v2912 = vunpack.c.l.b16 %v2874
        %v2913 = vunpack.c.l.b16 %v2888
        %v2914 = vpack.c.b16 %v2907, %v2906
        %v2915 = vpack.c.b16 %v2909, %v2908
        %v2916 = vpack.c.b16 %v2911, %v2910
        %v2917 = vpack.c.b16 %v2913, %v2912
        %v2938 = vunpack.c.l.b16 %v2890
        %v2939 = vunpack.c.l.b16 %v2891
        %v2940 = vunpack.c.l.b16 %v2892
        %v2941 = vunpack.c.l.b16 %v2893
        %v2942 = vunpack.c.l.b16 %v2894
        %v2943 = vunpack.c.l.b16 %v2895
        %v2944 = vunpack.c.l.b16 %v2896
        %v2945 = vunpack.c.l.b16 %v2897
        %v2946 = vunpack.c.l.b16 %v2898
        %v2947 = vunpack.c.l.b16 %v2899
        %v2948 = vunpack.c.l.b16 %v2900
        %v2949 = vunpack.c.l.b16 %v2901
        %v2950 = vunpack.c.l.b16 %v2902
        %v2951 = vunpack.c.l.b16 %v2903
        %v2952 = vunpack.c.l.b16 %v2904
        %v2953 = vunpack.c.l.b16 %v2905
        %v2954 = vpack.c.b16 %v2939, %v2938
        %v2955 = vpack.c.b16 %v2941, %v2940
        %v2956 = vpack.c.b16 %v2943, %v2942
        %v2957 = vpack.c.b16 %v2945, %v2944
        %v2958 = vpack.c.b16 %v2947, %v2946
        %v2959 = vpack.c.b16 %v2949, %v2948
        %v2960 = vpack.c.b16 %v2951, %v2950
        %v2961 = vpack.c.b16 %v2953, %v2952
        %2970 = vmatprep.subr.bf16.mxu0 0
        %2971 = vmatpush1.bf16.msra.mxu0 %v2954
        %2972 = vmatprep.subr.bf16.mxu0 0
        %2973 = vmatpush1.bf16.msra.mxu0 %v2955
        %2974 = vmatprep.subr.bf16.mxu0 0
        %2975 = vmatpush1.bf16.msra.mxu0 %v2956
        %2976 = vmatprep.subr.bf16.mxu0 0
        %2977 = vmatpush1.bf16.msra.mxu0 %v2957
        %2978 = vmatprep.subr.bf16.mxu0 0
        %2979 = vmatpush1.bf16.msra.mxu0 %v2958
        %2980 = vmatprep.subr.bf16.mxu0 0
        %2981 = vmatpush1.bf16.msra.mxu0 %v2959
        %2982 = vmatprep.subr.bf16.mxu0 0
        %2983 = vmatpush1.bf16.msra.mxu0 %v2960
        %2984 = vmatprep.subr.bf16.mxu0 0
        %2985 = vmatpush1.bf16.msra.mxu0 %v2961
        %2986 = vmatprep.subr.bf16.mxu0 0
        %2987 = vmatpush1.bf16.msra.mxu0 0
        %2988 = vmatprep.subr.bf16.mxu0 0
        %2989 = vmatpush1.bf16.msra.mxu0 0
        %2990 = vmatprep.subr.bf16.mxu0 0
        %2991 = vmatpush1.bf16.msra.mxu0 0
        %2992 = vmatprep.subr.bf16.mxu0 0
        %2993 = vmatpush1.bf16.msra.mxu0 0
        %2994 = vmatprep.subr.bf16.mxu0 0
        %2995 = vmatpush1.bf16.msra.mxu0 0
        %2996 = vmatprep.subr.bf16.mxu0 0
        %2997 = vmatpush1.bf16.msra.mxu0 0
        %2998 = vmatprep.subr.bf16.mxu0 0
        %2999 = vmatpush1.bf16.msra.mxu0 0
        %3000 = vmatprep.subr.bf16.mxu0 0
        %3001 = vmatpush1.bf16.msra.mxu0 0
        %3002 = vmatprep.mubr.bf16.mxu0 0
        %3003 = vmatmul.mubr.bf16.gmra.mrb[0].mxu0 %v2914
        %v3004 = vpop.f32.mrb[0].mxu0
        %v3005 = vadd.f32 0.0, %v3004
        %v3006 = vpop.f32.mrb[0].mxu0
        %v3007 = vpop.f32.mrb[0].mxu0
        %v3008 = vadd.f32 0.0, %v3007
        %v3009 = vpop.f32.mrb[0].mxu0
        %3010 = vmatprep.mubr.bf16.mxu0 0
        %3011 = vmatmul.mubr.bf16.gmra.mrb[0].mxu0 %v2915
        %v3012 = vpop.f32.mrb[0].mxu0
        %v3013 = vadd.f32 0.0, %v3012
        %v3014 = vpop.f32.mrb[0].mxu0
        %v3015 = vpop.f32.mrb[0].mxu0
        %v3016 = vadd.f32 0.0, %v3015
        %v3017 = vpop.f32.mrb[0].mxu0
        %3018 = vmatprep.mubr.bf16.mxu0 0
        %3019 = vmatmul.mubr.bf16.gmra.mrb[0].mxu0 %v2916
        %v3020 = vpop.f32.mrb[0].mxu0
        %v3021 = vadd.f32 0.0, %v3020
        %v3022 = vpop.f32.mrb[0].mxu0
        %v3023 = vpop.f32.mrb[0].mxu0
        %v3024 = vadd.f32 0.0, %v3023
        %v3025 = vpop.f32.mrb[0].mxu0
        %3026 = vmatprep.mubr.bf16.mxu0 0
        %3027 = vmatmul.mubr.bf16.gmra.mrb[0].mxu0 %v2917
        %v3028 = vpop.f32.mrb[0].mxu0
        %v3029 = vadd.f32 0.0, %v3028
        %v3030 = vpop.f32.mrb[0].mxu0
        %v3031 = vpop.f32.mrb[0].mxu0
        %v3032 = vadd.f32 0.0, %v3031
        %v3033 = vpop.f32.mrb[0].mxu0
        %3034 = vdwg.mxu0
        %v3035 = vadd.f32 %v2731, %v3005
        %v3036 = vadd.f32 %v2734, %v3008
        %v3037 = vadd.f32 %v2739, %v3013
        %v3038 = vadd.f32 %v2742, %v3016
        %v3039 = vadd.f32 %v2747, %v3021
        %v3040 = vadd.f32 %v2750, %v3024
        %v3041 = vadd.f32 %v2755, %v3029
        %v3042 = vadd.f32 %v2758, %v3032
        %v3043 = vld [vmem:[%s1272] sm:$0xe]
        %v3044 = vld [vmem:[%s1272 + $0x8] sm:$0xe]
        %v3045 = vld [vmem:[%s1272 + $0x10] sm:$0xe]
        %v3046 = vld [vmem:[%s1272 + $0x18] sm:$0xe]
        %v3047 = vld [vmem:[%s1272 + $0x20] sm:$0xe]
        %v3048 = vld [vmem:[%s1272 + $0x28] sm:$0xe]
        %v3049 = vld [vmem:[%s1272 + $0x30] sm:$0xe]
        %v3050 = vld [vmem:[%s1272 + $0x38] sm:$0xe]
        %v3067 = vrot.slane %v3043, 5
        %v3068 = vrot.slane %v3067, 4
        %v3069 = vrot.slane %v2762, 5
        %v3070 = vsel %vm2453, %v3068, %v3069
        %v3071 = vrot.slane %v3044, 5
        %v3072 = vrot.slane %v3071, 4
        %v3073 = vrot.slane %v2764, 5
        %v3074 = vsel %vm2453, %v3072, %v3073
        %v3075 = vrot.slane %v3045, 5
        %v3076 = vrot.slane %v3075, 4
        %v3077 = vrot.slane %v2766, 5
        %v3078 = vsel %vm2453, %v3076, %v3077
        %v3079 = vrot.slane %v3046, 5
        %v3080 = vrot.slane %v3079, 4
        %v3081 = vrot.slane %v2768, 5
        %v3082 = vsel %vm2453, %v3080, %v3081
        %v3083 = vrot.slane %v3047, 5
        %v3084 = vrot.slane %v3083, 4
        %v3085 = vrot.slane %v2770, 5
        %v3086 = vsel %vm2453, %v3084, %v3085
        %v3087 = vrot.slane %v3048, 5
        %v3088 = vrot.slane %v3087, 4
        %v3089 = vrot.slane %v2772, 5
        %v3090 = vsel %vm2453, %v3088, %v3089
        %v3091 = vrot.slane %v3049, 5
        %v3092 = vrot.slane %v3091, 4
        %v3093 = vrot.slane %v2774, 5
        %v3094 = vsel %vm2453, %v3092, %v3093
        %v3095 = vrot.slane %v3050, 5
        %v3096 = vrot.slane %v3095, 4
        %v3097 = vrot.slane %v2776, 5
        %v3098 = vsel %vm2453, %v3096, %v3097
        %s3099 = scalar_lea.vmem [#allocation8], 448
        %v3100 = vld [vmem:[%s3099] sm:$0xf]
        %v3101 = vld [vmem:[%s3099 + $0x4] sm:$0xf]
        %v3102 = vld [vmem:[%s3099 + $0x8] sm:$0xf]
        %v3103 = vld [vmem:[%s3099 + $0xc] sm:$0xf]
        %v3104 = vld [vmem:[%s3099 + $0x10] sm:$0xf]
        %v3105 = vld [vmem:[%s3099 + $0x14] sm:$0xf]
        %v3106 = vld [vmem:[%s3099 + $0x18] sm:$0xf]
        %v3107 = vld [vmem:[%s3099 + $0x1c] sm:$0xf]
        %v3108 = vld [vmem:[%s3099 + $0x20] sm:$0xf]
        %v3109 = vld [vmem:[%s3099 + $0x24] sm:$0xf]
        %v3110 = vld [vmem:[%s3099 + $0x28] sm:$0xf]
        %v3111 = vld [vmem:[%s3099 + $0x2c] sm:$0xf]
        %v3112 = vld [vmem:[%s3099 + $0x30] sm:$0xf]
        %v3113 = vld [vmem:[%s3099 + $0x34] sm:$0xf]
        %v3114 = vld [vmem:[%s3099 + $0x38] sm:$0xf]
        %v3115 = vld [vmem:[%s3099 + $0x3c] sm:$0xf]
        %v3116 = vunpack.c.l.b16 %v3070
        %v3117 = vunpack.c.l.b16 %v3074
        %v3118 = vunpack.c.l.b16 %v3078
        %v3119 = vunpack.c.l.b16 %v3082
        %v3120 = vunpack.c.l.b16 %v3086
        %v3121 = vunpack.c.l.b16 %v3090
        %v3122 = vunpack.c.l.b16 %v3094
        %v3123 = vunpack.c.l.b16 %v3098
        %v3124 = vpack.c.b16 %v3117, %v3116
        %v3125 = vpack.c.b16 %v3119, %v3118
        %v3126 = vpack.c.b16 %v3121, %v3120
        %v3127 = vpack.c.b16 %v3123, %v3122
        %v3148 = vunpack.c.l.b16 %v3100
        %v3149 = vunpack.c.l.b16 %v3101
        %v3150 = vunpack.c.l.b16 %v3102
        %v3151 = vunpack.c.l.b16 %v3103
        %v3152 = vunpack.c.l.b16 %v3104
        %v3153 = vunpack.c.l.b16 %v3105
        %v3154 = vunpack.c.l.b16 %v3106
        %v3155 = vunpack.c.l.b16 %v3107
        %v3156 = vunpack.c.l.b16 %v3108
        %v3157 = vunpack.c.l.b16 %v3109
        %v3158 = vunpack.c.l.b16 %v3110
        %v3159 = vunpack.c.l.b16 %v3111
        %v3160 = vunpack.c.l.b16 %v3112
        %v3161 = vunpack.c.l.b16 %v3113
        %v3162 = vunpack.c.l.b16 %v3114
        %v3163 = vunpack.c.l.b16 %v3115
        %v3164 = vpack.c.b16 %v3149, %v3148
        %v3165 = vpack.c.b16 %v3151, %v3150
        %v3166 = vpack.c.b16 %v3153, %v3152
        %v3167 = vpack.c.b16 %v3155, %v3154
        %v3168 = vpack.c.b16 %v3157, %v3156
        %v3169 = vpack.c.b16 %v3159, %v3158
        %v3170 = vpack.c.b16 %v3161, %v3160
        %v3171 = vpack.c.b16 %v3163, %v3162
        %3180 = vmatprep.subr.bf16.mxu0 0
        %3181 = vmatpush1.bf16.msra.mxu0 %v3164
        %3182 = vmatprep.subr.bf16.mxu0 0
        %3183 = vmatpush1.bf16.msra.mxu0 %v3165
        %3184 = vmatprep.subr.bf16.mxu0 0
        %3185 = vmatpush1.bf16.msra.mxu0 %v3166
        %3186 = vmatprep.subr.bf16.mxu0 0
        %3187 = vmatpush1.bf16.msra.mxu0 %v3167
        %3188 = vmatprep.subr.bf16.mxu0 0
        %3189 = vmatpush1.bf16.msra.mxu0 %v3168
        %3190 = vmatprep.subr.bf16.mxu0 0
        %3191 = vmatpush1.bf16.msra.mxu0 %v3169
        %3192 = vmatprep.subr.bf16.mxu0 0
        %3193 = vmatpush1.bf16.msra.mxu0 %v3170
        %3194 = vmatprep.subr.bf16.mxu0 0
        %3195 = vmatpush1.bf16.msra.mxu0 %v3171
        %3196 = vmatprep.subr.bf16.mxu0 0
        %3197 = vmatpush1.bf16.msra.mxu0 0
        %3198 = vmatprep.subr.bf16.mxu0 0
        %3199 = vmatpush1.bf16.msra.mxu0 0
        %3200 = vmatprep.subr.bf16.mxu0 0
        %3201 = vmatpush1.bf16.msra.mxu0 0
        %3202 = vmatprep.subr.bf16.mxu0 0
        %3203 = vmatpush1.bf16.msra.mxu0 0
        %3204 = vmatprep.subr.bf16.mxu0 0
        %3205 = vmatpush1.bf16.msra.mxu0 0
        %3206 = vmatprep.subr.bf16.mxu0 0
        %3207 = vmatpush1.bf16.msra.mxu0 0
        %3208 = vmatprep.subr.bf16.mxu0 0
        %3209 = vmatpush1.bf16.msra.mxu0 0
        %3210 = vmatprep.subr.bf16.mxu0 0
        %3211 = vmatpush1.bf16.msra.mxu0 0
        %3212 = vmatprep.mubr.bf16.mxu0 0
        %3213 = vmatmul.mubr.bf16.gmra.mrb[0].mxu0 %v3124
        %v3214 = vpop.f32.mrb[0].mxu0
        %v3215 = vadd.f32 0.0, %v3214
        %v3216 = vpop.f32.mrb[0].mxu0
        %v3217 = vpop.f32.mrb[0].mxu0
        %v3218 = vadd.f32 0.0, %v3217
        %v3219 = vpop.f32.mrb[0].mxu0
        %3220 = vmatprep.mubr.bf16.mxu0 0
        %3221 = vmatmul.mubr.bf16.gmra.mrb[0].mxu0 %v3125
        %v3222 = vpop.f32.mrb[0].mxu0
        %v3223 = vadd.f32 0.0, %v3222
        %v3224 = vpop.f32.mrb[0].mxu0
        %v3225 = vpop.f32.mrb[0].mxu0
        %v3226 = vadd.f32 0.0, %v3225
        %v3227 = vpop.f32.mrb[0].mxu0
        %3228 = vmatprep.mubr.bf16.mxu0 0
        %3229 = vmatmul.mubr.bf16.gmra.mrb[0].mxu0 %v3126
        %v3230 = vpop.f32.mrb[0].mxu0
        %v3231 = vadd.f32 0.0, %v3230
        %v3232 = vpop.f32.mrb[0].mxu0
        %v3233 = vpop.f32.mrb[0].mxu0
        %v3234 = vadd.f32 0.0, %v3233
        %v3235 = vpop.f32.mrb[0].mxu0
        %3236 = vmatprep.mubr.bf16.mxu0 0
        %3237 = vmatmul.mubr.bf16.gmra.mrb[0].mxu0 %v3127
        %v3238 = vpop.f32.mrb[0].mxu0
        %v3239 = vadd.f32 0.0, %v3238
        %v3240 = vpop.f32.mrb[0].mxu0
        %v3241 = vpop.f32.mrb[0].mxu0
        %v3242 = vadd.f32 0.0, %v3241
        %v3243 = vpop.f32.mrb[0].mxu0
        %3244 = vdwg.mxu0
        %v3245 = vadd.f32 %v3035, %v3215
        %v3246 = vadd.f32 %v3036, %v3218
        %v3247 = vadd.f32 %v3037, %v3223
        %v3248 = vadd.f32 %v3038, %v3226
        %v3249 = vadd.f32 %v3039, %v3231
        %v3250 = vadd.f32 %v3040, %v3234
        %v3251 = vadd.f32 %v3041, %v3239
        %v3252 = vadd.f32 %v3042, %v3242
        %v3253 = vpack.c.bf16 %v3246, %v3245
        %v3254 = vpack.c.bf16 %v3248, %v3247
        %v3255 = vpack.c.bf16 %v3250, %v3249
        %v3256 = vpack.c.bf16 %v3252, %v3251
        %v3261 = vunpack.c.l.b16 %v3253
        %v3262 = vunpack.c.h.b16 %v3253
        %v3263 = vunpack.c.l.b16 %v3254
        %v3264 = vunpack.c.h.b16 %v3254
        %v3265 = vunpack.c.l.b16 %v3255
        %v3266 = vunpack.c.h.b16 %v3255
        %v3267 = vunpack.c.l.b16 %v3256
        %v3268 = vunpack.c.h.b16 %v3256
        %v3269 = vpack.c.b16 %v3261, %v3261
        %v3270 = vpack.c.b16 %v3262, %v3262
        %v3271 = vpack.c.b16 %v3263, %v3263
        %v3272 = vpack.c.b16 %v3264, %v3264
        %v3273 = vpack.c.b16 %v3265, %v3265
        %v3274 = vpack.c.b16 %v3266, %v3266
        %v3275 = vpack.c.b16 %v3267, %v3267
        %v3276 = vpack.c.b16 %v3268, %v3268
        %s3285 = scalar_lea.vmem %s248, 32 [#allocation9]
        %3286 = vst [vmem:[%s3285] sm:$0xf] %v3269
        %3287 = vst [vmem:[%s3285 + $0x4] sm:$0xf] %v3270
        %3288 = vst [vmem:[%s3285 + $0x8] sm:$0xf] %v3271
        %3289 = vst [vmem:[%s3285 + $0xc] sm:$0xf] %v3272
        %3290 = vst [vmem:[%s3285 + $0x10] sm:$0xf] %v3273
        %3291 = vst [vmem:[%s3285 + $0x14] sm:$0xf] %v3274
        %3292 = vst [vmem:[%s3285 + $0x18] sm:$0xf] %v3275
        %3293 = vst [vmem:[%s3285 + $0x1c] sm:$0xf] %v3276
        %v3294 = vadd.f32 %v3245, %v3246
        %v3295 = vadd.f32 %v3294, %v3247
        %v3296 = vadd.f32 %v3295, %v3248
        %v3297 = vadd.f32 %v3296, %v3249
        %v3298 = vadd.f32 %v3297, %v3250
        %v3299 = vadd.f32 %v3298, %v3251
        %v3300 = vadd.f32 %v3299, %v3252
        %v3301 = vrot.slane %v3300, 4
        %v3302 = vadd.f32 %v3300, %v3301
        %v3303 = vrot.slane %v3302, 2
        %v3304 = vadd.f32 %v3302, %v3303
        %v3305 = vrot.slane %v3304, 1
        %v3306 = vadd.f32 %v3304, %v3305
        %v3307 = vadd.f32 %v2259, %v3306
        %v3308 = vmul.f32 %v3245, %v3245
        %v3309 = vmul.f32 %v3246, %v3246
        %v3310 = vmul.f32 %v3247, %v3247
        %v3311 = vmul.f32 %v3248, %v3248
        %v3312 = vmul.f32 %v3249, %v3249
        %v3313 = vmul.f32 %v3250, %v3250
        %v3314 = vmul.f32 %v3251, %v3251
        %v3315 = vmul.f32 %v3252, %v3252
        %v3316 = vadd.f32 %v3308, %v3309
        %v3317 = vadd.f32 %v3316, %v3310
        %v3318 = vadd.f32 %v3317, %v3311
        %v3319 = vadd.f32 %v3318, %v3312
        %v3320 = vadd.f32 %v3319, %v3313
        %v3321 = vadd.f32 %v3320, %v3314
        %v3322 = vadd.f32 %v3321, %v3315
        %v3323 = vrot.slane %v3322, 4
        %v3324 = vadd.f32 %v3322, %v3323
        %v3325 = vrot.slane %v3324, 2
        %v3326 = vadd.f32 %v3324, %v3325
        %v3327 = vrot.slane %v3326, 1
        %v3328 = vadd.f32 %v3326, %v3327
        %v3329 = vadd.f32 %v2281, %v3328
        %v3330 = vld [vmem:[%s1272] sm:$0xf]
        %v3331 = vld [vmem:[%s1272 + $0x8] sm:$0xf]
        %v3332 = vld [vmem:[%s1272 + $0x10] sm:$0xf]
        %v3333 = vld [vmem:[%s1272 + $0x18] sm:$0xf]
        %v3334 = vld [vmem:[%s1272 + $0x20] sm:$0xf]
        %v3335 = vld [vmem:[%s1272 + $0x28] sm:$0xf]
        %v3336 = vld [vmem:[%s1272 + $0x30] sm:$0xf]
        %v3337 = vld [vmem:[%s1272 + $0x38] sm:$0xf]
        %s3338 = scalar_lea.vmem [#allocation8], 512
        %v3339 = vld [vmem:[%s3338] sm:$0xf]
        %v3340 = vld [vmem:[%s3338 + $0x4] sm:$0xf]
        %v3341 = vld [vmem:[%s3338 + $0x8] sm:$0xf]
        %v3342 = vld [vmem:[%s3338 + $0xc] sm:$0xf]
        %v3343 = vld [vmem:[%s3338 + $0x10] sm:$0xf]
        %v3344 = vld [vmem:[%s3338 + $0x14] sm:$0xf]
        %v3345 = vld [vmem:[%s3338 + $0x18] sm:$0xf]
        %v3346 = vld [vmem:[%s3338 + $0x1c] sm:$0xf]
        %v3347 = vld [vmem:[%s3338 + $0x20] sm:$0xf]
        %v3348 = vld [vmem:[%s3338 + $0x24] sm:$0xf]
        %v3349 = vld [vmem:[%s3338 + $0x28] sm:$0xf]
        %v3350 = vld [vmem:[%s3338 + $0x2c] sm:$0xf]
        %v3351 = vld [vmem:[%s3338 + $0x30] sm:$0xf]
        %v3352 = vld [vmem:[%s3338 + $0x34] sm:$0xf]
        %v3353 = vld [vmem:[%s3338 + $0x38] sm:$0xf]
        %v3354 = vld [vmem:[%s3338 + $0x3c] sm:$0xf]
        %v3355 = vld [vmem:[%s1272 + $0x4] sm:$0x1]
        %v3356 = vld [vmem:[%s1272 + $0xc] sm:$0x1]
        %v3357 = vld [vmem:[%s1272 + $0x14] sm:$0x1]
        %v3358 = vld [vmem:[%s1272 + $0x1c] sm:$0x1]
        %v3359 = vld [vmem:[%s1272 + $0x24] sm:$0x1]
        %v3360 = vld [vmem:[%s1272 + $0x2c] sm:$0x1]
        %v3361 = vld [vmem:[%s1272 + $0x34] sm:$0x1]
        %v3362 = vld [vmem:[%s1272 + $0x3c] sm:$0x1]
        %v3364 = vshrl.u32 %v3330, 16
        %v3366 = vrot.slane %v3364, 4
        %v3367 = vshll.u32 %v3330, 16
        %v3369 = vrot.slane %v3367, 5
        %v3370 = vor.u32 %v3366, %v3369
        %v3371 = vrot.slane %v3370, 4
        %v3373 = vshll.u32 %v3355, 16
        %v3375 = vrot.slane %v3373, 5
        %v3376 = vsel %vm311, %v3371, %v3375
        %v3378 = vshrl.u32 %v3331, 16
        %v3380 = vrot.slane %v3378, 4
        %v3381 = vshll.u32 %v3331, 16
        %v3383 = vrot.slane %v3381, 5
        %v3384 = vor.u32 %v3380, %v3383
        %v3385 = vrot.slane %v3384, 4
        %v3387 = vshll.u32 %v3356, 16
        %v3389 = vrot.slane %v3387, 5
        %v3390 = vsel %vm311, %v3385, %v3389
        %v3392 = vshrl.u32 %v3332, 16
        %v3394 = vrot.slane %v3392, 4
        %v3395 = vshll.u32 %v3332, 16
        %v3397 = vrot.slane %v3395, 5
        %v3398 = vor.u32 %v3394, %v3397
        %v3399 = vrot.slane %v3398, 4
        %v3401 = vshll.u32 %v3357, 16
        %v3403 = vrot.slane %v3401, 5
        %v3404 = vsel %vm311, %v3399, %v3403
        %v3406 = vshrl.u32 %v3333, 16
        %v3408 = vrot.slane %v3406, 4
        %v3409 = vshll.u32 %v3333, 16
        %v3411 = vrot.slane %v3409, 5
        %v3412 = vor.u32 %v3408, %v3411
        %v3413 = vrot.slane %v3412, 4
        %v3415 = vshll.u32 %v3358, 16
        %v3417 = vrot.slane %v3415, 5
        %v3418 = vsel %vm311, %v3413, %v3417
        %v3420 = vshrl.u32 %v3334, 16
        %v3422 = vrot.slane %v3420, 4
        %v3423 = vshll.u32 %v3334, 16
        %v3425 = vrot.slane %v3423, 5
        %v3426 = vor.u32 %v3422, %v3425
        %v3427 = vrot.slane %v3426, 4
        %v3429 = vshll.u32 %v3359, 16
        %v3431 = vrot.slane %v3429, 5
        %v3432 = vsel %vm311, %v3427, %v3431
        %v3434 = vshrl.u32 %v3335, 16
        %v3436 = vrot.slane %v3434, 4
        %v3437 = vshll.u32 %v3335, 16
        %v3439 = vrot.slane %v3437, 5
        %v3440 = vor.u32 %v3436, %v3439
        %v3441 = vrot.slane %v3440, 4
        %v3443 = vshll.u32 %v3360, 16
        %v3445 = vrot.slane %v3443, 5
        %v3446 = vsel %vm311, %v3441, %v3445
        %v3448 = vshrl.u32 %v3336, 16
        %v3450 = vrot.slane %v3448, 4
        %v3451 = vshll.u32 %v3336, 16
        %v3453 = vrot.slane %v3451, 5
        %v3454 = vor.u32 %v3450, %v3453
        %v3455 = vrot.slane %v3454, 4
        %v3457 = vshll.u32 %v3361, 16
        %v3459 = vrot.slane %v3457, 5
        %v3460 = vsel %vm311, %v3455, %v3459
        %v3462 = vshrl.u32 %v3337, 16
        %v3464 = vrot.slane %v3462, 4
        %v3465 = vshll.u32 %v3337, 16
        %v3467 = vrot.slane %v3465, 5
        %v3468 = vor.u32 %v3464, %v3467
        %v3469 = vrot.slane %v3468, 4
        %v3471 = vshll.u32 %v3362, 16
        %v3473 = vrot.slane %v3471, 5
        %v3474 = vsel %vm311, %v3469, %v3473
        %s3475 = scalar_lea.vmem [#allocation8], 576
        %v3476 = vld [vmem:[%s3475] sm:$0xf]
        %v3477 = vld [vmem:[%s3475 + $0x4] sm:$0xf]
        %v3478 = vld [vmem:[%s3475 + $0x8] sm:$0xf]
        %v3479 = vld [vmem:[%s3475 + $0xc] sm:$0xf]
        %v3480 = vld [vmem:[%s3475 + $0x10] sm:$0xf]
        %v3481 = vld [vmem:[%s3475 + $0x14] sm:$0xf]
        %v3482 = vld [vmem:[%s3475 + $0x18] sm:$0xf]
        %v3483 = vld [vmem:[%s3475 + $0x1c] sm:$0xf]
        %v3484 = vld [vmem:[%s3475 + $0x20] sm:$0xf]
        %v3485 = vld [vmem:[%s3475 + $0x24] sm:$0xf]
        %v3486 = vld [vmem:[%s3475 + $0x28] sm:$0xf]
        %v3487 = vld [vmem:[%s3475 + $0x2c] sm:$0xf]
        %v3488 = vld [vmem:[%s3475 + $0x30] sm:$0xf]
        %v3489 = vld [vmem:[%s3475 + $0x34] sm:$0xf]
        %v3490 = vld [vmem:[%s3475 + $0x38] sm:$0xf]
        %v3491 = vld [vmem:[%s3475 + $0x3c] sm:$0xf]
        %v3492 = vunpack.c.l.b16 %v3376
        %v3493 = vunpack.c.l.b16 %v3390
        %v3494 = vunpack.c.l.b16 %v3404
        %v3495 = vunpack.c.l.b16 %v3418
        %v3496 = vunpack.c.l.b16 %v3432
        %v3497 = vunpack.c.l.b16 %v3446
        %v3498 = vunpack.c.l.b16 %v3460
        %v3499 = vunpack.c.l.b16 %v3474
        %v3500 = vpack.c.b16 %v3493, %v3492
        %v3501 = vpack.c.b16 %v3495, %v3494
        %v3502 = vpack.c.b16 %v3497, %v3496
        %v3503 = vpack.c.b16 %v3499, %v3498
        %v3524 = vunpack.c.l.b16 %v3476
        %v3525 = vunpack.c.l.b16 %v3477
        %v3526 = vunpack.c.l.b16 %v3478
        %v3527 = vunpack.c.l.b16 %v3479
        %v3528 = vunpack.c.l.b16 %v3480
        %v3529 = vunpack.c.l.b16 %v3481
        %v3530 = vunpack.c.l.b16 %v3482
        %v3531 = vunpack.c.l.b16 %v3483
        %v3532 = vunpack.c.l.b16 %v3484
        %v3533 = vunpack.c.l.b16 %v3485
        %v3534 = vunpack.c.l.b16 %v3486
        %v3535 = vunpack.c.l.b16 %v3487
        %v3536 = vunpack.c.l.b16 %v3488
        %v3537 = vunpack.c.l.b16 %v3489
        %v3538 = vunpack.c.l.b16 %v3490
        %v3539 = vunpack.c.l.b16 %v3491
        %v3540 = vpack.c.b16 %v3525, %v3524
        %v3541 = vpack.c.b16 %v3527, %v3526
        %v3542 = vpack.c.b16 %v3529, %v3528
        %v3543 = vpack.c.b16 %v3531, %v3530
        %v3544 = vpack.c.b16 %v3533, %v3532
        %v3545 = vpack.c.b16 %v3535, %v3534
        %v3546 = vpack.c.b16 %v3537, %v3536
        %v3547 = vpack.c.b16 %v3539, %v3538
        %3556 = vmatprep.subr.bf16.mxu0 0
        %3557 = vmatpush1.bf16.msra.mxu0 %v3540
        %3558 = vmatprep.subr.bf16.mxu0 0
        %3559 = vmatpush1.bf16.msra.mxu0 %v3541
        %3560 = vmatprep.subr.bf16.mxu0 0
        %3561 = vmatpush1.bf16.msra.mxu0 %v3542
        %3562 = vmatprep.subr.bf16.mxu0 0
        %3563 = vmatpush1.bf16.msra.mxu0 %v3543
        %3564 = vmatprep.subr.bf16.mxu0 0
        %3565 = vmatpush1.bf16.msra.mxu0 %v3544
        %3566 = vmatprep.subr.bf16.mxu0 0
        %3567 = vmatpush1.bf16.msra.mxu0 %v3545
        %3568 = vmatprep.subr.bf16.mxu0 0
        %3569 = vmatpush1.bf16.msra.mxu0 %v3546
        %3570 = vmatprep.subr.bf16.mxu0 0
        %3571 = vmatpush1.bf16.msra.mxu0 %v3547
        %3572 = vmatprep.subr.bf16.mxu0 0
        %3573 = vmatpush1.bf16.msra.mxu0 0
        %3574 = vmatprep.subr.bf16.mxu0 0
        %3575 = vmatpush1.bf16.msra.mxu0 0
        %3576 = vmatprep.subr.bf16.mxu0 0
        %3577 = vmatpush1.bf16.msra.mxu0 0
        %3578 = vmatprep.subr.bf16.mxu0 0
        %3579 = vmatpush1.bf16.msra.mxu0 0
        %3580 = vmatprep.subr.bf16.mxu0 0
        %3581 = vmatpush1.bf16.msra.mxu0 0
        %3582 = vmatprep.subr.bf16.mxu0 0
        %3583 = vmatpush1.bf16.msra.mxu0 0
        %3584 = vmatprep.subr.bf16.mxu0 0
        %3585 = vmatpush1.bf16.msra.mxu0 0
        %3586 = vmatprep.subr.bf16.mxu0 0
        %3587 = vmatpush1.bf16.msra.mxu0 0
        %3588 = vmatprep.mubr.bf16.mxu0 0
        %3589 = vmatmul.mubr.bf16.gmra.mrb[0].mxu0 %v3500
        %v3590 = vpop.f32.mrb[0].mxu0
        %v3591 = vadd.f32 0.0, %v3590
        %v3592 = vpop.f32.mrb[0].mxu0
        %v3593 = vpop.f32.mrb[0].mxu0
        %v3594 = vadd.f32 0.0, %v3593
        %v3595 = vpop.f32.mrb[0].mxu0
        %3596 = vmatprep.mubr.bf16.mxu0 0
        %3597 = vmatmul.mubr.bf16.gmra.mrb[0].mxu0 %v3501
        %v3598 = vpop.f32.mrb[0].mxu0
        %v3599 = vadd.f32 0.0, %v3598
        %v3600 = vpop.f32.mrb[0].mxu0
        %v3601 = vpop.f32.mrb[0].mxu0
        %v3602 = vadd.f32 0.0, %v3601
        %v3603 = vpop.f32.mrb[0].mxu0
        %3604 = vmatprep.mubr.bf16.mxu0 0
        %3605 = vmatmul.mubr.bf16.gmra.mrb[0].mxu0 %v3502
        %v3606 = vpop.f32.mrb[0].mxu0
        %v3607 = vadd.f32 0.0, %v3606
        %v3608 = vpop.f32.mrb[0].mxu0
        %v3609 = vpop.f32.mrb[0].mxu0
        %v3610 = vadd.f32 0.0, %v3609
        %v3611 = vpop.f32.mrb[0].mxu0
        %3612 = vmatprep.mubr.bf16.mxu0 0
        %3613 = vmatmul.mubr.bf16.gmra.mrb[0].mxu0 %v3503
        %v3614 = vpop.f32.mrb[0].mxu0
        %v3615 = vadd.f32 0.0, %v3614
        %v3616 = vpop.f32.mrb[0].mxu0
        %v3617 = vpop.f32.mrb[0].mxu0
        %v3618 = vadd.f32 0.0, %v3617
        %v3619 = vpop.f32.mrb[0].mxu0
        %3620 = vdwg.mxu0
        %v3629 = vunpack.c.l.b16 %v3330
        %v3630 = vunpack.c.l.b16 %v3331
        %v3631 = vunpack.c.l.b16 %v3332
        %v3632 = vunpack.c.l.b16 %v3333
        %v3633 = vunpack.c.l.b16 %v3334
        %v3634 = vunpack.c.l.b16 %v3335
        %v3635 = vunpack.c.l.b16 %v3336
        %v3636 = vunpack.c.l.b16 %v3337
        %v3637 = vpack.c.b16 %v3630, %v3629
        %v3638 = vpack.c.b16 %v3632, %v3631
        %v3639 = vpack.c.b16 %v3634, %v3633
        %v3640 = vpack.c.b16 %v3636, %v3635
        %v3661 = vunpack.c.l.b16 %v3339
        %v3662 = vunpack.c.l.b16 %v3340
        %v3663 = vunpack.c.l.b16 %v3341
        %v3664 = vunpack.c.l.b16 %v3342
        %v3665 = vunpack.c.l.b16 %v3343
        %v3666 = vunpack.c.l.b16 %v3344
        %v3667 = vunpack.c.l.b16 %v3345
        %v3668 = vunpack.c.l.b16 %v3346
        %v3669 = vunpack.c.l.b16 %v3347
        %v3670 = vunpack.c.l.b16 %v3348
        %v3671 = vunpack.c.l.b16 %v3349
        %v3672 = vunpack.c.l.b16 %v3350
        %v3673 = vunpack.c.l.b16 %v3351
        %v3674 = vunpack.c.l.b16 %v3352
        %v3675 = vunpack.c.l.b16 %v3353
        %v3676 = vunpack.c.l.b16 %v3354
        %v3677 = vpack.c.b16 %v3662, %v3661
        %v3678 = vpack.c.b16 %v3664, %v3663
        %v3679 = vpack.c.b16 %v3666, %v3665
        %v3680 = vpack.c.b16 %v3668, %v3667
        %v3681 = vpack.c.b16 %v3670, %v3669
        %v3682 = vpack.c.b16 %v3672, %v3671
        %v3683 = vpack.c.b16 %v3674, %v3673
        %v3684 = vpack.c.b16 %v3676, %v3675
        %3693 = vmatprep.subr.bf16.mxu0 0
        %3694 = vmatpush1.bf16.msra.mxu0 %v3677
        %3695 = vmatprep.subr.bf16.mxu0 0
        %3696 = vmatpush1.bf16.msra.mxu0 %v3678
        %3697 = vmatprep.subr.bf16.mxu0 0
        %3698 = vmatpush1.bf16.msra.mxu0 %v3679
        %3699 = vmatprep.subr.bf16.mxu0 0
        %3700 = vmatpush1.bf16.msra.mxu0 %v3680
        %3701 = vmatprep.subr.bf16.mxu0 0
        %3702 = vmatpush1.bf16.msra.mxu0 %v3681
        %3703 = vmatprep.subr.bf16.mxu0 0
        %3704 = vmatpush1.bf16.msra.mxu0 %v3682
        %3705 = vmatprep.subr.bf16.mxu0 0
        %3706 = vmatpush1.bf16.msra.mxu0 %v3683
        %3707 = vmatprep.subr.bf16.mxu0 0
        %3708 = vmatpush1.bf16.msra.mxu0 %v3684
        %3709 = vmatprep.subr.bf16.mxu0 0
        %3710 = vmatpush1.bf16.msra.mxu0 0
        %3711 = vmatprep.subr.bf16.mxu0 0
        %3712 = vmatpush1.bf16.msra.mxu0 0
        %3713 = vmatprep.subr.bf16.mxu0 0
        %3714 = vmatpush1.bf16.msra.mxu0 0
        %3715 = vmatprep.subr.bf16.mxu0 0
        %3716 = vmatpush1.bf16.msra.mxu0 0
        %3717 = vmatprep.subr.bf16.mxu0 0
        %3718 = vmatpush1.bf16.msra.mxu0 0
        %3719 = vmatprep.subr.bf16.mxu0 0
        %3720 = vmatpush1.bf16.msra.mxu0 0
        %3721 = vmatprep.subr.bf16.mxu0 0
        %3722 = vmatpush1.bf16.msra.mxu0 0
        %3723 = vmatprep.subr.bf16.mxu0 0
        %3724 = vmatpush1.bf16.msra.mxu0 0
        %3725 = vmatprep.mubr.bf16.mxu0 0
        %3726 = vmatmul.mubr.bf16.gmra.mrb[0].mxu0 %v3637
        %v3727 = vpop.f32.mrb[0].mxu0
        %v3728 = vadd.f32 %v3591, %v3727
        %v3729 = vpop.f32.mrb[0].mxu0
        %v3730 = vpop.f32.mrb[0].mxu0
        %v3731 = vadd.f32 %v3594, %v3730
        %v3732 = vpop.f32.mrb[0].mxu0
        %3733 = vmatprep.mubr.bf16.mxu0 0
        %3734 = vmatmul.mubr.bf16.gmra.mrb[0].mxu0 %v3638
        %v3735 = vpop.f32.mrb[0].mxu0
        %v3736 = vadd.f32 %v3599, %v3735
        %v3737 = vpop.f32.mrb[0].mxu0
        %v3738 = vpop.f32.mrb[0].mxu0
        %v3739 = vadd.f32 %v3602, %v3738
        %v3740 = vpop.f32.mrb[0].mxu0
        %3741 = vmatprep.mubr.bf16.mxu0 0
        %3742 = vmatmul.mubr.bf16.gmra.mrb[0].mxu0 %v3639
        %v3743 = vpop.f32.mrb[0].mxu0
        %v3744 = vadd.f32 %v3607, %v3743
        %v3745 = vpop.f32.mrb[0].mxu0
        %v3746 = vpop.f32.mrb[0].mxu0
        %v3747 = vadd.f32 %v3610, %v3746
        %v3748 = vpop.f32.mrb[0].mxu0
        %3749 = vmatprep.mubr.bf16.mxu0 0
        %3750 = vmatmul.mubr.bf16.gmra.mrb[0].mxu0 %v3640
        %v3751 = vpop.f32.mrb[0].mxu0
        %v3752 = vadd.f32 %v3615, %v3751
        %v3753 = vpop.f32.mrb[0].mxu0
        %v3754 = vpop.f32.mrb[0].mxu0
        %v3755 = vadd.f32 %v3618, %v3754
        %v3756 = vpop.f32.mrb[0].mxu0
        %3757 = vdwg.mxu0
        %s3758 = scalar_lea.vmem [#allocation2], 16
        %v3759 = vld [vmem:[%s3758] sm:$0xf]
        %v3760 = vld [vmem:[%s3758 + $0x8] sm:$0xf]
        %v3761 = vld [vmem:[%s3758 + $0x10] sm:$0xf]
        %v3762 = vld [vmem:[%s3758 + $0x18] sm:$0xf]
        %v3763 = vld [vmem:[%s3758 + $0x20] sm:$0xf]
        %v3764 = vld [vmem:[%s3758 + $0x28] sm:$0xf]
        %v3765 = vld [vmem:[%s3758 + $0x30] sm:$0xf]
        %v3766 = vld [vmem:[%s3758 + $0x38] sm:$0xf]
        %s3767 = scalar_lea.vmem [#allocation8], 640
        %v3768 = vld [vmem:[%s3767] sm:$0xf]
        %v3769 = vld [vmem:[%s3767 + $0x4] sm:$0xf]
        %v3770 = vld [vmem:[%s3767 + $0x8] sm:$0xf]
        %v3771 = vld [vmem:[%s3767 + $0xc] sm:$0xf]
        %v3772 = vld [vmem:[%s3767 + $0x10] sm:$0xf]
        %v3773 = vld [vmem:[%s3767 + $0x14] sm:$0xf]
        %v3774 = vld [vmem:[%s3767 + $0x18] sm:$0xf]
        %v3775 = vld [vmem:[%s3767 + $0x1c] sm:$0xf]
        %v3776 = vld [vmem:[%s3767 + $0x20] sm:$0xf]
        %v3777 = vld [vmem:[%s3767 + $0x24] sm:$0xf]
        %v3778 = vld [vmem:[%s3767 + $0x28] sm:$0xf]
        %v3779 = vld [vmem:[%s3767 + $0x2c] sm:$0xf]
        %v3780 = vld [vmem:[%s3767 + $0x30] sm:$0xf]
        %v3781 = vld [vmem:[%s3767 + $0x34] sm:$0xf]
        %v3782 = vld [vmem:[%s3767 + $0x38] sm:$0xf]
        %v3783 = vld [vmem:[%s3767 + $0x3c] sm:$0xf]
        %v3792 = vunpack.c.l.b16 %v3759
        %v3793 = vunpack.c.l.b16 %v3760
        %v3794 = vunpack.c.l.b16 %v3761
        %v3795 = vunpack.c.l.b16 %v3762
        %v3796 = vunpack.c.l.b16 %v3763
        %v3797 = vunpack.c.l.b16 %v3764
        %v3798 = vunpack.c.l.b16 %v3765
        %v3799 = vunpack.c.l.b16 %v3766
        %v3800 = vpack.c.b16 %v3793, %v3792
        %v3801 = vpack.c.b16 %v3795, %v3794
        %v3802 = vpack.c.b16 %v3797, %v3796
        %v3803 = vpack.c.b16 %v3799, %v3798
        %v3824 = vunpack.c.l.b16 %v3768
        %v3825 = vunpack.c.l.b16 %v3769
        %v3826 = vunpack.c.l.b16 %v3770
        %v3827 = vunpack.c.l.b16 %v3771
        %v3828 = vunpack.c.l.b16 %v3772
        %v3829 = vunpack.c.l.b16 %v3773
        %v3830 = vunpack.c.l.b16 %v3774
        %v3831 = vunpack.c.l.b16 %v3775
        %v3832 = vunpack.c.l.b16 %v3776
        %v3833 = vunpack.c.l.b16 %v3777
        %v3834 = vunpack.c.l.b16 %v3778
        %v3835 = vunpack.c.l.b16 %v3779
        %v3836 = vunpack.c.l.b16 %v3780
        %v3837 = vunpack.c.l.b16 %v3781
        %v3838 = vunpack.c.l.b16 %v3782
        %v3839 = vunpack.c.l.b16 %v3783
        %v3840 = vpack.c.b16 %v3825, %v3824
        %v3841 = vpack.c.b16 %v3827, %v3826
        %v3842 = vpack.c.b16 %v3829, %v3828
        %v3843 = vpack.c.b16 %v3831, %v3830
        %v3844 = vpack.c.b16 %v3833, %v3832
        %v3845 = vpack.c.b16 %v3835, %v3834
        %v3846 = vpack.c.b16 %v3837, %v3836
        %v3847 = vpack.c.b16 %v3839, %v3838
        %3856 = vmatprep.subr.bf16.mxu0 0
        %3857 = vmatpush1.bf16.msra.mxu0 %v3840
        %3858 = vmatprep.subr.bf16.mxu0 0
        %3859 = vmatpush1.bf16.msra.mxu0 %v3841
        %3860 = vmatprep.subr.bf16.mxu0 0
        %3861 = vmatpush1.bf16.msra.mxu0 %v3842
        %3862 = vmatprep.subr.bf16.mxu0 0
        %3863 = vmatpush1.bf16.msra.mxu0 %v3843
        %3864 = vmatprep.subr.bf16.mxu0 0
        %3865 = vmatpush1.bf16.msra.mxu0 %v3844
        %3866 = vmatprep.subr.bf16.mxu0 0
        %3867 = vmatpush1.bf16.msra.mxu0 %v3845
        %3868 = vmatprep.subr.bf16.mxu0 0
        %3869 = vmatpush1.bf16.msra.mxu0 %v3846
        %3870 = vmatprep.subr.bf16.mxu0 0
        %3871 = vmatpush1.bf16.msra.mxu0 %v3847
        %3872 = vmatprep.subr.bf16.mxu0 0
        %3873 = vmatpush1.bf16.msra.mxu0 0
        %3874 = vmatprep.subr.bf16.mxu0 0
        %3875 = vmatpush1.bf16.msra.mxu0 0
        %3876 = vmatprep.subr.bf16.mxu0 0
        %3877 = vmatpush1.bf16.msra.mxu0 0
        %3878 = vmatprep.subr.bf16.mxu0 0
        %3879 = vmatpush1.bf16.msra.mxu0 0
        %3880 = vmatprep.subr.bf16.mxu0 0
        %3881 = vmatpush1.bf16.msra.mxu0 0
        %3882 = vmatprep.subr.bf16.mxu0 0
        %3883 = vmatpush1.bf16.msra.mxu0 0
        %3884 = vmatprep.subr.bf16.mxu0 0
        %3885 = vmatpush1.bf16.msra.mxu0 0
        %3886 = vmatprep.subr.bf16.mxu0 0
        %3887 = vmatpush1.bf16.msra.mxu0 0
        %3888 = vmatprep.mubr.bf16.mxu0 0
        %3889 = vmatmul.mubr.bf16.gmra.mrb[0].mxu0 %v3800
        %v3890 = vpop.f32.mrb[0].mxu0
        %v3891 = vadd.f32 0.0, %v3890
        %v3892 = vpop.f32.mrb[0].mxu0
        %v3893 = vpop.f32.mrb[0].mxu0
        %v3894 = vadd.f32 0.0, %v3893
        %v3895 = vpop.f32.mrb[0].mxu0
        %3896 = vmatprep.mubr.bf16.mxu0 0
        %3897 = vmatmul.mubr.bf16.gmra.mrb[0].mxu0 %v3801
        %v3898 = vpop.f32.mrb[0].mxu0
        %v3899 = vadd.f32 0.0, %v3898
        %v3900 = vpop.f32.mrb[0].mxu0
        %v3901 = vpop.f32.mrb[0].mxu0
        %v3902 = vadd.f32 0.0, %v3901
        %v3903 = vpop.f32.mrb[0].mxu0
        %3904 = vmatprep.mubr.bf16.mxu0 0
        %3905 = vmatmul.mubr.bf16.gmra.mrb[0].mxu0 %v3802
        %v3906 = vpop.f32.mrb[0].mxu0
        %v3907 = vadd.f32 0.0, %v3906
        %v3908 = vpop.f32.mrb[0].mxu0
        %v3909 = vpop.f32.mrb[0].mxu0
        %v3910 = vadd.f32 0.0, %v3909
        %v3911 = vpop.f32.mrb[0].mxu0
        %3912 = vmatprep.mubr.bf16.mxu0 0
        %3913 = vmatmul.mubr.bf16.gmra.mrb[0].mxu0 %v3803
        %v3914 = vpop.f32.mrb[0].mxu0
        %v3915 = vadd.f32 0.0, %v3914
        %v3916 = vpop.f32.mrb[0].mxu0
        %v3917 = vpop.f32.mrb[0].mxu0
        %v3918 = vadd.f32 0.0, %v3917
        %v3919 = vpop.f32.mrb[0].mxu0
        %3920 = vdwg.mxu0
        %v3921 = vadd.f32 %v3728, %v3891
        %v3922 = vadd.f32 %v3731, %v3894
        %v3923 = vadd.f32 %v3736, %v3899
        %v3924 = vadd.f32 %v3739, %v3902
        %v3925 = vadd.f32 %v3744, %v3907
        %v3926 = vadd.f32 %v3747, %v3910
        %v3927 = vadd.f32 %v3752, %v3915
        %v3928 = vadd.f32 %v3755, %v3918
        %v3929 = vld [vmem:[%s3758] sm:$0xf]
        %v3930 = vld [vmem:[%s3758 + $0x4] sm:$0x1]
        %v3931 = vld [vmem:[%s3758 + $0x8] sm:$0xf]
        %v3932 = vld [vmem:[%s3758 + $0xc] sm:$0x1]
        %v3933 = vld [vmem:[%s3758 + $0x10] sm:$0xf]
        %v3934 = vld [vmem:[%s3758 + $0x14] sm:$0x1]
        %v3935 = vld [vmem:[%s3758 + $0x18] sm:$0xf]
        %v3936 = vld [vmem:[%s3758 + $0x1c] sm:$0x1]
        %v3937 = vld [vmem:[%s3758 + $0x20] sm:$0xf]
        %v3938 = vld [vmem:[%s3758 + $0x24] sm:$0x1]
        %v3939 = vld [vmem:[%s3758 + $0x28] sm:$0xf]
        %v3940 = vld [vmem:[%s3758 + $0x2c] sm:$0x1]
        %v3941 = vld [vmem:[%s3758 + $0x30] sm:$0xf]
        %v3942 = vld [vmem:[%s3758 + $0x34] sm:$0x1]
        %v3943 = vld [vmem:[%s3758 + $0x38] sm:$0xf]
        %v3944 = vld [vmem:[%s3758 + $0x3c] sm:$0x1]
        %v3946 = vshrl.u32 %v3929, 16
        %v3948 = vrot.slane %v3946, 4
        %v3949 = vshll.u32 %v3929, 16
        %v3951 = vrot.slane %v3949, 5
        %v3952 = vor.u32 %v3948, %v3951
        %v3953 = vrot.slane %v3952, 4
        %v3955 = vshll.u32 %v3930, 16
        %v3957 = vrot.slane %v3955, 5
        %v3958 = vsel %vm311, %v3953, %v3957
        %v3960 = vshrl.u32 %v3931, 16
        %v3962 = vrot.slane %v3960, 4
        %v3963 = vshll.u32 %v3931, 16
        %v3965 = vrot.slane %v3963, 5
        %v3966 = vor.u32 %v3962, %v3965
        %v3967 = vrot.slane %v3966, 4
        %v3969 = vshll.u32 %v3932, 16
        %v3971 = vrot.slane %v3969, 5
        %v3972 = vsel %vm311, %v3967, %v3971
        %v3974 = vshrl.u32 %v3933, 16
        %v3976 = vrot.slane %v3974, 4
        %v3977 = vshll.u32 %v3933, 16
        %v3979 = vrot.slane %v3977, 5
        %v3980 = vor.u32 %v3976, %v3979
        %v3981 = vrot.slane %v3980, 4
        %v3983 = vshll.u32 %v3934, 16
        %v3985 = vrot.slane %v3983, 5
        %v3986 = vsel %vm311, %v3981, %v3985
        %v3988 = vshrl.u32 %v3935, 16
        %v3990 = vrot.slane %v3988, 4
        %v3991 = vshll.u32 %v3935, 16
        %v3993 = vrot.slane %v3991, 5
        %v3994 = vor.u32 %v3990, %v3993
        %v3995 = vrot.slane %v3994, 4
        %v3997 = vshll.u32 %v3936, 16
        %v3999 = vrot.slane %v3997, 5
        %v4000 = vsel %vm311, %v3995, %v3999
        %v4002 = vshrl.u32 %v3937, 16
        %v4004 = vrot.slane %v4002, 4
        %v4005 = vshll.u32 %v3937, 16
        %v4007 = vrot.slane %v4005, 5
        %v4008 = vor.u32 %v4004, %v4007
        %v4009 = vrot.slane %v4008, 4
        %v4011 = vshll.u32 %v3938, 16
        %v4013 = vrot.slane %v4011, 5
        %v4014 = vsel %vm311, %v4009, %v4013
        %v4016 = vshrl.u32 %v3939, 16
        %v4018 = vrot.slane %v4016, 4
        %v4019 = vshll.u32 %v3939, 16
        %v4021 = vrot.slane %v4019, 5
        %v4022 = vor.u32 %v4018, %v4021
        %v4023 = vrot.slane %v4022, 4
        %v4025 = vshll.u32 %v3940, 16
        %v4027 = vrot.slane %v4025, 5
        %v4028 = vsel %vm311, %v4023, %v4027
        %v4030 = vshrl.u32 %v3941, 16
        %v4032 = vrot.slane %v4030, 4
        %v4033 = vshll.u32 %v3941, 16
        %v4035 = vrot.slane %v4033, 5
        %v4036 = vor.u32 %v4032, %v4035
        %v4037 = vrot.slane %v4036, 4
        %v4039 = vshll.u32 %v3942, 16
        %v4041 = vrot.slane %v4039, 5
        %v4042 = vsel %vm311, %v4037, %v4041
        %v4044 = vshrl.u32 %v3943, 16
        %v4046 = vrot.slane %v4044, 4
        %v4047 = vshll.u32 %v3943, 16
        %v4049 = vrot.slane %v4047, 5
        %v4050 = vor.u32 %v4046, %v4049
        %v4051 = vrot.slane %v4050, 4
        %v4053 = vshll.u32 %v3944, 16
        %v4055 = vrot.slane %v4053, 5
        %v4056 = vsel %vm311, %v4051, %v4055
        %s4057 = scalar_lea.vmem [#allocation8], 704
        %v4058 = vld [vmem:[%s4057] sm:$0xf]
        %v4059 = vld [vmem:[%s4057 + $0x4] sm:$0xf]
        %v4060 = vld [vmem:[%s4057 + $0x8] sm:$0xf]
        %v4061 = vld [vmem:[%s4057 + $0xc] sm:$0xf]
        %v4062 = vld [vmem:[%s4057 + $0x10] sm:$0xf]
        %v4063 = vld [vmem:[%s4057 + $0x14] sm:$0xf]
        %v4064 = vld [vmem:[%s4057 + $0x18] sm:$0xf]
        %v4065 = vld [vmem:[%s4057 + $0x1c] sm:$0xf]
        %v4066 = vld [vmem:[%s4057 + $0x20] sm:$0xf]
        %v4067 = vld [vmem:[%s4057 + $0x24] sm:$0xf]
        %v4068 = vld [vmem:[%s4057 + $0x28] sm:$0xf]
        %v4069 = vld [vmem:[%s4057 + $0x2c] sm:$0xf]
        %v4070 = vld [vmem:[%s4057 + $0x30] sm:$0xf]
        %v4071 = vld [vmem:[%s4057 + $0x34] sm:$0xf]
        %v4072 = vld [vmem:[%s4057 + $0x38] sm:$0xf]
        %v4073 = vld [vmem:[%s4057 + $0x3c] sm:$0xf]
        %v4074 = vunpack.c.l.b16 %v3958
        %v4075 = vunpack.c.l.b16 %v3972
        %v4076 = vunpack.c.l.b16 %v3986
        %v4077 = vunpack.c.l.b16 %v4000
        %v4078 = vunpack.c.l.b16 %v4014
        %v4079 = vunpack.c.l.b16 %v4028
        %v4080 = vunpack.c.l.b16 %v4042
        %v4081 = vunpack.c.l.b16 %v4056
        %v4082 = vpack.c.b16 %v4075, %v4074
        %v4083 = vpack.c.b16 %v4077, %v4076
        %v4084 = vpack.c.b16 %v4079, %v4078
        %v4085 = vpack.c.b16 %v4081, %v4080
        %v4106 = vunpack.c.l.b16 %v4058
        %v4107 = vunpack.c.l.b16 %v4059
        %v4108 = vunpack.c.l.b16 %v4060
        %v4109 = vunpack.c.l.b16 %v4061
        %v4110 = vunpack.c.l.b16 %v4062
        %v4111 = vunpack.c.l.b16 %v4063
        %v4112 = vunpack.c.l.b16 %v4064
        %v4113 = vunpack.c.l.b16 %v4065
        %v4114 = vunpack.c.l.b16 %v4066
        %v4115 = vunpack.c.l.b16 %v4067
        %v4116 = vunpack.c.l.b16 %v4068
        %v4117 = vunpack.c.l.b16 %v4069
        %v4118 = vunpack.c.l.b16 %v4070
        %v4119 = vunpack.c.l.b16 %v4071
        %v4120 = vunpack.c.l.b16 %v4072
        %v4121 = vunpack.c.l.b16 %v4073
        %v4122 = vpack.c.b16 %v4107, %v4106
        %v4123 = vpack.c.b16 %v4109, %v4108
        %v4124 = vpack.c.b16 %v4111, %v4110
        %v4125 = vpack.c.b16 %v4113, %v4112
        %v4126 = vpack.c.b16 %v4115, %v4114
        %v4127 = vpack.c.b16 %v4117, %v4116
        %v4128 = vpack.c.b16 %v4119, %v4118
        %v4129 = vpack.c.b16 %v4121, %v4120
        %4138 = vmatprep.subr.bf16.mxu0 0
        %4139 = vmatpush1.bf16.msra.mxu0 %v4122
        %4140 = vmatprep.subr.bf16.mxu0 0
        %4141 = vmatpush1.bf16.msra.mxu0 %v4123
        %4142 = vmatprep.subr.bf16.mxu0 0
        %4143 = vmatpush1.bf16.msra.mxu0 %v4124
        %4144 = vmatprep.subr.bf16.mxu0 0
        %4145 = vmatpush1.bf16.msra.mxu0 %v4125
        %4146 = vmatprep.subr.bf16.mxu0 0
        %4147 = vmatpush1.bf16.msra.mxu0 %v4126
        %4148 = vmatprep.subr.bf16.mxu0 0
        %4149 = vmatpush1.bf16.msra.mxu0 %v4127
        %4150 = vmatprep.subr.bf16.mxu0 0
        %4151 = vmatpush1.bf16.msra.mxu0 %v4128
        %4152 = vmatprep.subr.bf16.mxu0 0
        %4153 = vmatpush1.bf16.msra.mxu0 %v4129
        %4154 = vmatprep.subr.bf16.mxu0 0
        %4155 = vmatpush1.bf16.msra.mxu0 0
        %4156 = vmatprep.subr.bf16.mxu0 0
        %4157 = vmatpush1.bf16.msra.mxu0 0
        %4158 = vmatprep.subr.bf16.mxu0 0
        %4159 = vmatpush1.bf16.msra.mxu0 0
        %4160 = vmatprep.subr.bf16.mxu0 0
        %4161 = vmatpush1.bf16.msra.mxu0 0
        %4162 = vmatprep.subr.bf16.mxu0 0
        %4163 = vmatpush1.bf16.msra.mxu0 0
        %4164 = vmatprep.subr.bf16.mxu0 0
        %4165 = vmatpush1.bf16.msra.mxu0 0
        %4166 = vmatprep.subr.bf16.mxu0 0
        %4167 = vmatpush1.bf16.msra.mxu0 0
        %4168 = vmatprep.subr.bf16.mxu0 0
        %4169 = vmatpush1.bf16.msra.mxu0 0
        %4170 = vmatprep.mubr.bf16.mxu0 0
        %4171 = vmatmul.mubr.bf16.gmra.mrb[0].mxu0 %v4082
        %v4172 = vpop.f32.mrb[0].mxu0
        %v4173 = vadd.f32 0.0, %v4172
        %v4174 = vpop.f32.mrb[0].mxu0
        %v4175 = vpop.f32.mrb[0].mxu0
        %v4176 = vadd.f32 0.0, %v4175
        %v4177 = vpop.f32.mrb[0].mxu0
        %4178 = vmatprep.mubr.bf16.mxu0 0
        %4179 = vmatmul.mubr.bf16.gmra.mrb[0].mxu0 %v4083
        %v4180 = vpop.f32.mrb[0].mxu0
        %v4181 = vadd.f32 0.0, %v4180
        %v4182 = vpop.f32.mrb[0].mxu0
        %v4183 = vpop.f32.mrb[0].mxu0
        %v4184 = vadd.f32 0.0, %v4183
        %v4185 = vpop.f32.mrb[0].mxu0
        %4186 = vmatprep.mubr.bf16.mxu0 0
        %4187 = vmatmul.mubr.bf16.gmra.mrb[0].mxu0 %v4084
        %v4188 = vpop.f32.mrb[0].mxu0
        %v4189 = vadd.f32 0.0, %v4188
        %v4190 = vpop.f32.mrb[0].mxu0
        %v4191 = vpop.f32.mrb[0].mxu0
        %v4192 = vadd.f32 0.0, %v4191
        %v4193 = vpop.f32.mrb[0].mxu0
        %4194 = vmatprep.mubr.bf16.mxu0 0
        %4195 = vmatmul.mubr.bf16.gmra.mrb[0].mxu0 %v4085
        %v4196 = vpop.f32.mrb[0].mxu0
        %v4197 = vadd.f32 0.0, %v4196
        %v4198 = vpop.f32.mrb[0].mxu0
        %v4199 = vpop.f32.mrb[0].mxu0
        %v4200 = vadd.f32 0.0, %v4199
        %v4201 = vpop.f32.mrb[0].mxu0
        %4202 = vdwg.mxu0
        %v4203 = vadd.f32 %v3921, %v4173
        %v4204 = vadd.f32 %v3922, %v4176
        %v4205 = vadd.f32 %v3923, %v4181
        %v4206 = vadd.f32 %v3924, %v4184
        %v4207 = vadd.f32 %v3925, %v4189
        %v4208 = vadd.f32 %v3926, %v4192
        %v4209 = vadd.f32 %v3927, %v4197
        %v4210 = vadd.f32 %v3928, %v4200
        %v4211 = vpack.c.bf16 %v4204, %v4203
        %v4212 = vpack.c.bf16 %v4206, %v4205
        %v4213 = vpack.c.bf16 %v4208, %v4207
        %v4214 = vpack.c.bf16 %v4210, %v4209
        %v4219 = vunpack.c.l.b16 %v4211
        %v4220 = vunpack.c.h.b16 %v4211
        %v4221 = vunpack.c.l.b16 %v4212
        %v4222 = vunpack.c.h.b16 %v4212
        %v4223 = vunpack.c.l.b16 %v4213
        %v4224 = vunpack.c.h.b16 %v4213
        %v4225 = vunpack.c.l.b16 %v4214
        %v4226 = vunpack.c.h.b16 %v4214
        %v4227 = vpack.c.b16 %v4219, %v4219
        %v4228 = vpack.c.b16 %v4220, %v4220
        %v4229 = vpack.c.b16 %v4221, %v4221
        %v4230 = vpack.c.b16 %v4222, %v4222
        %v4231 = vpack.c.b16 %v4223, %v4223
        %v4232 = vpack.c.b16 %v4224, %v4224
        %v4233 = vpack.c.b16 %v4225, %v4225
        %v4234 = vpack.c.b16 %v4226, %v4226
        %s4243 = scalar_lea.vmem %s248, 64 [#allocation9]
        %4244 = vst [vmem:[%s4243] sm:$0xf] %v4227
        %4245 = vst [vmem:[%s4243 + $0x4] sm:$0xf] %v4228
        %4246 = vst [vmem:[%s4243 + $0x8] sm:$0xf] %v4229
        %4247 = vst [vmem:[%s4243 + $0xc] sm:$0xf] %v4230
        %4248 = vst [vmem:[%s4243 + $0x10] sm:$0xf] %v4231
        %4249 = vst [vmem:[%s4243 + $0x14] sm:$0xf] %v4232
        %4250 = vst [vmem:[%s4243 + $0x18] sm:$0xf] %v4233
        %4251 = vst [vmem:[%s4243 + $0x1c] sm:$0xf] %v4234
        %v4252 = vadd.f32 %v4203, %v4204
        %v4253 = vadd.f32 %v4252, %v4205
        %v4254 = vadd.f32 %v4253, %v4206
        %v4255 = vadd.f32 %v4254, %v4207
        %v4256 = vadd.f32 %v4255, %v4208
        %v4257 = vadd.f32 %v4256, %v4209
        %v4258 = vadd.f32 %v4257, %v4210
        %v4259 = vrot.slane %v4258, 4
        %v4260 = vadd.f32 %v4258, %v4259
        %v4261 = vrot.slane %v4260, 2
        %v4262 = vadd.f32 %v4260, %v4261
        %v4263 = vrot.slane %v4262, 1
        %v4264 = vadd.f32 %v4262, %v4263
        %v4265 = vadd.f32 %v3307, %v4264
        %v4266 = vmul.f32 %v4203, %v4203
        %v4267 = vmul.f32 %v4204, %v4204
        %v4268 = vmul.f32 %v4205, %v4205
        %v4269 = vmul.f32 %v4206, %v4206
        %v4270 = vmul.f32 %v4207, %v4207
        %v4271 = vmul.f32 %v4208, %v4208
        %v4272 = vmul.f32 %v4209, %v4209
        %v4273 = vmul.f32 %v4210, %v4210
        %v4274 = vadd.f32 %v4266, %v4267
        %v4275 = vadd.f32 %v4274, %v4268
        %v4276 = vadd.f32 %v4275, %v4269
        %v4277 = vadd.f32 %v4276, %v4270
        %v4278 = vadd.f32 %v4277, %v4271
        %v4279 = vadd.f32 %v4278, %v4272
        %v4280 = vadd.f32 %v4279, %v4273
        %v4281 = vrot.slane %v4280, 4
        %v4282 = vadd.f32 %v4280, %v4281
        %v4283 = vrot.slane %v4282, 2
        %v4284 = vadd.f32 %v4282, %v4283
        %v4285 = vrot.slane %v4284, 1
        %v4286 = vadd.f32 %v4284, %v4285
        %v4287 = vadd.f32 %v3329, %v4286
        %v4288 = vld [vmem:[%s1272] sm:$0xf]
        %v4289 = vld [vmem:[%s1272 + $0x4] sm:$0x1]
        %v4290 = vld [vmem:[%s1272 + $0x8] sm:$0xf]
        %v4291 = vld [vmem:[%s1272 + $0xc] sm:$0x1]
        %v4292 = vld [vmem:[%s1272 + $0x10] sm:$0xf]
        %v4293 = vld [vmem:[%s1272 + $0x14] sm:$0x1]
        %v4294 = vld [vmem:[%s1272 + $0x18] sm:$0xf]
        %v4295 = vld [vmem:[%s1272 + $0x1c] sm:$0x1]
        %v4296 = vld [vmem:[%s1272 + $0x20] sm:$0xf]
        %v4297 = vld [vmem:[%s1272 + $0x24] sm:$0x1]
        %v4298 = vld [vmem:[%s1272 + $0x28] sm:$0xf]
        %v4299 = vld [vmem:[%s1272 + $0x2c] sm:$0x1]
        %v4300 = vld [vmem:[%s1272 + $0x30] sm:$0xf]
        %v4301 = vld [vmem:[%s1272 + $0x34] sm:$0x1]
        %v4302 = vld [vmem:[%s1272 + $0x38] sm:$0xf]
        %v4303 = vld [vmem:[%s1272 + $0x3c] sm:$0x1]
        %v4305 = vshrl.u32 %v4288, 16
        %v4307 = vrot.slane %v4305, 4
        %v4308 = vshll.u32 %v4288, 16
        %v4310 = vrot.slane %v4308, 5
        %v4311 = vor.u32 %v4307, %v4310
        %v4312 = vrot.slane %v4311, 4
        %v4314 = vshll.u32 %v4289, 16
        %v4316 = vrot.slane %v4314, 5
        %v4317 = vsel %vm311, %v4312, %v4316
        %v4319 = vshrl.u32 %v4290, 16
        %v4321 = vrot.slane %v4319, 4
        %v4322 = vshll.u32 %v4290, 16
        %v4324 = vrot.slane %v4322, 5
        %v4325 = vor.u32 %v4321, %v4324
        %v4326 = vrot.slane %v4325, 4
        %v4328 = vshll.u32 %v4291, 16
        %v4330 = vrot.slane %v4328, 5
        %v4331 = vsel %vm311, %v4326, %v4330
        %v4333 = vshrl.u32 %v4292, 16
        %v4335 = vrot.slane %v4333, 4
        %v4336 = vshll.u32 %v4292, 16
        %v4338 = vrot.slane %v4336, 5
        %v4339 = vor.u32 %v4335, %v4338
        %v4340 = vrot.slane %v4339, 4
        %v4342 = vshll.u32 %v4293, 16
        %v4344 = vrot.slane %v4342, 5
        %v4345 = vsel %vm311, %v4340, %v4344
        %v4347 = vshrl.u32 %v4294, 16
        %v4349 = vrot.slane %v4347, 4
        %v4350 = vshll.u32 %v4294, 16
        %v4352 = vrot.slane %v4350, 5
        %v4353 = vor.u32 %v4349, %v4352
        %v4354 = vrot.slane %v4353, 4
        %v4356 = vshll.u32 %v4295, 16
        %v4358 = vrot.slane %v4356, 5
        %v4359 = vsel %vm311, %v4354, %v4358
        %v4361 = vshrl.u32 %v4296, 16
        %v4363 = vrot.slane %v4361, 4
        %v4364 = vshll.u32 %v4296, 16
        %v4366 = vrot.slane %v4364, 5
        %v4367 = vor.u32 %v4363, %v4366
        %v4368 = vrot.slane %v4367, 4
        %v4370 = vshll.u32 %v4297, 16
        %v4372 = vrot.slane %v4370, 5
        %v4373 = vsel %vm311, %v4368, %v4372
        %v4375 = vshrl.u32 %v4298, 16
        %v4377 = vrot.slane %v4375, 4
        %v4378 = vshll.u32 %v4298, 16
        %v4380 = vrot.slane %v4378, 5
        %v4381 = vor.u32 %v4377, %v4380
        %v4382 = vrot.slane %v4381, 4
        %v4384 = vshll.u32 %v4299, 16
        %v4386 = vrot.slane %v4384, 5
        %v4387 = vsel %vm311, %v4382, %v4386
        %v4389 = vshrl.u32 %v4300, 16
        %v4391 = vrot.slane %v4389, 4
        %v4392 = vshll.u32 %v4300, 16
        %v4394 = vrot.slane %v4392, 5
        %v4395 = vor.u32 %v4391, %v4394
        %v4396 = vrot.slane %v4395, 4
        %v4398 = vshll.u32 %v4301, 16
        %v4400 = vrot.slane %v4398, 5
        %v4401 = vsel %vm311, %v4396, %v4400
        %v4403 = vshrl.u32 %v4302, 16
        %v4405 = vrot.slane %v4403, 4
        %v4406 = vshll.u32 %v4302, 16
        %v4408 = vrot.slane %v4406, 5
        %v4409 = vor.u32 %v4405, %v4408
        %v4410 = vrot.slane %v4409, 4
        %v4412 = vshll.u32 %v4303, 16
        %v4414 = vrot.slane %v4412, 5
        %v4415 = vsel %vm311, %v4410, %v4414
        %s4416 = scalar_lea.vmem [#allocation8], 768
        %v4417 = vld [vmem:[%s4416] sm:$0xf]
        %v4418 = vld [vmem:[%s4416 + $0x4] sm:$0xf]
        %v4419 = vld [vmem:[%s4416 + $0x8] sm:$0xf]
        %v4420 = vld [vmem:[%s4416 + $0xc] sm:$0xf]
        %v4421 = vld [vmem:[%s4416 + $0x10] sm:$0xf]
        %v4422 = vld [vmem:[%s4416 + $0x14] sm:$0xf]
        %v4423 = vld [vmem:[%s4416 + $0x18] sm:$0xf]
        %v4424 = vld [vmem:[%s4416 + $0x1c] sm:$0xf]
        %v4425 = vld [vmem:[%s4416 + $0x20] sm:$0xf]
        %v4426 = vld [vmem:[%s4416 + $0x24] sm:$0xf]
        %v4427 = vld [vmem:[%s4416 + $0x28] sm:$0xf]
        %v4428 = vld [vmem:[%s4416 + $0x2c] sm:$0xf]
        %v4429 = vld [vmem:[%s4416 + $0x30] sm:$0xf]
        %v4430 = vld [vmem:[%s4416 + $0x34] sm:$0xf]
        %v4431 = vld [vmem:[%s4416 + $0x38] sm:$0xf]
        %v4432 = vld [vmem:[%s4416 + $0x3c] sm:$0xf]
        %v4433 = vld [vmem:[%s1272] sm:$0xe]
        %v4434 = vld [vmem:[%s1272 + $0x8] sm:$0xe]
        %v4435 = vld [vmem:[%s1272 + $0x10] sm:$0xe]
        %v4436 = vld [vmem:[%s1272 + $0x18] sm:$0xe]
        %v4437 = vld [vmem:[%s1272 + $0x20] sm:$0xe]
        %v4438 = vld [vmem:[%s1272 + $0x28] sm:$0xe]
        %v4439 = vld [vmem:[%s1272 + $0x30] sm:$0xe]
        %v4440 = vld [vmem:[%s1272 + $0x38] sm:$0xe]
        %v4457 = vrot.slane %v4433, 5
        %v4458 = vrot.slane %v4457, 4
        %v4459 = vrot.slane %v4289, 5
        %v4460 = vsel %vm2453, %v4458, %v4459
        %v4461 = vrot.slane %v4434, 5
        %v4462 = vrot.slane %v4461, 4
        %v4463 = vrot.slane %v4291, 5
        %v4464 = vsel %vm2453, %v4462, %v4463
        %v4465 = vrot.slane %v4435, 5
        %v4466 = vrot.slane %v4465, 4
        %v4467 = vrot.slane %v4293, 5
        %v4468 = vsel %vm2453, %v4466, %v4467
        %v4469 = vrot.slane %v4436, 5
        %v4470 = vrot.slane %v4469, 4
        %v4471 = vrot.slane %v4295, 5
        %v4472 = vsel %vm2453, %v4470, %v4471
        %v4473 = vrot.slane %v4437, 5
        %v4474 = vrot.slane %v4473, 4
        %v4475 = vrot.slane %v4297, 5
        %v4476 = vsel %vm2453, %v4474, %v4475
        %v4477 = vrot.slane %v4438, 5
        %v4478 = vrot.slane %v4477, 4
        %v4479 = vrot.slane %v4299, 5
        %v4480 = vsel %vm2453, %v4478, %v4479
        %v4481 = vrot.slane %v4439, 5
        %v4482 = vrot.slane %v4481, 4
        %v4483 = vrot.slane %v4301, 5
        %v4484 = vsel %vm2453, %v4482, %v4483
        %v4485 = vrot.slane %v4440, 5
        %v4486 = vrot.slane %v4485, 4
        %v4487 = vrot.slane %v4303, 5
        %v4488 = vsel %vm2453, %v4486, %v4487
        %s4489 = scalar_lea.vmem [#allocation8], 832
        %v4490 = vld [vmem:[%s4489] sm:$0xf]
        %v4491 = vld [vmem:[%s4489 + $0x4] sm:$0xf]
        %v4492 = vld [vmem:[%s4489 + $0x8] sm:$0xf]
        %v4493 = vld [vmem:[%s4489 + $0xc] sm:$0xf]
        %v4494 = vld [vmem:[%s4489 + $0x10] sm:$0xf]
        %v4495 = vld [vmem:[%s4489 + $0x14] sm:$0xf]
        %v4496 = vld [vmem:[%s4489 + $0x18] sm:$0xf]
        %v4497 = vld [vmem:[%s4489 + $0x1c] sm:$0xf]
        %v4498 = vld [vmem:[%s4489 + $0x20] sm:$0xf]
        %v4499 = vld [vmem:[%s4489 + $0x24] sm:$0xf]
        %v4500 = vld [vmem:[%s4489 + $0x28] sm:$0xf]
        %v4501 = vld [vmem:[%s4489 + $0x2c] sm:$0xf]
        %v4502 = vld [vmem:[%s4489 + $0x30] sm:$0xf]
        %v4503 = vld [vmem:[%s4489 + $0x34] sm:$0xf]
        %v4504 = vld [vmem:[%s4489 + $0x38] sm:$0xf]
        %v4505 = vld [vmem:[%s4489 + $0x3c] sm:$0xf]
        %v4506 = vunpack.c.l.b16 %v4460
        %v4507 = vunpack.c.l.b16 %v4464
        %v4508 = vunpack.c.l.b16 %v4468
        %v4509 = vunpack.c.l.b16 %v4472
        %v4510 = vunpack.c.l.b16 %v4476
        %v4511 = vunpack.c.l.b16 %v4480
        %v4512 = vunpack.c.l.b16 %v4484
        %v4513 = vunpack.c.l.b16 %v4488
        %v4514 = vpack.c.b16 %v4507, %v4506
        %v4515 = vpack.c.b16 %v4509, %v4508
        %v4516 = vpack.c.b16 %v4511, %v4510
        %v4517 = vpack.c.b16 %v4513, %v4512
        %v4538 = vunpack.c.l.b16 %v4490
        %v4539 = vunpack.c.l.b16 %v4491
        %v4540 = vunpack.c.l.b16 %v4492
        %v4541 = vunpack.c.l.b16 %v4493
        %v4542 = vunpack.c.l.b16 %v4494
        %v4543 = vunpack.c.l.b16 %v4495
        %v4544 = vunpack.c.l.b16 %v4496
        %v4545 = vunpack.c.l.b16 %v4497
        %v4546 = vunpack.c.l.b16 %v4498
        %v4547 = vunpack.c.l.b16 %v4499
        %v4548 = vunpack.c.l.b16 %v4500
        %v4549 = vunpack.c.l.b16 %v4501
        %v4550 = vunpack.c.l.b16 %v4502
        %v4551 = vunpack.c.l.b16 %v4503
        %v4552 = vunpack.c.l.b16 %v4504
        %v4553 = vunpack.c.l.b16 %v4505
        %v4554 = vpack.c.b16 %v4539, %v4538
        %v4555 = vpack.c.b16 %v4541, %v4540
        %v4556 = vpack.c.b16 %v4543, %v4542
        %v4557 = vpack.c.b16 %v4545, %v4544
        %v4558 = vpack.c.b16 %v4547, %v4546
        %v4559 = vpack.c.b16 %v4549, %v4548
        %v4560 = vpack.c.b16 %v4551, %v4550
        %v4561 = vpack.c.b16 %v4553, %v4552
        %4570 = vmatprep.subr.bf16.mxu0 0
        %4571 = vmatpush1.bf16.msra.mxu0 %v4554
        %4572 = vmatprep.subr.bf16.mxu0 0
        %4573 = vmatpush1.bf16.msra.mxu0 %v4555
        %4574 = vmatprep.subr.bf16.mxu0 0
        %4575 = vmatpush1.bf16.msra.mxu0 %v4556
        %4576 = vmatprep.subr.bf16.mxu0 0
        %4577 = vmatpush1.bf16.msra.mxu0 %v4557
        %4578 = vmatprep.subr.bf16.mxu0 0
        %4579 = vmatpush1.bf16.msra.mxu0 %v4558
        %4580 = vmatprep.subr.bf16.mxu0 0
        %4581 = vmatpush1.bf16.msra.mxu0 %v4559
        %4582 = vmatprep.subr.bf16.mxu0 0
        %4583 = vmatpush1.bf16.msra.mxu0 %v4560
        %4584 = vmatprep.subr.bf16.mxu0 0
        %4585 = vmatpush1.bf16.msra.mxu0 %v4561
        %4586 = vmatprep.subr.bf16.mxu0 0
        %4587 = vmatpush1.bf16.msra.mxu0 0
        %4588 = vmatprep.subr.bf16.mxu0 0
        %4589 = vmatpush1.bf16.msra.mxu0 0
        %4590 = vmatprep.subr.bf16.mxu0 0
        %4591 = vmatpush1.bf16.msra.mxu0 0
        %4592 = vmatprep.subr.bf16.mxu0 0
        %4593 = vmatpush1.bf16.msra.mxu0 0
        %4594 = vmatprep.subr.bf16.mxu0 0
        %4595 = vmatpush1.bf16.msra.mxu0 0
        %4596 = vmatprep.subr.bf16.mxu0 0
        %4597 = vmatpush1.bf16.msra.mxu0 0
        %4598 = vmatprep.subr.bf16.mxu0 0
        %4599 = vmatpush1.bf16.msra.mxu0 0
        %4600 = vmatprep.subr.bf16.mxu0 0
        %4601 = vmatpush1.bf16.msra.mxu0 0
        %4602 = vmatprep.mubr.bf16.mxu0 0
        %4603 = vmatmul.mubr.bf16.gmra.mrb[0].mxu0 %v4514
        %v4604 = vpop.f32.mrb[0].mxu0
        %v4605 = vadd.f32 0.0, %v4604
        %v4606 = vpop.f32.mrb[0].mxu0
        %v4607 = vpop.f32.mrb[0].mxu0
        %v4608 = vadd.f32 0.0, %v4607
        %v4609 = vpop.f32.mrb[0].mxu0
        %4610 = vmatprep.mubr.bf16.mxu0 0
        %4611 = vmatmul.mubr.bf16.gmra.mrb[0].mxu0 %v4515
        %v4612 = vpop.f32.mrb[0].mxu0
        %v4613 = vadd.f32 0.0, %v4612
        %v4614 = vpop.f32.mrb[0].mxu0
        %v4615 = vpop.f32.mrb[0].mxu0
        %v4616 = vadd.f32 0.0, %v4615
        %v4617 = vpop.f32.mrb[0].mxu0
        %4618 = vmatprep.mubr.bf16.mxu0 0
        %4619 = vmatmul.mubr.bf16.gmra.mrb[0].mxu0 %v4516
        %v4620 = vpop.f32.mrb[0].mxu0
        %v4621 = vadd.f32 0.0, %v4620
        %v4622 = vpop.f32.mrb[0].mxu0
        %v4623 = vpop.f32.mrb[0].mxu0
        %v4624 = vadd.f32 0.0, %v4623
        %v4625 = vpop.f32.mrb[0].mxu0
        %4626 = vmatprep.mubr.bf16.mxu0 0
        %4627 = vmatmul.mubr.bf16.gmra.mrb[0].mxu0 %v4517
        %v4628 = vpop.f32.mrb[0].mxu0
        %v4629 = vadd.f32 0.0, %v4628
        %v4630 = vpop.f32.mrb[0].mxu0
        %v4631 = vpop.f32.mrb[0].mxu0
        %v4632 = vadd.f32 0.0, %v4631
        %v4633 = vpop.f32.mrb[0].mxu0
        %4634 = vdwg.mxu0
        %v4635 = vunpack.c.l.b16 %v4317
        %v4636 = vunpack.c.l.b16 %v4331
        %v4637 = vunpack.c.l.b16 %v4345
        %v4638 = vunpack.c.l.b16 %v4359
        %v4639 = vunpack.c.l.b16 %v4373
        %v4640 = vunpack.c.l.b16 %v4387
        %v4641 = vunpack.c.l.b16 %v4401
        %v4642 = vunpack.c.l.b16 %v4415
        %v4643 = vpack.c.b16 %v4636, %v4635
        %v4644 = vpack.c.b16 %v4638, %v4637
        %v4645 = vpack.c.b16 %v4640, %v4639
        %v4646 = vpack.c.b16 %v4642, %v4641
        %v4667 = vunpack.c.l.b16 %v4417
        %v4668 = vunpack.c.l.b16 %v4418
        %v4669 = vunpack.c.l.b16 %v4419
        %v4670 = vunpack.c.l.b16 %v4420
        %v4671 = vunpack.c.l.b16 %v4421
        %v4672 = vunpack.c.l.b16 %v4422
        %v4673 = vunpack.c.l.b16 %v4423
        %v4674 = vunpack.c.l.b16 %v4424
        %v4675 = vunpack.c.l.b16 %v4425
        %v4676 = vunpack.c.l.b16 %v4426
        %v4677 = vunpack.c.l.b16 %v4427
        %v4678 = vunpack.c.l.b16 %v4428
        %v4679 = vunpack.c.l.b16 %v4429
        %v4680 = vunpack.c.l.b16 %v4430
        %v4681 = vunpack.c.l.b16 %v4431
        %v4682 = vunpack.c.l.b16 %v4432
        %v4683 = vpack.c.b16 %v4668, %v4667
        %v4684 = vpack.c.b16 %v4670, %v4669
        %v4685 = vpack.c.b16 %v4672, %v4671
        %v4686 = vpack.c.b16 %v4674, %v4673
        %v4687 = vpack.c.b16 %v4676, %v4675
        %v4688 = vpack.c.b16 %v4678, %v4677
        %v4689 = vpack.c.b16 %v4680, %v4679
        %v4690 = vpack.c.b16 %v4682, %v4681
        %4699 = vmatprep.subr.bf16.mxu0 0
        %4700 = vmatpush1.bf16.msra.mxu0 %v4683
        %4701 = vmatprep.subr.bf16.mxu0 0
        %4702 = vmatpush1.bf16.msra.mxu0 %v4684
        %4703 = vmatprep.subr.bf16.mxu0 0
        %4704 = vmatpush1.bf16.msra.mxu0 %v4685
        %4705 = vmatprep.subr.bf16.mxu0 0
        %4706 = vmatpush1.bf16.msra.mxu0 %v4686
        %4707 = vmatprep.subr.bf16.mxu0 0
        %4708 = vmatpush1.bf16.msra.mxu0 %v4687
        %4709 = vmatprep.subr.bf16.mxu0 0
        %4710 = vmatpush1.bf16.msra.mxu0 %v4688
        %4711 = vmatprep.subr.bf16.mxu0 0
        %4712 = vmatpush1.bf16.msra.mxu0 %v4689
        %4713 = vmatprep.subr.bf16.mxu0 0
        %4714 = vmatpush1.bf16.msra.mxu0 %v4690
        %4715 = vmatprep.subr.bf16.mxu0 0
        %4716 = vmatpush1.bf16.msra.mxu0 0
        %4717 = vmatprep.subr.bf16.mxu0 0
        %4718 = vmatpush1.bf16.msra.mxu0 0
        %4719 = vmatprep.subr.bf16.mxu0 0
        %4720 = vmatpush1.bf16.msra.mxu0 0
        %4721 = vmatprep.subr.bf16.mxu0 0
        %4722 = vmatpush1.bf16.msra.mxu0 0
        %4723 = vmatprep.subr.bf16.mxu0 0
        %4724 = vmatpush1.bf16.msra.mxu0 0
        %4725 = vmatprep.subr.bf16.mxu0 0
        %4726 = vmatpush1.bf16.msra.mxu0 0
        %4727 = vmatprep.subr.bf16.mxu0 0
        %4728 = vmatpush1.bf16.msra.mxu0 0
        %4729 = vmatprep.subr.bf16.mxu0 0
        %4730 = vmatpush1.bf16.msra.mxu0 0
        %4731 = vmatprep.mubr.bf16.mxu0 0
        %4732 = vmatmul.mubr.bf16.gmra.mrb[0].mxu0 %v4643
        %v4733 = vpop.f32.mrb[0].mxu0
        %v4734 = vadd.f32 %v4605, %v4733
        %v4735 = vpop.f32.mrb[0].mxu0
        %v4736 = vpop.f32.mrb[0].mxu0
        %v4737 = vadd.f32 %v4608, %v4736
        %v4738 = vpop.f32.mrb[0].mxu0
        %4739 = vmatprep.mubr.bf16.mxu0 0
        %4740 = vmatmul.mubr.bf16.gmra.mrb[0].mxu0 %v4644
        %v4741 = vpop.f32.mrb[0].mxu0
        %v4742 = vadd.f32 %v4613, %v4741
        %v4743 = vpop.f32.mrb[0].mxu0
        %v4744 = vpop.f32.mrb[0].mxu0
        %v4745 = vadd.f32 %v4616, %v4744
        %v4746 = vpop.f32.mrb[0].mxu0
        %4747 = vmatprep.mubr.bf16.mxu0 0
        %4748 = vmatmul.mubr.bf16.gmra.mrb[0].mxu0 %v4645
        %v4749 = vpop.f32.mrb[0].mxu0
        %v4750 = vadd.f32 %v4621, %v4749
        %v4751 = vpop.f32.mrb[0].mxu0
        %v4752 = vpop.f32.mrb[0].mxu0
        %v4753 = vadd.f32 %v4624, %v4752
        %v4754 = vpop.f32.mrb[0].mxu0
        %4755 = vmatprep.mubr.bf16.mxu0 0
        %4756 = vmatmul.mubr.bf16.gmra.mrb[0].mxu0 %v4646
        %v4757 = vpop.f32.mrb[0].mxu0
        %v4758 = vadd.f32 %v4629, %v4757
        %v4759 = vpop.f32.mrb[0].mxu0
        %v4760 = vpop.f32.mrb[0].mxu0
        %v4761 = vadd.f32 %v4632, %v4760
        %v4762 = vpop.f32.mrb[0].mxu0
        %4763 = vdwg.mxu0
        %v4764 = vld [vmem:[%s3758] sm:$0xf]
        %v4765 = vld [vmem:[%s3758 + $0x4] sm:$0x1]
        %v4766 = vld [vmem:[%s3758 + $0x8] sm:$0xf]
        %v4767 = vld [vmem:[%s3758 + $0xc] sm:$0x1]
        %v4768 = vld [vmem:[%s3758 + $0x10] sm:$0xf]
        %v4769 = vld [vmem:[%s3758 + $0x14] sm:$0x1]
        %v4770 = vld [vmem:[%s3758 + $0x18] sm:$0xf]
        %v4771 = vld [vmem:[%s3758 + $0x1c] sm:$0x1]
        %v4772 = vld [vmem:[%s3758 + $0x20] sm:$0xf]
        %v4773 = vld [vmem:[%s3758 + $0x24] sm:$0x1]
        %v4774 = vld [vmem:[%s3758 + $0x28] sm:$0xf]
        %v4775 = vld [vmem:[%s3758 + $0x2c] sm:$0x1]
        %v4776 = vld [vmem:[%s3758 + $0x30] sm:$0xf]
        %v4777 = vld [vmem:[%s3758 + $0x34] sm:$0x1]
        %v4778 = vld [vmem:[%s3758 + $0x38] sm:$0xf]
        %v4779 = vld [vmem:[%s3758 + $0x3c] sm:$0x1]
        %v4781 = vshrl.u32 %v4764, 16
        %v4783 = vrot.slane %v4781, 4
        %v4784 = vshll.u32 %v4764, 16
        %v4786 = vrot.slane %v4784, 5
        %v4787 = vor.u32 %v4783, %v4786
        %v4788 = vrot.slane %v4787, 4
        %v4790 = vshll.u32 %v4765, 16
        %v4792 = vrot.slane %v4790, 5
        %v4793 = vsel %vm311, %v4788, %v4792
        %v4795 = vshrl.u32 %v4766, 16
        %v4797 = vrot.slane %v4795, 4
        %v4798 = vshll.u32 %v4766, 16
        %v4800 = vrot.slane %v4798, 5
        %v4801 = vor.u32 %v4797, %v4800
        %v4802 = vrot.slane %v4801, 4
        %v4804 = vshll.u32 %v4767, 16
        %v4806 = vrot.slane %v4804, 5
        %v4807 = vsel %vm311, %v4802, %v4806
        %v4809 = vshrl.u32 %v4768, 16
        %v4811 = vrot.slane %v4809, 4
        %v4812 = vshll.u32 %v4768, 16
        %v4814 = vrot.slane %v4812, 5
        %v4815 = vor.u32 %v4811, %v4814
        %v4816 = vrot.slane %v4815, 4
        %v4818 = vshll.u32 %v4769, 16
        %v4820 = vrot.slane %v4818, 5
        %v4821 = vsel %vm311, %v4816, %v4820
        %v4823 = vshrl.u32 %v4770, 16
        %v4825 = vrot.slane %v4823, 4
        %v4826 = vshll.u32 %v4770, 16
        %v4828 = vrot.slane %v4826, 5
        %v4829 = vor.u32 %v4825, %v4828
        %v4830 = vrot.slane %v4829, 4
        %v4832 = vshll.u32 %v4771, 16
        %v4834 = vrot.slane %v4832, 5
        %v4835 = vsel %vm311, %v4830, %v4834
        %v4837 = vshrl.u32 %v4772, 16
        %v4839 = vrot.slane %v4837, 4
        %v4840 = vshll.u32 %v4772, 16
        %v4842 = vrot.slane %v4840, 5
        %v4843 = vor.u32 %v4839, %v4842
        %v4844 = vrot.slane %v4843, 4
        %v4846 = vshll.u32 %v4773, 16
        %v4848 = vrot.slane %v4846, 5
        %v4849 = vsel %vm311, %v4844, %v4848
        %v4851 = vshrl.u32 %v4774, 16
        %v4853 = vrot.slane %v4851, 4
        %v4854 = vshll.u32 %v4774, 16
        %v4856 = vrot.slane %v4854, 5
        %v4857 = vor.u32 %v4853, %v4856
        %v4858 = vrot.slane %v4857, 4
        %v4860 = vshll.u32 %v4775, 16
        %v4862 = vrot.slane %v4860, 5
        %v4863 = vsel %vm311, %v4858, %v4862
        %v4865 = vshrl.u32 %v4776, 16
        %v4867 = vrot.slane %v4865, 4
        %v4868 = vshll.u32 %v4776, 16
        %v4870 = vrot.slane %v4868, 5
        %v4871 = vor.u32 %v4867, %v4870
        %v4872 = vrot.slane %v4871, 4
        %v4874 = vshll.u32 %v4777, 16
        %v4876 = vrot.slane %v4874, 5
        %v4877 = vsel %vm311, %v4872, %v4876
        %v4879 = vshrl.u32 %v4778, 16
        %v4881 = vrot.slane %v4879, 4
        %v4882 = vshll.u32 %v4778, 16
        %v4884 = vrot.slane %v4882, 5
        %v4885 = vor.u32 %v4881, %v4884
        %v4886 = vrot.slane %v4885, 4
        %v4888 = vshll.u32 %v4779, 16
        %v4890 = vrot.slane %v4888, 5
        %v4891 = vsel %vm311, %v4886, %v4890
        %s4892 = scalar_lea.vmem [#allocation8], 896
        %v4893 = vld [vmem:[%s4892] sm:$0xf]
        %v4894 = vld [vmem:[%s4892 + $0x4] sm:$0xf]
        %v4895 = vld [vmem:[%s4892 + $0x8] sm:$0xf]
        %v4896 = vld [vmem:[%s4892 + $0xc] sm:$0xf]
        %v4897 = vld [vmem:[%s4892 + $0x10] sm:$0xf]
        %v4898 = vld [vmem:[%s4892 + $0x14] sm:$0xf]
        %v4899 = vld [vmem:[%s4892 + $0x18] sm:$0xf]
        %v4900 = vld [vmem:[%s4892 + $0x1c] sm:$0xf]
        %v4901 = vld [vmem:[%s4892 + $0x20] sm:$0xf]
        %v4902 = vld [vmem:[%s4892 + $0x24] sm:$0xf]
        %v4903 = vld [vmem:[%s4892 + $0x28] sm:$0xf]
        %v4904 = vld [vmem:[%s4892 + $0x2c] sm:$0xf]
        %v4905 = vld [vmem:[%s4892 + $0x30] sm:$0xf]
        %v4906 = vld [vmem:[%s4892 + $0x34] sm:$0xf]
        %v4907 = vld [vmem:[%s4892 + $0x38] sm:$0xf]
        %v4908 = vld [vmem:[%s4892 + $0x3c] sm:$0xf]
        %v4909 = vunpack.c.l.b16 %v4793
        %v4910 = vunpack.c.l.b16 %v4807
        %v4911 = vunpack.c.l.b16 %v4821
        %v4912 = vunpack.c.l.b16 %v4835
        %v4913 = vunpack.c.l.b16 %v4849
        %v4914 = vunpack.c.l.b16 %v4863
        %v4915 = vunpack.c.l.b16 %v4877
        %v4916 = vunpack.c.l.b16 %v4891
        %v4917 = vpack.c.b16 %v4910, %v4909
        %v4918 = vpack.c.b16 %v4912, %v4911
        %v4919 = vpack.c.b16 %v4914, %v4913
        %v4920 = vpack.c.b16 %v4916, %v4915
        %v4941 = vunpack.c.l.b16 %v4893
        %v4942 = vunpack.c.l.b16 %v4894
        %v4943 = vunpack.c.l.b16 %v4895
        %v4944 = vunpack.c.l.b16 %v4896
        %v4945 = vunpack.c.l.b16 %v4897
        %v4946 = vunpack.c.l.b16 %v4898
        %v4947 = vunpack.c.l.b16 %v4899
        %v4948 = vunpack.c.l.b16 %v4900
        %v4949 = vunpack.c.l.b16 %v4901
        %v4950 = vunpack.c.l.b16 %v4902
        %v4951 = vunpack.c.l.b16 %v4903
        %v4952 = vunpack.c.l.b16 %v4904
        %v4953 = vunpack.c.l.b16 %v4905
        %v4954 = vunpack.c.l.b16 %v4906
        %v4955 = vunpack.c.l.b16 %v4907
        %v4956 = vunpack.c.l.b16 %v4908
        %v4957 = vpack.c.b16 %v4942, %v4941
        %v4958 = vpack.c.b16 %v4944, %v4943
        %v4959 = vpack.c.b16 %v4946, %v4945
        %v4960 = vpack.c.b16 %v4948, %v4947
        %v4961 = vpack.c.b16 %v4950, %v4949
        %v4962 = vpack.c.b16 %v4952, %v4951
        %v4963 = vpack.c.b16 %v4954, %v4953
        %v4964 = vpack.c.b16 %v4956, %v4955
        %4973 = vmatprep.subr.bf16.mxu0 0
        %4974 = vmatpush1.bf16.msra.mxu0 %v4957
        %4975 = vmatprep.subr.bf16.mxu0 0
        %4976 = vmatpush1.bf16.msra.mxu0 %v4958
        %4977 = vmatprep.subr.bf16.mxu0 0
        %4978 = vmatpush1.bf16.msra.mxu0 %v4959
        %4979 = vmatprep.subr.bf16.mxu0 0
        %4980 = vmatpush1.bf16.msra.mxu0 %v4960
        %4981 = vmatprep.subr.bf16.mxu0 0
        %4982 = vmatpush1.bf16.msra.mxu0 %v4961
        %4983 = vmatprep.subr.bf16.mxu0 0
        %4984 = vmatpush1.bf16.msra.mxu0 %v4962
        %4985 = vmatprep.subr.bf16.mxu0 0
        %4986 = vmatpush1.bf16.msra.mxu0 %v4963
        %4987 = vmatprep.subr.bf16.mxu0 0
        %4988 = vmatpush1.bf16.msra.mxu0 %v4964
        %4989 = vmatprep.subr.bf16.mxu0 0
        %4990 = vmatpush1.bf16.msra.mxu0 0
        %4991 = vmatprep.subr.bf16.mxu0 0
        %4992 = vmatpush1.bf16.msra.mxu0 0
        %4993 = vmatprep.subr.bf16.mxu0 0
        %4994 = vmatpush1.bf16.msra.mxu0 0
        %4995 = vmatprep.subr.bf16.mxu0 0
        %4996 = vmatpush1.bf16.msra.mxu0 0
        %4997 = vmatprep.subr.bf16.mxu0 0
        %4998 = vmatpush1.bf16.msra.mxu0 0
        %4999 = vmatprep.subr.bf16.mxu0 0
        %5000 = vmatpush1.bf16.msra.mxu0 0
        %5001 = vmatprep.subr.bf16.mxu0 0
        %5002 = vmatpush1.bf16.msra.mxu0 0
        %5003 = vmatprep.subr.bf16.mxu0 0
        %5004 = vmatpush1.bf16.msra.mxu0 0
        %5005 = vmatprep.mubr.bf16.mxu0 0
        %5006 = vmatmul.mubr.bf16.gmra.mrb[0].mxu0 %v4917
        %v5007 = vpop.f32.mrb[0].mxu0
        %v5008 = vadd.f32 0.0, %v5007
        %v5009 = vpop.f32.mrb[0].mxu0
        %v5010 = vpop.f32.mrb[0].mxu0
        %v5011 = vadd.f32 0.0, %v5010
        %v5012 = vpop.f32.mrb[0].mxu0
        %5013 = vmatprep.mubr.bf16.mxu0 0
        %5014 = vmatmul.mubr.bf16.gmra.mrb[0].mxu0 %v4918
        %v5015 = vpop.f32.mrb[0].mxu0
        %v5016 = vadd.f32 0.0, %v5015
        %v5017 = vpop.f32.mrb[0].mxu0
        %v5018 = vpop.f32.mrb[0].mxu0
        %v5019 = vadd.f32 0.0, %v5018
        %v5020 = vpop.f32.mrb[0].mxu0
        %5021 = vmatprep.mubr.bf16.mxu0 0
        %5022 = vmatmul.mubr.bf16.gmra.mrb[0].mxu0 %v4919
        %v5023 = vpop.f32.mrb[0].mxu0
        %v5024 = vadd.f32 0.0, %v5023
        %v5025 = vpop.f32.mrb[0].mxu0
        %v5026 = vpop.f32.mrb[0].mxu0
        %v5027 = vadd.f32 0.0, %v5026
        %v5028 = vpop.f32.mrb[0].mxu0
        %5029 = vmatprep.mubr.bf16.mxu0 0
        %5030 = vmatmul.mubr.bf16.gmra.mrb[0].mxu0 %v4920
        %v5031 = vpop.f32.mrb[0].mxu0
        %v5032 = vadd.f32 0.0, %v5031
        %v5033 = vpop.f32.mrb[0].mxu0
        %v5034 = vpop.f32.mrb[0].mxu0
        %v5035 = vadd.f32 0.0, %v5034
        %v5036 = vpop.f32.mrb[0].mxu0
        %5037 = vdwg.mxu0
        %v5038 = vadd.f32 %v4734, %v5008
        %v5039 = vadd.f32 %v4737, %v5011
        %v5040 = vadd.f32 %v4742, %v5016
        %v5041 = vadd.f32 %v4745, %v5019
        %v5042 = vadd.f32 %v4750, %v5024
        %v5043 = vadd.f32 %v4753, %v5027
        %v5044 = vadd.f32 %v4758, %v5032
        %v5045 = vadd.f32 %v4761, %v5035
        %v5046 = vld [vmem:[%s3758] sm:$0xe]
        %v5047 = vld [vmem:[%s3758 + $0x8] sm:$0xe]
        %v5048 = vld [vmem:[%s3758 + $0x10] sm:$0xe]
        %v5049 = vld [vmem:[%s3758 + $0x18] sm:$0xe]
        %v5050 = vld [vmem:[%s3758 + $0x20] sm:$0xe]
        %v5051 = vld [vmem:[%s3758 + $0x28] sm:$0xe]
        %v5052 = vld [vmem:[%s3758 + $0x30] sm:$0xe]
        %v5053 = vld [vmem:[%s3758 + $0x38] sm:$0xe]
        %v5070 = vrot.slane %v5046, 5
        %v5071 = vrot.slane %v5070, 4
        %v5072 = vrot.slane %v4765, 5
        %v5073 = vsel %vm2453, %v5071, %v5072
        %v5074 = vrot.slane %v5047, 5
        %v5075 = vrot.slane %v5074, 4
        %v5076 = vrot.slane %v4767, 5
        %v5077 = vsel %vm2453, %v5075, %v5076
        %v5078 = vrot.slane %v5048, 5
        %v5079 = vrot.slane %v5078, 4
        %v5080 = vrot.slane %v4769, 5
        %v5081 = vsel %vm2453, %v5079, %v5080
        %v5082 = vrot.slane %v5049, 5
        %v5083 = vrot.slane %v5082, 4
        %v5084 = vrot.slane %v4771, 5
        %v5085 = vsel %vm2453, %v5083, %v5084
        %v5086 = vrot.slane %v5050, 5
        %v5087 = vrot.slane %v5086, 4
        %v5088 = vrot.slane %v4773, 5
        %v5089 = vsel %vm2453, %v5087, %v5088
        %v5090 = vrot.slane %v5051, 5
        %v5091 = vrot.slane %v5090, 4
        %v5092 = vrot.slane %v4775, 5
        %v5093 = vsel %vm2453, %v5091, %v5092
        %v5094 = vrot.slane %v5052, 5
        %v5095 = vrot.slane %v5094, 4
        %v5096 = vrot.slane %v4777, 5
        %v5097 = vsel %vm2453, %v5095, %v5096
        %v5098 = vrot.slane %v5053, 5
        %v5099 = vrot.slane %v5098, 4
        %v5100 = vrot.slane %v4779, 5
        %v5101 = vsel %vm2453, %v5099, %v5100
        %s5102 = scalar_lea.vmem [#allocation8], 960
        %v5103 = vld [vmem:[%s5102] sm:$0xf]
        %v5104 = vld [vmem:[%s5102 + $0x4] sm:$0xf]
        %v5105 = vld [vmem:[%s5102 + $0x8] sm:$0xf]
        %v5106 = vld [vmem:[%s5102 + $0xc] sm:$0xf]
        %v5107 = vld [vmem:[%s5102 + $0x10] sm:$0xf]
        %v5108 = vld [vmem:[%s5102 + $0x14] sm:$0xf]
        %v5109 = vld [vmem:[%s5102 + $0x18] sm:$0xf]
        %v5110 = vld [vmem:[%s5102 + $0x1c] sm:$0xf]
        %v5111 = vld [vmem:[%s5102 + $0x20] sm:$0xf]
        %v5112 = vld [vmem:[%s5102 + $0x24] sm:$0xf]
        %v5113 = vld [vmem:[%s5102 + $0x28] sm:$0xf]
        %v5114 = vld [vmem:[%s5102 + $0x2c] sm:$0xf]
        %v5115 = vld [vmem:[%s5102 + $0x30] sm:$0xf]
        %v5116 = vld [vmem:[%s5102 + $0x34] sm:$0xf]
        %v5117 = vld [vmem:[%s5102 + $0x38] sm:$0xf]
        %v5118 = vld [vmem:[%s5102 + $0x3c] sm:$0xf]
        %v5119 = vunpack.c.l.b16 %v5073
        %v5120 = vunpack.c.l.b16 %v5077
        %v5121 = vunpack.c.l.b16 %v5081
        %v5122 = vunpack.c.l.b16 %v5085
        %v5123 = vunpack.c.l.b16 %v5089
        %v5124 = vunpack.c.l.b16 %v5093
        %v5125 = vunpack.c.l.b16 %v5097
        %v5126 = vunpack.c.l.b16 %v5101
        %v5127 = vpack.c.b16 %v5120, %v5119
        %v5128 = vpack.c.b16 %v5122, %v5121
        %v5129 = vpack.c.b16 %v5124, %v5123
        %v5130 = vpack.c.b16 %v5126, %v5125
        %v5151 = vunpack.c.l.b16 %v5103
        %v5152 = vunpack.c.l.b16 %v5104
        %v5153 = vunpack.c.l.b16 %v5105
        %v5154 = vunpack.c.l.b16 %v5106
        %v5155 = vunpack.c.l.b16 %v5107
        %v5156 = vunpack.c.l.b16 %v5108
        %v5157 = vunpack.c.l.b16 %v5109
        %v5158 = vunpack.c.l.b16 %v5110
        %v5159 = vunpack.c.l.b16 %v5111
        %v5160 = vunpack.c.l.b16 %v5112
        %v5161 = vunpack.c.l.b16 %v5113
        %v5162 = vunpack.c.l.b16 %v5114
        %v5163 = vunpack.c.l.b16 %v5115
        %v5164 = vunpack.c.l.b16 %v5116
        %v5165 = vunpack.c.l.b16 %v5117
        %v5166 = vunpack.c.l.b16 %v5118
        %v5167 = vpack.c.b16 %v5152, %v5151
        %v5168 = vpack.c.b16 %v5154, %v5153
        %v5169 = vpack.c.b16 %v5156, %v5155
        %v5170 = vpack.c.b16 %v5158, %v5157
        %v5171 = vpack.c.b16 %v5160, %v5159
        %v5172 = vpack.c.b16 %v5162, %v5161
        %v5173 = vpack.c.b16 %v5164, %v5163
        %v5174 = vpack.c.b16 %v5166, %v5165
        %5183 = vmatprep.subr.bf16.mxu0 0
        %5184 = vmatpush1.bf16.msra.mxu0 %v5167
        %5185 = vmatprep.subr.bf16.mxu0 0
        %5186 = vmatpush1.bf16.msra.mxu0 %v5168
        %5187 = vmatprep.subr.bf16.mxu0 0
        %5188 = vmatpush1.bf16.msra.mxu0 %v5169
        %5189 = vmatprep.subr.bf16.mxu0 0
        %5190 = vmatpush1.bf16.msra.mxu0 %v5170
        %5191 = vmatprep.subr.bf16.mxu0 0
        %5192 = vmatpush1.bf16.msra.mxu0 %v5171
        %5193 = vmatprep.subr.bf16.mxu0 0
        %5194 = vmatpush1.bf16.msra.mxu0 %v5172
        %5195 = vmatprep.subr.bf16.mxu0 0
        %5196 = vmatpush1.bf16.msra.mxu0 %v5173
        %5197 = vmatprep.subr.bf16.mxu0 0
        %5198 = vmatpush1.bf16.msra.mxu0 %v5174
        %5199 = vmatprep.subr.bf16.mxu0 0
        %5200 = vmatpush1.bf16.msra.mxu0 0
        %5201 = vmatprep.subr.bf16.mxu0 0
        %5202 = vmatpush1.bf16.msra.mxu0 0
        %5203 = vmatprep.subr.bf16.mxu0 0
        %5204 = vmatpush1.bf16.msra.mxu0 0
        %5205 = vmatprep.subr.bf16.mxu0 0
        %5206 = vmatpush1.bf16.msra.mxu0 0
        %5207 = vmatprep.subr.bf16.mxu0 0
        %5208 = vmatpush1.bf16.msra.mxu0 0
        %5209 = vmatprep.subr.bf16.mxu0 0
        %5210 = vmatpush1.bf16.msra.mxu0 0
        %5211 = vmatprep.subr.bf16.mxu0 0
        %5212 = vmatpush1.bf16.msra.mxu0 0
        %5213 = vmatprep.subr.bf16.mxu0 0
        %5214 = vmatpush1.bf16.msra.mxu0 0
        %5215 = vmatprep.mubr.bf16.mxu0 0
        %5216 = vmatmul.mubr.bf16.gmra.mrb[0].mxu0 %v5127
        %v5217 = vpop.f32.mrb[0].mxu0
        %v5218 = vadd.f32 0.0, %v5217
        %v5219 = vpop.f32.mrb[0].mxu0
        %v5220 = vpop.f32.mrb[0].mxu0
        %v5221 = vadd.f32 0.0, %v5220
        %v5222 = vpop.f32.mrb[0].mxu0
        %5223 = vmatprep.mubr.bf16.mxu0 0
        %5224 = vmatmul.mubr.bf16.gmra.mrb[0].mxu0 %v5128
        %v5225 = vpop.f32.mrb[0].mxu0
        %v5226 = vadd.f32 0.0, %v5225
        %v5227 = vpop.f32.mrb[0].mxu0
        %v5228 = vpop.f32.mrb[0].mxu0
        %v5229 = vadd.f32 0.0, %v5228
        %v5230 = vpop.f32.mrb[0].mxu0
        %5231 = vmatprep.mubr.bf16.mxu0 0
        %5232 = vmatmul.mubr.bf16.gmra.mrb[0].mxu0 %v5129
        %v5233 = vpop.f32.mrb[0].mxu0
        %v5234 = vadd.f32 0.0, %v5233
        %v5235 = vpop.f32.mrb[0].mxu0
        %v5236 = vpop.f32.mrb[0].mxu0
        %v5237 = vadd.f32 0.0, %v5236
        %v5238 = vpop.f32.mrb[0].mxu0
        %5239 = vmatprep.mubr.bf16.mxu0 0
        %5240 = vmatmul.mubr.bf16.gmra.mrb[0].mxu0 %v5130
        %v5241 = vpop.f32.mrb[0].mxu0
        %v5242 = vadd.f32 0.0, %v5241
        %v5243 = vpop.f32.mrb[0].mxu0
        %v5244 = vpop.f32.mrb[0].mxu0
        %v5245 = vadd.f32 0.0, %v5244
        %v5246 = vpop.f32.mrb[0].mxu0
        %5247 = vdwg.mxu0
        %v5248 = vadd.f32 %v5038, %v5218
        %v5249 = vadd.f32 %v5039, %v5221
        %v5250 = vadd.f32 %v5040, %v5226
        %v5251 = vadd.f32 %v5041, %v5229
        %v5252 = vadd.f32 %v5042, %v5234
        %v5253 = vadd.f32 %v5043, %v5237
        %v5254 = vadd.f32 %v5044, %v5242
        %v5255 = vadd.f32 %v5045, %v5245
        %v5256 = vpack.c.bf16 %v5249, %v5248
        %v5257 = vpack.c.bf16 %v5251, %v5250
        %v5258 = vpack.c.bf16 %v5253, %v5252
        %v5259 = vpack.c.bf16 %v5255, %v5254
        %v5264 = vunpack.c.l.b16 %v5256
        %v5265 = vunpack.c.h.b16 %v5256
        %v5266 = vunpack.c.l.b16 %v5257
        %v5267 = vunpack.c.h.b16 %v5257
        %v5268 = vunpack.c.l.b16 %v5258
        %v5269 = vunpack.c.h.b16 %v5258
        %v5270 = vunpack.c.l.b16 %v5259
        %v5271 = vunpack.c.h.b16 %v5259
        %v5272 = vpack.c.b16 %v5264, %v5264
        %v5273 = vpack.c.b16 %v5265, %v5265
        %v5274 = vpack.c.b16 %v5266, %v5266
        %v5275 = vpack.c.b16 %v5267, %v5267
        %v5276 = vpack.c.b16 %v5268, %v5268
        %v5277 = vpack.c.b16 %v5269, %v5269
        %v5278 = vpack.c.b16 %v5270, %v5270
        %v5279 = vpack.c.b16 %v5271, %v5271
        %s5288 = scalar_lea.vmem %s248, 96 [#allocation9]
        %5289 = vst [vmem:[%s5288] sm:$0xf] %v5272
        %5290 = vst [vmem:[%s5288 + $0x4] sm:$0xf] %v5273
        %5291 = vst [vmem:[%s5288 + $0x8] sm:$0xf] %v5274
        %5292 = vst [vmem:[%s5288 + $0xc] sm:$0xf] %v5275
        %5293 = vst [vmem:[%s5288 + $0x10] sm:$0xf] %v5276
        %5294 = vst [vmem:[%s5288 + $0x14] sm:$0xf] %v5277
        %5295 = vst [vmem:[%s5288 + $0x18] sm:$0xf] %v5278
        %5296 = vst [vmem:[%s5288 + $0x1c] sm:$0xf] %v5279
        %v5297 = vadd.f32 %v5248, %v5249
        %v5298 = vadd.f32 %v5297, %v5250
        %v5299 = vadd.f32 %v5298, %v5251
        %v5300 = vadd.f32 %v5299, %v5252
        %v5301 = vadd.f32 %v5300, %v5253
        %v5302 = vadd.f32 %v5301, %v5254
        %v5303 = vadd.f32 %v5302, %v5255
        %v5304 = vrot.slane %v5303, 4
        %v5305 = vadd.f32 %v5303, %v5304
        %v5306 = vrot.slane %v5305, 2
        %v5307 = vadd.f32 %v5305, %v5306
        %v5308 = vrot.slane %v5307, 1
        %v5309 = vadd.f32 %v5307, %v5308
        %v5310 = vadd.f32 %v4265, %v5309
        %v5311 = vmul.f32 %v5248, %v5248
        %v5312 = vmul.f32 %v5249, %v5249
        %v5313 = vmul.f32 %v5250, %v5250
        %v5314 = vmul.f32 %v5251, %v5251
        %v5315 = vmul.f32 %v5252, %v5252
        %v5316 = vmul.f32 %v5253, %v5253
        %v5317 = vmul.f32 %v5254, %v5254
        %v5318 = vmul.f32 %v5255, %v5255
        %v5319 = vadd.f32 %v5311, %v5312
        %v5320 = vadd.f32 %v5319, %v5313
        %v5321 = vadd.f32 %v5320, %v5314
        %v5322 = vadd.f32 %v5321, %v5315
        %v5323 = vadd.f32 %v5322, %v5316
        %v5324 = vadd.f32 %v5323, %v5317
        %v5325 = vadd.f32 %v5324, %v5318
        %v5326 = vrot.slane %v5325, 4
        %v5327 = vadd.f32 %v5325, %v5326
        %v5328 = vrot.slane %v5327, 2
        %v5329 = vadd.f32 %v5327, %v5328
        %v5330 = vrot.slane %v5329, 1
        %v5331 = vadd.f32 %v5329, %v5330
        %v5332 = vadd.f32 %v4287, %v5331
        %5333 = vst [vmem:[%s255] sm:$0x1] %v5310
        %5334 = vst [vmem:[%s255 + $0x1] sm:$0x1] %v5332
        %s5335 = sand.u32 %s102, 1
        %s5336 = scalar_lea.sflag [#allocation5], %s5335
        %s5337 = sand.u32 %s102, 1
        %s5338 = smul.addr %s5337, 128
        %s5339 = scalar_lea.vmem [#allocation9], %s5338
        %s5340 = sand.u32 %s128, 1
        %s5341 = scalar_lea.sflag [#allocation11], %s5340
        %s5342 = sand.u32 %s128, 1
        %s5343 = smul.addr %s5342, 2
        %s5344 = scalar_lea.vmem [#allocation10], %s5343
        // Predicated region
        $region45: #{unet_innermost_block.1} parent=31 // pred_check
          %p5345 = pneg %p112
        $region46: #{unet_innermost_block.1} parent=31 // pred_check_branch
          %5347 = sbr.rel (%p5345) target = $region48
        $region47: #{unet_innermost_block.1} parent=31 // pred_region
          %s5349 = ssub.s32 2048, 2048
          %5350 = vsyncadd %s5336, %s5349
          %s5351 = smul.addr %s26, 32
          %s5352 = smul.addr %s5351, 64
          %s5353 = scalar_lea.hbm %s3, %s5352
          %s5354 = sshll.u32 %s5339, 4
          %s5355 = int_to_ptr.vmem [resolvable:$true] %s5354
          %5360 = dma.vmem_to_hbm [thread:$0]  %s5355, 2048, %s5353, %s5336, 64, 64, 4
        $region48: #{unet_innermost_block.1} parent=31 // pred_fallthru
          _
        // Predicated region
        $region49: #{unet_innermost_block.1} parent=31 // pred_check
          %p5361 = pneg %p138
        $region50: #{unet_innermost_block.1} parent=31 // pred_check_branch
          %5363 = sbr.rel (%p5361) target = $region52
        $region51: #{unet_innermost_block.1} parent=31 // pred_region
          %s5365 = ssub.s32 32, 32
          %5366 = vsyncadd %s5341, %s5365
          %s5367 = smul.addr %s26, 32
          %s5368 = scalar_lea.hbm %s4, %s5367
          %s5370 = sshll.u32 %s5344, 4
          %s5371 = int_to_ptr.vmem [resolvable:$true] %s5370
          %5373 = dma.vmem_to_hbm [thread:$0]  %s5371, 32, %s5368, %s5341
        $region52: #{unet_innermost_block.1} parent=31 // pred_fallthru
          _
      $region32: #{unet_innermost_block.1} parent=5 // pred_fallthru
        _
      %p5374 = scmp.le.s32.totalorder 2, %s21
      // Predicated region
      $region53: #{unet_innermost_block.1} parent=5 // pred_check
        %p5375 = pneg %p5374
      $region54: #{unet_innermost_block.1} parent=5 // pred_check_branch
        %5377 = sbr.rel (%p5375) target = $region56
      $region55: #{unet_innermost_block.1} parent=5 // pred_region
        %s5378 = ssub.s32 %s21, 2
        // Predicated region
        $region57: #{unet_innermost_block.1} parent=55 // pred_check
          %p5379 = pneg %p118
        $region58: #{unet_innermost_block.1} parent=55 // pred_check_branch
          %5381 = sbr.rel (%p5379) target = $region60
        $region59: #{unet_innermost_block.1} parent=55 // pred_region
          %s5382 = sand.u32 %s103, 1
          %s5383 = scalar_lea.sflag [#allocation5], %s5382
          %s5384 = sand.u32 %s103, 1
          %s5385 = smul.addr %s5384, 128
          %s5386 = scalar_lea.vmem [#allocation9], %s5385
          %5387 = dma.done %s5383, 2048
        $region60: #{unet_innermost_block.1} parent=55 // pred_fallthru
          _
        // Predicated region
        $region61: #{unet_innermost_block.1} parent=55 // pred_check
          %p5388 = pneg %p144
        $region62: #{unet_innermost_block.1} parent=55 // pred_check_branch
          %5390 = sbr.rel (%p5388) target = $region64
        $region63: #{unet_innermost_block.1} parent=55 // pred_region
          %s5391 = sand.u32 %s129, 1
          %s5392 = scalar_lea.sflag [#allocation11], %s5391
          %s5393 = sand.u32 %s129, 1
          %s5394 = smul.addr %s5393, 2
          %s5395 = scalar_lea.vmem [#allocation10], %s5394
          %5396 = dma.done %s5392, 32
        $region64: #{unet_innermost_block.1} parent=55 // pred_fallthru
          _
      $region56: #{unet_innermost_block.1} parent=5 // pred_fallthru
        _
    $region6: #{unet_innermost_block.1} parent=1 // loop_footer
      %s25 = sadd.s32 1, %s21
    $region7: #{unet_innermost_block.1} parent=1 // loop_footer_branch
      %20 = sbr.rel target = $region3
    $region8: #{unet_innermost_block.1} parent=1 // loop_exit
      _
    %5397 = vsyncpa [#allocation4], 1
    %s5398 = scalar_lea.sflag [#allocation4], 1
    %5399 = vsyncpa %s5398, 1
    %5400 = vsyncpa [#allocation7], 1
    %5401 = vsyncpa [#allocation5], 1
    %s5402 = scalar_lea.sflag [#allocation5], 1
    %5403 = vsyncpa %s5402, 1
    %5404 = vsyncpa [#allocation11], 1
    %s5405 = scalar_lea.sflag [#allocation11], 1
    %5406 = vsyncpa %s5405, 1

</llo_original>
